<compile_context>
chip_gen: v5e
topology: v5e:2x2
jax: 0.10.0
libtpu: 0.0.40
codegen_flags: <defaults>
</compile_context>

<pallas_src>
import functools

import jax
import jax.numpy as jnp
from jax.experimental import pallas as pl
from jax.experimental.pallas import tpu as pltpu


# ---------------------------------------------------------------------------
# Fused bottleneck kernel (one image per grid step)
# ---------------------------------------------------------------------------
def _bneck_body(x_ref, w1_ref, t1_ref, w2_ref, t2_ref, w3_ref, t3_ref,
                w4_ref, t4_ref, o_ref, xp_ref, acc_ref, *, hs, ws):
    """x_ref: (hs*ws, Cin) bf16 for one image.  o_ref: (hs*ws, 4*mid) bf16.

    xp_ref : VMEM scratch (hs+2, ws+2, mid) bf16 -- zero-padded conv1 output.
    acc_ref: VMEM scratch (hs*ws, mid) f32      -- conv2 accumulator.
    """
    mid = w1_ref.shape[1]
    m = hs * ws

    # ---- conv1 (1x1) + folded BN + ReLU -> zero-padded VMEM slab ----------
    y1 = jnp.dot(x_ref[...], w1_ref[...], preferred_element_type=jnp.float32)
    y1 = jnp.maximum(y1 + t1_ref[...], 0.0).astype(jnp.bfloat16)
    xp_ref[...] = jnp.zeros(xp_ref.shape, xp_ref.dtype)
    xp_ref[1:hs + 1, 1:ws + 1, :] = y1.reshape(hs, ws, mid)

    # ---- conv2 (3x3, pad=1) + folded BN + ReLU -----------------------------
    # 9 statically unrolled tap matmuls; every window slice is in-bounds of
    # the (hs+2, ws+2, mid) padded slab; accumulation lives in VMEM (f32).
    acc_ref[...] = jnp.broadcast_to(t2_ref[...], (m, mid)).astype(jnp.float32)
    for k in range(9):
        dy, dx = divmod(k, 3)
        win = xp_ref[dy:dy + hs, dx:dx + ws, :]            # (hs, ws, mid)
        acc_ref[...] += jnp.dot(win.reshape(m, mid), w2_ref[k],
                                preferred_element_type=jnp.float32)
    y2 = jnp.maximum(acc_ref[...], 0.0).astype(jnp.bfloat16)

    # ---- conv3 (1x1) + folded BN + residual + ReLU -------------------------
    y3 = jnp.dot(y2, w3_ref[...], preferred_element_type=jnp.float32)
    y3 = y3 + t3_ref[...]
    if w4_ref is not None:
        # projection residual (downsample path), re-reads the resident x block
        res = jnp.dot(x_ref[...], w4_ref[...],
                      preferred_element_type=jnp.float32) + t4_ref[...]
    else:
        # identity residual (Cin == 4*mid)
        res = x_ref[...].astype(jnp.float32)
    o_ref[...] = jnp.maximum(y3 + res, 0.0).astype(o_ref.dtype)


def _bneck_kernel_ds(x_ref, w1_ref, t1_ref, w2_ref, t2_ref, w3_ref, t3_ref,
                     w4_ref, t4_ref, o_ref, xp_ref, acc_ref, *, hs, ws):
    _bneck_body(x_ref, w1_ref, t1_ref, w2_ref, t2_ref, w3_ref, t3_ref,
                w4_ref, t4_ref, o_ref, xp_ref, acc_ref, hs=hs, ws=ws)


def _bneck_kernel_id(x_ref, w1_ref, t1_ref, w2_ref, t2_ref, w3_ref, t3_ref,
                     o_ref, xp_ref, acc_ref, *, hs, ws):
    _bneck_body(x_ref, w1_ref, t1_ref, w2_ref, t2_ref, w3_ref, t3_ref,
                None, None, o_ref, xp_ref, acc_ref, hs=hs, ws=ws)


# ---------------------------------------------------------------------------
# pallas_call wrapper
# ---------------------------------------------------------------------------
def _vmem_limit_bytes(hs, ws, cin, mid, cout):
    """Explicit scoped-VMEM budget: double-buffered I/O blocks + resident
    (double-buffered) weights + scratch + f32 epilogue headroom."""
    m = hs * ws
    need = (2 * m * cin * 2                                  # input block (bf16)
            + 2 * m * cout * 2                               # output block (bf16)
            + (hs + 2) * (ws + 2) * mid * 2                  # padded conv2 slab
            + m * mid * 4                                    # conv2 f32 accumulator
            + 2 * (cin * mid + 9 * mid * mid
                   + mid * cout + cin * cout) * 2            # weights (bf16)
            + 2 * m * cout * 4)                              # f32 epilogue values
    return int(min(64 * 1024 * 1024, max(32 * 1024 * 1024, 2 * need)))


def bottleneck_apply(x, p, cfg):
    """x: (N, H, W, Cin) bf16 NHWC -> (N, H/s, W/s, 4*mid) bf16."""
    stride = cfg["stride"]          # static python int
    downsample = cfg["downsample"]
    mid = cfg["mid"]
    cout = 4 * mid

    if stride > 1:
        # TODO(synk): fold this subsample into the kernel's input read.
        x = x[:, ::stride, ::stride, :]
    n, hs, ws, cin = x.shape
    m = hs * ws
    x2 = x.reshape(n, m, cin)       # contiguous -> free reshape

    if not downsample:
        assert stride == 1 and cin == cout, \
            "identity residual path requires stride == 1 and Cin == 4*mid"

    kernel = (functools.partial(_bneck_kernel_ds, hs=hs, ws=ws) if downsample
              else functools.partial(_bneck_kernel_id, hs=hs, ws=ws))

    in_specs = [
        pl.BlockSpec((None, m, cin), lambda i: (i, 0, 0)),     # x  (per image)
        pl.BlockSpec((cin, mid), lambda i: (0, 0)),            # w1
        pl.BlockSpec((1, mid), lambda i: (0, 0)),              # t1
        pl.BlockSpec((9, mid, mid), lambda i: (0, 0, 0)),      # w2 (9 taps)
        pl.BlockSpec((1, mid), lambda i: (0, 0)),              # t2
        pl.BlockSpec((mid, cout), lambda i: (0, 0)),           # w3
        pl.BlockSpec((1, cout), lambda i: (0, 0)),             # t3
    ]
    operands = [x2, p["w1"], p["t1"], p["w2"], p["t2"], p["w3"], p["t3"]]
    if downsample:
        in_specs += [pl.BlockSpec((cin, cout), lambda i: (0, 0)),   # w4
                     pl.BlockSpec((1, cout), lambda i: (0, 0))]     # t4
        operands += [p["w4"], p["t4"]]

    out = pl.pallas_call(
        kernel,
        out_shape=jax.ShapeDtypeStruct((n, m, cout), jnp.bfloat16),
        grid=(n,),
        in_specs=in_specs,
        out_specs=pl.BlockSpec((None, m, cout), lambda i: (i, 0, 0)),
        scratch_shapes=[
            pltpu.VMEM((hs + 2, ws + 2, mid), jnp.bfloat16),   # padded conv1 out
            pltpu.VMEM((m, mid), jnp.float32),                 # conv2 f32 acc
        ],
        compiler_params=pltpu.CompilerParams(
            dimension_semantics=("parallel",),
            vmem_limit_bytes=_vmem_limit_bytes(hs, ws, cin, mid, cout),
        ),
    )(*operands)
    return out.reshape(n, hs, ws, cout)


# ---------------------------------------------------------------------------
# Parameter init (deterministic, synthetic) and BN folding
# ---------------------------------------------------------------------------
def _bn_fold(key, cout, bias):
    k1, k2, k3, k4 = jax.random.split(key, 4)
    gamma = 1.0 + 0.1 * jax.random.normal(k1, (cout,), jnp.float32)
    beta = 0.1 * jax.random.normal(k2, (cout,), jnp.float32)
    mean = 0.1 * jax.random.normal(k3, (cout,), jnp.float32)
    var = 1.0 + 0.1 * jnp.abs(jax.random.normal(k4, (cout,), jnp.float32))
    scale = gamma * jax.lax.rsqrt(var + 1e-5)
    shift = (bias - mean) * scale + beta
    return scale, shift


def _folded_conv1x1(kw, kb, kbn, cin, cout):
    w = 0.05 * jax.random.normal(kw, (cin, cout), jnp.float32)
    b = 0.01 * jax.random.normal(kb, (cout,), jnp.float32)
    scale, shift = _bn_fold(kbn, cout, b)
    wf = (w * scale[None, :]).astype(jnp.bfloat16)            # fold BN scale
    return wf, shift.reshape(1, cout).astype(jnp.float32)


def _folded_conv3x3(kw, kb, kbn, cin, cout):
    w = 0.05 * jax.random.normal(kw, (3, 3, cin, cout), jnp.float32)   # HWIO
    b = 0.01 * jax.random.normal(kb, (cout,), jnp.float32)
    scale, shift = _bn_fold(kbn, cout, b)
    wf = (w * scale[None, None, None, :]).reshape(9, cin, cout)
    return wf.astype(jnp.bfloat16), shift.reshape(1, cout).astype(jnp.float32)


def init_bottleneck(key, in_channels, mid_channels, stride=1, downsample=False):
    """Returns (params: dict of arrays only, cfg: static python config)."""
    cfg = {"stride": int(stride), "downsample": bool(downsample),
           "mid": int(mid_channels)}
    ks = jax.random.split(key, 12)
    p = {}
    p["w1"], p["t1"] = _folded_conv1x1(ks[0], ks[1], ks[2],
                                       in_channels, mid_channels)
    p["w2"], p["t2"] = _folded_conv3x3(ks[3], ks[4], ks[5],
                                       mid_channels, mid_channels)
    p["w3"], p["t3"] = _folded_conv1x1(ks[6], ks[7], ks[8],
                                       mid_channels, 4 * mid_channels)
    if downsample:
        p["w4"], p["t4"] = _folded_conv1x1(ks[9], ks[10], ks[11],
                                           in_channels, 4 * mid_channels)
    return p, cfg


# ---------------------------------------------------------------------------
# Forward pass (Pallas)
# ---------------------------------------------------------------------------
def make_forward(cfgs):
    """cfgs is captured statically (python ints/bools) - not traced by jit."""
    @jax.jit
    def forward(x_nchw, params):
        x = jnp.transpose(x_nchw, (0, 2, 3, 1)).astype(jnp.bfloat16)
        for p, cfg in zip(params, cfgs):
            x = bottleneck_apply(x, p, cfg)
        return jnp.transpose(x.astype(jnp.float32), (0, 3, 1, 2))
    return forward


# ---------------------------------------------------------------------------
# Pure-JAX reference (same bf16 cast points -> tight tolerance)
# ---------------------------------------------------------------------------
def _ref_bottleneck(x, p, cfg):
    stride = cfg["stride"]
    mid = cfg["mid"]
    xs = x[:, ::stride, ::stride, :] if stride > 1 else x
    n, hs, ws, cin = xs.shape
    xs2 = xs.reshape(-1, cin)

    y = jnp.dot(xs2, p["w1"], preferred_element_type=jnp.float32) + p["t1"]
    y = jnp.maximum(y, 0.0).astype(jnp.bfloat16).reshape(n, hs, ws, mid)

    w2 = p["w2"].reshape(3, 3, mid, mid)
    y = jax.lax.conv_general_dilated(
        y, w2, (1, 1), "SAME",
        dimension_numbers=("NHWC", "HWIO", "NHWC"),
        preferred_element_type=jnp.float32)
    y = jnp.maximum(y + p["t2"][0], 0.0).astype(jnp.bfloat16).reshape(-1, mid)

    z = jnp.dot(y, p["w3"], preferred_element_type=jnp.float32) + p["t3"]
    if cfg["downsample"]:
        r = jnp.dot(xs2, p["w4"], preferred_element_type=jnp.float32) + p["t4"]
    else:
        r = xs2.astype(jnp.float32)
    z = jnp.maximum(z + r, 0.0).astype(jnp.bfloat16)
    return z.reshape(n, hs, ws, 4 * mid)


def make_reference(cfgs):
    @jax.jit
    def ref(x_nchw, params):
        x = jnp.transpose(x_nchw, (0, 2, 3, 1)).astype(jnp.bfloat16)
        for p, cfg in zip(params, cfgs):
            x = _ref_bottleneck(x, p, cfg)
        return jnp.transpose(x.astype(jnp.float32), (0, 3, 1, 2))
    return ref


# ---------------------------------------------------------------------------
if __name__ == "__main__":
    key = jax.random.PRNGKey(0)
    kx, k1, k2 = jax.random.split(key, 3)

    # A stride-2 downsample bottleneck followed by an identity bottleneck
    # (exercises both residual paths of the PyTorch module).
    N, Cin, H, W = 2, 64, 16, 16
    mid = 32
    x = jax.random.normal(kx, (N, Cin, H, W), jnp.float32)   # NCHW, like torch

    p1, c1 = init_bottleneck(k1, Cin, mid, stride=2, downsample=True)
    p2, c2 = init_bottleneck(k2, 4 * mid, mid, stride=1, downsample=False)
    params = [p1, p2]
    cfgs = [c1, c2]

    forward = make_forward(cfgs)
    out = jax.block_until_ready(forward(x, params))
    assert out.shape == (N, 4 * mid, H // 2, W // 2), out.shape
    assert bool(jnp.all(jnp.isfinite(out)))

    ref = jax.block_until_ready(make_reference(cfgs)(x, params))
    err = float(jnp.max(jnp.abs(out - ref)) / (jnp.max(jnp.abs(ref)) + 1e-6))
    assert err < 1e-2, f"mismatch vs reference: rel-err {err}"

    print("KERNEL_OK")
</pallas_src>

<mosaic_0001>
module attributes {stable_mosaic.version = 11 : i64} {
  func.func @_bneck_kernel_ds(%arg0: i32, %arg1: memref<1x64x64xbf16, #tpu.memory_space<vmem>>, %arg2: memref<64x32xbf16, #tpu.memory_space<vmem>>, %arg3: memref<1x32xf32, #tpu.memory_space<vmem>>, %arg4: memref<9x32x32xbf16, #tpu.memory_space<vmem>>, %arg5: memref<1x32xf32, #tpu.memory_space<vmem>>, %arg6: memref<32x128xbf16, #tpu.memory_space<vmem>>, %arg7: memref<1x128xf32, #tpu.memory_space<vmem>>, %arg8: memref<64x128xbf16, #tpu.memory_space<vmem>>, %arg9: memref<1x128xf32, #tpu.memory_space<vmem>>, %arg10: memref<1x64x128xbf16, #tpu.memory_space<vmem>>, %arg11: memref<10x10x32xbf16, #tpu.memory_space<vmem>>, %arg12: memref<64x32xf32, #tpu.memory_space<vmem>>) attributes {dimension_semantics = [#tpu.dimension_semantics<parallel>], iteration_bounds = array<i64: 2>, scalar_prefetch = 0 : i64, scratch_operands = 2 : i64, tpu.core_type = #tpu.core_type<tc>, window_params = [{transform_indices = @transform_0, window_bounds = array<i64: 1, 64, 64>}, {pipeline_mode = #tpu.pipeline_mode<synchronous>, transform_indices = @transform_1, window_bounds = array<i64: 64, 32>}, {pipeline_mode = #tpu.pipeline_mode<synchronous>, transform_indices = @transform_2, window_bounds = array<i64: 1, 32>}, {pipeline_mode = #tpu.pipeline_mode<synchronous>, transform_indices = @transform_3, window_bounds = array<i64: 9, 32, 32>}, {pipeline_mode = #tpu.pipeline_mode<synchronous>, transform_indices = @transform_4, window_bounds = array<i64: 1, 32>}, {pipeline_mode = #tpu.pipeline_mode<synchronous>, transform_indices = @transform_5, window_bounds = array<i64: 32, 128>}, {pipeline_mode = #tpu.pipeline_mode<synchronous>, transform_indices = @transform_6, window_bounds = array<i64: 1, 128>}, {pipeline_mode = #tpu.pipeline_mode<synchronous>, transform_indices = @transform_7, window_bounds = array<i64: 64, 128>}, {pipeline_mode = #tpu.pipeline_mode<synchronous>, transform_indices = @transform_8, window_bounds = array<i64: 1, 128>}, {transform_indices = @transform_9, window_bounds = array<i64: 1, 64, 128>}]} {
    %c0 = arith.constant 0 : index
    %c0_0 = arith.constant 0 : index
    %c0_1 = arith.constant 0 : index
    %0 = vector.load %arg1[%c0, %c0_0, %c0_1] : memref<1x64x64xbf16, #tpu.memory_space<vmem>>, vector<1x64x64xbf16>
    %1 = vector.shape_cast %0 : vector<1x64x64xbf16> to vector<64x64xbf16>
    %c0_2 = arith.constant 0 : index
    %c0_3 = arith.constant 0 : index
    %2 = vector.load %arg2[%c0_2, %c0_3] : memref<64x32xbf16, #tpu.memory_space<vmem>>, vector<64x32xbf16>
    %cst = arith.constant dense<0.000000e+00> : vector<64x32xf32>
    %3 = tpu.matmul %1, %2, %cst {dimension_numbers = #tpu.dot_dimension_numbers<[1], [0], [0], [1], [0, 0, 1, 1], [], []>} : vector<64x64xbf16>, vector<64x32xbf16>, vector<64x32xf32> -> vector<64x32xf32>
    %c0_4 = arith.constant 0 : index
    %c0_5 = arith.constant 0 : index
    %4 = vector.load %arg3[%c0_4, %c0_5] : memref<1x32xf32, #tpu.memory_space<vmem>>, vector<1x32xf32>
    %5 = vector.broadcast %4 : vector<1x32xf32> to vector<64x32xf32>
    %6 = arith.addf %3, %5 : vector<64x32xf32>
    %cst_6 = arith.constant 0.000000e+00 : f32
    %7 = vector.broadcast %cst_6 : f32 to vector<64x32xf32>
    %8 = arith.maximumf %6, %7 : vector<64x32xf32>
    %9 = arith.truncf %8 : vector<64x32xf32> to vector<64x32xbf16>
    %cst_7 = arith.constant 0.000000e+00 : bf16
    %10 = vector.broadcast %cst_7 : bf16 to vector<10x10x32xbf16>
    %c0_8 = arith.constant 0 : index
    %c0_9 = arith.constant 0 : index
    %c0_10 = arith.constant 0 : index
    %11 = vector.load %arg11[%c0_8, %c0_9, %c0_10] : memref<10x10x32xbf16, #tpu.memory_space<vmem>>, vector<10x10x32xbf16>
    tpu.vector_store %arg11[%c0_8, %c0_9, %c0_10], %10 {strides = array<i32>} : memref<10x10x32xbf16, #tpu.memory_space<vmem>>, vector<10x10x32xbf16>,
    %12 = vector.shape_cast %9 : vector<64x32xbf16> to vector<8x8x32xbf16>
    %c1 = arith.constant 1 : index
    %c1_11 = arith.constant 1 : index
    %c0_12 = arith.constant 0 : index
    %13 = vector.load %arg11[%c1, %c1_11, %c0_12] : memref<10x10x32xbf16, #tpu.memory_space<vmem>>, vector<8x8x32xbf16>
    tpu.vector_store %arg11[%c1, %c1_11, %c0_12], %12 {strides = array<i32>} : memref<10x10x32xbf16, #tpu.memory_space<vmem>>, vector<8x8x32xbf16>,
    %c0_13 = arith.constant 0 : index
    %c0_14 = arith.constant 0 : index
    %14 = vector.load %arg5[%c0_13, %c0_14] : memref<1x32xf32, #tpu.memory_space<vmem>>, vector<1x32xf32>
    %15 = vector.shape_cast %14 : vector<1x32xf32> to vector<1x32xf32>
    %16 = vector.broadcast %15 : vector<1x32xf32> to vector<64x32xf32>
    %c0_15 = arith.constant 0 : index
    %c0_16 = arith.constant 0 : index
    %17 = vector.load %arg12[%c0_15, %c0_16] : memref<64x32xf32, #tpu.memory_space<vmem>>, vector<64x32xf32>
    tpu.vector_store %arg12[%c0_15, %c0_16], %16 {strides = array<i32>} : memref<64x32xf32, #tpu.memory_space<vmem>>, vector<64x32xf32>,
    %c0_17 = arith.constant 0 : index
    %c0_18 = arith.constant 0 : index
    %c0_19 = arith.constant 0 : index
    %18 = vector.load %arg11[%c0_17, %c0_18, %c0_19] : memref<10x10x32xbf16, #tpu.memory_space<vmem>>, vector<8x8x32xbf16>
    %c0_20 = arith.constant 0 : index
    %c0_21 = arith.constant 0 : index
    %19 = vector.load %arg12[%c0_20, %c0_21] : memref<64x32xf32, #tpu.memory_space<vmem>>, vector<64x32xf32>
    %20 = vector.shape_cast %18 : vector<8x8x32xbf16> to vector<64x32xbf16>
    %c0_22 = arith.constant 0 : index
    %c0_23 = arith.constant 0 : index
    %c0_24 = arith.constant 0 : index
    %21 = vector.load %arg4[%c0_22, %c0_23, %c0_24] : memref<9x32x32xbf16, #tpu.memory_space<vmem>>, vector<1x32x32xbf16>
    %22 = vector.shape_cast %21 : vector<1x32x32xbf16> to vector<32x32xbf16>
    %cst_25 = arith.constant dense<0.000000e+00> : vector<64x32xf32>
    %23 = tpu.matmul %20, %22, %cst_25 {dimension_numbers = #tpu.dot_dimension_numbers<[1], [0], [0], [1], [0, 0, 1, 1], [], []>} : vector<64x32xbf16>, vector<32x32xbf16>, vector<64x32xf32> -> vector<64x32xf32>
    %24 = arith.addf %19, %23 : vector<64x32xf32>
    %c0_26 = arith.constant 0 : index
    %c0_27 = arith.constant 0 : index
    %25 = vector.load %arg12[%c0_26, %c0_27] : memref<64x32xf32, #tpu.memory_space<vmem>>, vector<64x32xf32>
    tpu.vector_store %arg12[%c0_26, %c0_27], %24 {strides = array<i32>} : memref<64x32xf32, #tpu.memory_space<vmem>>, vector<64x32xf32>,
    %c0_28 = arith.constant 0 : index
    %c1_29 = arith.constant 1 : index
    %c0_30 = arith.constant 0 : index
    %26 = vector.load %arg11[%c0_28, %c1_29, %c0_30] : memref<10x10x32xbf16, #tpu.memory_space<vmem>>, vector<8x8x32xbf16>
    %c0_31 = arith.constant 0 : index
    %c0_32 = arith.constant 0 : index
    %27 = vector.load %arg12[%c0_31, %c0_32] : memref<64x32xf32, #tpu.memory_space<vmem>>, vector<64x32xf32>
    %28 = vector.shape_cast %26 : vector<8x8x32xbf16> to vector<64x32xbf16>
    %c1_33 = arith.constant 1 : index
    %c0_34 = arith.constant 0 : index
    %c0_35 = arith.constant 0 : index
    %29 = vector.load %arg4[%c1_33, %c0_34, %c0_35] : memref<9x32x32xbf16, #tpu.memory_space<vmem>>, vector<1x32x32xbf16>
    %30 = vector.shape_cast %29 : vector<1x32x32xbf16> to vector<32x32xbf16>
    %cst_36 = arith.constant dense<0.000000e+00> : vector<64x32xf32>
    %31 = tpu.matmul %28, %30, %cst_36 {dimension_numbers = #tpu.dot_dimension_numbers<[1], [0], [0], [1], [0, 0, 1, 1], [], []>} : vector<64x32xbf16>, vector<32x32xbf16>, vector<64x32xf32> -> vector<64x32xf32>
    %32 = arith.addf %27, %31 : vector<64x32xf32>
    %c0_37 = arith.constant 0 : index
    %c0_38 = arith.constant 0 : index
    %33 = vector.load %arg12[%c0_37, %c0_38] : memref<64x32xf32, #tpu.memory_space<vmem>>, vector<64x32xf32>
    tpu.vector_store %arg12[%c0_37, %c0_38], %32 {strides = array<i32>} : memref<64x32xf32, #tpu.memory_space<vmem>>, vector<64x32xf32>,
    %c0_39 = arith.constant 0 : index
    %c2 = arith.constant 2 : index
    %c0_40 = arith.constant 0 : index
    %34 = vector.load %arg11[%c0_39, %c2, %c0_40] : memref<10x10x32xbf16, #tpu.memory_space<vmem>>, vector<8x8x32xbf16>
    %c0_41 = arith.constant 0 : index
    %c0_42 = arith.constant 0 : index
    %35 = vector.load %arg12[%c0_41, %c0_42] : memref<64x32xf32, #tpu.memory_space<vmem>>, vector<64x32xf32>
    %36 = vector.shape_cast %34 : vector<8x8x32xbf16> to vector<64x32xbf16>
    %c2_43 = arith.constant 2 : index
    %c0_44 = arith.constant 0 : index
    %c0_45 = arith.constant 0 : index
    %37 = vector.load %arg4[%c2_43, %c0_44, %c0_45] : memref<9x32x32xbf16, #tpu.memory_space<vmem>>, vector<1x32x32xbf16>
    %38 = vector.shape_cast %37 : vector<1x32x32xbf16> to vector<32x32xbf16>
    %cst_46 = arith.constant dense<0.000000e+00> : vector<64x32xf32>
    %39 = tpu.matmul %36, %38, %cst_46 {dimension_numbers = #tpu.dot_dimension_numbers<[1], [0], [0], [1], [0, 0, 1, 1], [], []>} : vector<64x32xbf16>, vector<32x32xbf16>, vector<64x32xf32> -> vector<64x32xf32>
    %40 = arith.addf %35, %39 : vector<64x32xf32>
    %c0_47 = arith.constant 0 : index
    %c0_48 = arith.constant 0 : index
    %41 = vector.load %arg12[%c0_47, %c0_48] : memref<64x32xf32, #tpu.memory_space<vmem>>, vector<64x32xf32>
    tpu.vector_store %arg12[%c0_47, %c0_48], %40 {strides = array<i32>} : memref<64x32xf32, #tpu.memory_space<vmem>>, vector<64x32xf32>,
    %c1_49 = arith.constant 1 : index
    %c0_50 = arith.constant 0 : index
    %c0_51 = arith.constant 0 : index
    %42 = vector.load %arg11[%c1_49, %c0_50, %c0_51] : memref<10x10x32xbf16, #tpu.memory_space<vmem>>, vector<8x8x32xbf16>
    %c0_52 = arith.constant 0 : index
    %c0_53 = arith.constant 0 : index
    %43 = vector.load %arg12[%c0_52, %c0_53] : memref<64x32xf32, #tpu.memory_space<vmem>>, vector<64x32xf32>
    %44 = vector.shape_cast %42 : vector<8x8x32xbf16> to vector<64x32xbf16>
    %c3 = arith.constant 3 : index
    %c0_54 = arith.constant 0 : index
    %c0_55 = arith.constant 0 : index
    %45 = vector.load %arg4[%c3, %c0_54, %c0_55] : memref<9x32x32xbf16, #tpu.memory_space<vmem>>, vector<1x32x32xbf16>
    %46 = vector.shape_cast %45 : vector<1x32x32xbf16> to vector<32x32xbf16>
    %cst_56 = arith.constant dense<0.000000e+00> : vector<64x32xf32>
    %47 = tpu.matmul %44, %46, %cst_56 {dimension_numbers = #tpu.dot_dimension_numbers<[1], [0], [0], [1], [0, 0, 1, 1], [], []>} : vector<64x32xbf16>, vector<32x32xbf16>, vector<64x32xf32> -> vector<64x32xf32>
    %48 = arith.addf %43, %47 : vector<64x32xf32>
    %c0_57 = arith.constant 0 : index
    %c0_58 = arith.constant 0 : index
    %49 = vector.load %arg12[%c0_57, %c0_58] : memref<64x32xf32, #tpu.memory_space<vmem>>, vector<64x32xf32>
    tpu.vector_store %arg12[%c0_57, %c0_58], %48 {strides = array<i32>} : memref<64x32xf32, #tpu.memory_space<vmem>>, vector<64x32xf32>,
    %c1_59 = arith.constant 1 : index
    %c1_60 = arith.constant 1 : index
    %c0_61 = arith.constant 0 : index
    %50 = vector.load %arg11[%c1_59, %c1_60, %c0_61] : memref<10x10x32xbf16, #tpu.memory_space<vmem>>, vector<8x8x32xbf16>
    %c0_62 = arith.constant 0 : index
    %c0_63 = arith.constant 0 : index
    %51 = vector.load %arg12[%c0_62, %c0_63] : memref<64x32xf32, #tpu.memory_space<vmem>>, vector<64x32xf32>
    %52 = vector.shape_cast %50 : vector<8x8x32xbf16> to vector<64x32xbf16>
    %c4 = arith.constant 4 : index
    %c0_64 = arith.constant 0 : index
    %c0_65 = arith.constant 0 : index
    %53 = vector.load %arg4[%c4, %c0_64, %c0_65] : memref<9x32x32xbf16, #tpu.memory_space<vmem>>, vector<1x32x32xbf16>
    %54 = vector.shape_cast %53 : vector<1x32x32xbf16> to vector<32x32xbf16>
    %cst_66 = arith.constant dense<0.000000e+00> : vector<64x32xf32>
    %55 = tpu.matmul %52, %54, %cst_66 {dimension_numbers = #tpu.dot_dimension_numbers<[1], [0], [0], [1], [0, 0, 1, 1], [], []>} : vector<64x32xbf16>, vector<32x32xbf16>, vector<64x32xf32> -> vector<64x32xf32>
    %56 = arith.addf %51, %55 : vector<64x32xf32>
    %c0_67 = arith.constant 0 : index
    %c0_68 = arith.constant 0 : index
    %57 = vector.load %arg12[%c0_67, %c0_68] : memref<64x32xf32, #tpu.memory_space<vmem>>, vector<64x32xf32>
    tpu.vector_store %arg12[%c0_67, %c0_68], %56 {strides = array<i32>} : memref<64x32xf32, #tpu.memory_space<vmem>>, vector<64x32xf32>,
    %c1_69 = arith.constant 1 : index
    %c2_70 = arith.constant 2 : index
    %c0_71 = arith.constant 0 : index
    %58 = vector.load %arg11[%c1_69, %c2_70, %c0_71] : memref<10x10x32xbf16, #tpu.memory_space<vmem>>, vector<8x8x32xbf16>
    %c0_72 = arith.constant 0 : index
    %c0_73 = arith.constant 0 : index
    %59 = vector.load %arg12[%c0_72, %c0_73] : memref<64x32xf32, #tpu.memory_space<vmem>>, vector<64x32xf32>
    %60 = vector.shape_cast %58 : vector<8x8x32xbf16> to vector<64x32xbf16>
    %c5 = arith.constant 5 : index
    %c0_74 = arith.constant 0 : index
    %c0_75 = arith.constant 0 : index
    %61 = vector.load %arg4[%c5, %c0_74, %c0_75] : memref<9x32x32xbf16, #tpu.memory_space<vmem>>, vector<1x32x32xbf16>
    %62 = vector.shape_cast %61 : vector<1x32x32xbf16> to vector<32x32xbf16>
    %cst_76 = arith.constant dense<0.000000e+00> : vector<64x32xf32>
    %63 = tpu.matmul %60, %62, %cst_76 {dimension_numbers = #tpu.dot_dimension_numbers<[1], [0], [0], [1], [0, 0, 1, 1], [], []>} : vector<64x32xbf16>, vector<32x32xbf16>, vector<64x32xf32> -> vector<64x32xf32>
    %64 = arith.addf %59, %63 : vector<64x32xf32>
    %c0_77 = arith.constant 0 : index
    %c0_78 = arith.constant 0 : index
    %65 = vector.load %arg12[%c0_77, %c0_78] : memref<64x32xf32, #tpu.memory_space<vmem>>, vector<64x32xf32>
    tpu.vector_store %arg12[%c0_77, %c0_78], %64 {strides = array<i32>} : memref<64x32xf32, #tpu.memory_space<vmem>>, vector<64x32xf32>,
    %c2_79 = arith.constant 2 : index
    %c0_80 = arith.constant 0 : index
    %c0_81 = arith.constant 0 : index
    %66 = vector.load %arg11[%c2_79, %c0_80, %c0_81] : memref<10x10x32xbf16, #tpu.memory_space<vmem>>, vector<8x8x32xbf16>
    %c0_82 = arith.constant 0 : index
    %c0_83 = arith.constant 0 : index
    %67 = vector.load %arg12[%c0_82, %c0_83] : memref<64x32xf32, #tpu.memory_space<vmem>>, vector<64x32xf32>
    %68 = vector.shape_cast %66 : vector<8x8x32xbf16> to vector<64x32xbf16>
    %c6 = arith.constant 6 : index
    %c0_84 = arith.constant 0 : index
    %c0_85 = arith.constant 0 : index
    %69 = vector.load %arg4[%c6, %c0_84, %c0_85] : memref<9x32x32xbf16, #tpu.memory_space<vmem>>, vector<1x32x32xbf16>
    %70 = vector.shape_cast %69 : vector<1x32x32xbf16> to vector<32x32xbf16>
    %cst_86 = arith.constant dense<0.000000e+00> : vector<64x32xf32>
    %71 = tpu.matmul %68, %70, %cst_86 {dimension_numbers = #tpu.dot_dimension_numbers<[1], [0], [0], [1], [0, 0, 1, 1], [], []>} : vector<64x32xbf16>, vector<32x32xbf16>, vector<64x32xf32> -> vector<64x32xf32>
    %72 = arith.addf %67, %71 : vector<64x32xf32>
    %c0_87 = arith.constant 0 : index
    %c0_88 = arith.constant 0 : index
    %73 = vector.load %arg12[%c0_87, %c0_88] : memref<64x32xf32, #tpu.memory_space<vmem>>, vector<64x32xf32>
    tpu.vector_store %arg12[%c0_87, %c0_88], %72 {strides = array<i32>} : memref<64x32xf32, #tpu.memory_space<vmem>>, vector<64x32xf32>,
    %c2_89 = arith.constant 2 : index
    %c1_90 = arith.constant 1 : index
    %c0_91 = arith.constant 0 : index
    %74 = vector.load %arg11[%c2_89, %c1_90, %c0_91] : memref<10x10x32xbf16, #tpu.memory_space<vmem>>, vector<8x8x32xbf16>
    %c0_92 = arith.constant 0 : index
    %c0_93 = arith.constant 0 : index
    %75 = vector.load %arg12[%c0_92, %c0_93] : memref<64x32xf32, #tpu.memory_space<vmem>>, vector<64x32xf32>
    %76 = vector.shape_cast %74 : vector<8x8x32xbf16> to vector<64x32xbf16>
    %c7 = arith.constant 7 : index
    %c0_94 = arith.constant 0 : index
    %c0_95 = arith.constant 0 : index
    %77 = vector.load %arg4[%c7, %c0_94, %c0_95] : memref<9x32x32xbf16, #tpu.memory_space<vmem>>, vector<1x32x32xbf16>
    %78 = vector.shape_cast %77 : vector<1x32x32xbf16> to vector<32x32xbf16>
    %cst_96 = arith.constant dense<0.000000e+00> : vector<64x32xf32>
    %79 = tpu.matmul %76, %78, %cst_96 {dimension_numbers = #tpu.dot_dimension_numbers<[1], [0], [0], [1], [0, 0, 1, 1], [], []>} : vector<64x32xbf16>, vector<32x32xbf16>, vector<64x32xf32> -> vector<64x32xf32>
    %80 = arith.addf %75, %79 : vector<64x32xf32>
    %c0_97 = arith.constant 0 : index
    %c0_98 = arith.constant 0 : index
    %81 = vector.load %arg12[%c0_97, %c0_98] : memref<64x32xf32, #tpu.memory_space<vmem>>, vector<64x32xf32>
    tpu.vector_store %arg12[%c0_97, %c0_98], %80 {strides = array<i32>} : memref<64x32xf32, #tpu.memory_space<vmem>>, vector<64x32xf32>,
    %c2_99 = arith.constant 2 : index
    %c2_100 = arith.constant 2 : index
    %c0_101 = arith.constant 0 : index
    %82 = vector.load %arg11[%c2_99, %c2_100, %c0_101] : memref<10x10x32xbf16, #tpu.memory_space<vmem>>, vector<8x8x32xbf16>
    %c0_102 = arith.constant 0 : index
    %c0_103 = arith.constant 0 : index
    %83 = vector.load %arg12[%c0_102, %c0_103] : memref<64x32xf32, #tpu.memory_space<vmem>>, vector<64x32xf32>
    %84 = vector.shape_cast %82 : vector<8x8x32xbf16> to vector<64x32xbf16>
    %c8 = arith.constant 8 : index
    %c0_104 = arith.constant 0 : index
    %c0_105 = arith.constant 0 : index
    %85 = vector.load %arg4[%c8, %c0_104, %c0_105] : memref<9x32x32xbf16, #tpu.memory_space<vmem>>, vector<1x32x32xbf16>
    %86 = vector.shape_cast %85 : vector<1x32x32xbf16> to vector<32x32xbf16>
    %cst_106 = arith.constant dense<0.000000e+00> : vector<64x32xf32>
    %87 = tpu.matmul %84, %86, %cst_106 {dimension_numbers = #tpu.dot_dimension_numbers<[1], [0], [0], [1], [0, 0, 1, 1], [], []>} : vector<64x32xbf16>, vector<32x32xbf16>, vector<64x32xf32> -> vector<64x32xf32>
    %88 = arith.addf %83, %87 : vector<64x32xf32>
    %c0_107 = arith.constant 0 : index
    %c0_108 = arith.constant 0 : index
    %89 = vector.load %arg12[%c0_107, %c0_108] : memref<64x32xf32, #tpu.memory_space<vmem>>, vector<64x32xf32>
    tpu.vector_store %arg12[%c0_107, %c0_108], %88 {strides = array<i32>} : memref<64x32xf32, #tpu.memory_space<vmem>>, vector<64x32xf32>,
    %c0_109 = arith.constant 0 : index
    %c0_110 = arith.constant 0 : index
    %90 = vector.load %arg12[%c0_109, %c0_110] : memref<64x32xf32, #tpu.memory_space<vmem>>, vector<64x32xf32>
    %cst_111 = arith.constant 0.000000e+00 : f32
    %91 = vector.broadcast %cst_111 : f32 to vector<64x32xf32>
    %92 = arith.maximumf %90, %91 : vector<64x32xf32>
    %93 = arith.truncf %92 : vector<64x32xf32> to vector<64x32xbf16>
    %c0_112 = arith.constant 0 : index
    %c0_113 = arith.constant 0 : index
    %94 = vector.load %arg6[%c0_112, %c0_113] : memref<32x128xbf16, #tpu.memory_space<vmem>>, vector<32x128xbf16>
    %cst_114 = arith.constant dense<0.000000e+00> : vector<64x128xf32>
    %95 = tpu.matmul %93, %94, %cst_114 {dimension_numbers = #tpu.dot_dimension_numbers<[1], [0], [0], [1], [0, 0, 1, 1], [], []>} : vector<64x32xbf16>, vector<32x128xbf16>, vector<64x128xf32> -> vector<64x128xf32>
    %c0_115 = arith.constant 0 : index
    %c0_116 = arith.constant 0 : index
    %96 = vector.load %arg7[%c0_115, %c0_116] : memref<1x128xf32, #tpu.memory_space<vmem>>, vector<1x128xf32>
    %97 = vector.broadcast %96 : vector<1x128xf32> to vector<64x128xf32>
    %98 = arith.addf %95, %97 : vector<64x128xf32>
    %c0_117 = arith.constant 0 : index
    %c0_118 = arith.constant 0 : index
    %c0_119 = arith.constant 0 : index
    %99 = vector.load %arg1[%c0_117, %c0_118, %c0_119] : memref<1x64x64xbf16, #tpu.memory_space<vmem>>, vector<1x64x64xbf16>
    %100 = vector.shape_cast %99 : vector<1x64x64xbf16> to vector<64x64xbf16>
    %c0_120 = arith.constant 0 : index
    %c0_121 = arith.constant 0 : index
    %101 = vector.load %arg8[%c0_120, %c0_121] : memref<64x128xbf16, #tpu.memory_space<vmem>>, vector<64x128xbf16>
    %cst_122 = arith.constant dense<0.000000e+00> : vector<64x128xf32>
    %102 = tpu.matmul %100, %101, %cst_122 {dimension_numbers = #tpu.dot_dimension_numbers<[1], [0], [0], [1], [0, 0, 1, 1], [], []>} : vector<64x64xbf16>, vector<64x128xbf16>, vector<64x128xf32> -> vector<64x128xf32>
    %c0_123 = arith.constant 0 : index
    %c0_124 = arith.constant 0 : index
    %103 = vector.load %arg9[%c0_123, %c0_124] : memref<1x128xf32, #tpu.memory_space<vmem>>, vector<1x128xf32>
    %104 = vector.broadcast %103 : vector<1x128xf32> to vector<64x128xf32>
    %105 = arith.addf %102, %104 : vector<64x128xf32>
    %106 = arith.addf %98, %105 : vector<64x128xf32>
    %cst_125 = arith.constant 0.000000e+00 : f32
    %107 = vector.broadcast %cst_125 : f32 to vector<64x128xf32>
    %108 = arith.maximumf %106, %107 : vector<64x128xf32>
    %109 = arith.truncf %108 : vector<64x128xf32> to vector<64x128xbf16>
    %c0_126 = arith.constant 0 : index
    %c0_127 = arith.constant 0 : index
    %c0_128 = arith.constant 0 : index
    %110 = vector.load %arg10[%c0_126, %c0_127, %c0_128] : memref<1x64x128xbf16, #tpu.memory_space<vmem>>, vector<1x64x128xbf16>
    %111 = vector.shape_cast %110 : vector<1x64x128xbf16> to vector<64x128xbf16>
    %112 = vector.shape_cast %109 : vector<64x128xbf16> to vector<1x64x128xbf16>
    tpu.vector_store %arg10[%c0_126, %c0_127, %c0_128], %112 {strides = array<i32>} : memref<1x64x128xbf16, #tpu.memory_space<vmem>>, vector<1x64x128xbf16>,
    return
  }
  func.func @transform_0(%arg0: i32) -> (i32, i32, i32) {
    %c0_i32 = arith.constant 0 : i32
    %c0_i32_0 = arith.constant 0 : i32
    %c0_i32_1 = arith.constant 0 : i32
    return %arg0, %c0_i32, %c0_i32_0 : i32, i32, i32
  }
  func.func @transform_1(%arg0: i32) -> (i32, i32) {
    %c0_i32 = arith.constant 0 : i32
    %c0_i32_0 = arith.constant 0 : i32
    %c0_i32_1 = arith.constant 0 : i32
    return %c0_i32, %c0_i32_0 : i32, i32
  }
  func.func @transform_2(%arg0: i32) -> (i32, i32) {
    %c0_i32 = arith.constant 0 : i32
    %c0_i32_0 = arith.constant 0 : i32
    %c0_i32_1 = arith.constant 0 : i32
    return %c0_i32, %c0_i32_0 : i32, i32
  }
  func.func @transform_3(%arg0: i32) -> (i32, i32, i32) {
    %c0_i32 = arith.constant 0 : i32
    %c0_i32_0 = arith.constant 0 : i32
    %c0_i32_1 = arith.constant 0 : i32
    %c0_i32_2 = arith.constant 0 : i32
    return %c0_i32, %c0_i32_0, %c0_i32_1 : i32, i32, i32
  }
  func.func @transform_4(%arg0: i32) -> (i32, i32) {
    %c0_i32 = arith.constant 0 : i32
    %c0_i32_0 = arith.constant 0 : i32
    %c0_i32_1 = arith.constant 0 : i32
    return %c0_i32, %c0_i32_0 : i32, i32
  }
  func.func @transform_5(%arg0: i32) -> (i32, i32) {
    %c0_i32 = arith.constant 0 : i32
    %c0_i32_0 = arith.constant 0 : i32
    %c0_i32_1 = arith.constant 0 : i32
    return %c0_i32, %c0_i32_0 : i32, i32
  }
  func.func @transform_6(%arg0: i32) -> (i32, i32) {
    %c0_i32 = arith.constant 0 : i32
    %c0_i32_0 = arith.constant 0 : i32
    %c0_i32_1 = arith.constant 0 : i32
    return %c0_i32, %c0_i32_0 : i32, i32
  }
  func.func @transform_7(%arg0: i32) -> (i32, i32) {
    %c0_i32 = arith.constant 0 : i32
    %c0_i32_0 = arith.constant 0 : i32
    %c0_i32_1 = arith.constant 0 : i32
    return %c0_i32, %c0_i32_0 : i32, i32
  }
  func.func @transform_8(%arg0: i32) -> (i32, i32) {
    %c0_i32 = arith.constant 0 : i32
    %c0_i32_0 = arith.constant 0 : i32
    %c0_i32_1 = arith.constant 0 : i32
    return %c0_i32, %c0_i32_0 : i32, i32
  }
  func.func @transform_9(%arg0: i32) -> (i32, i32, i32) {
    %c0_i32 = arith.constant 0 : i32
    %c0_i32_0 = arith.constant 0 : i32
    %c0_i32_1 = arith.constant 0 : i32
    return %arg0, %c0_i32, %c0_i32_0 : i32, i32, i32
  }
}

module attributes {stable_mosaic.version = 11 : i64} {
  func.func @_bneck_kernel_id(%arg0: i32, %arg1: memref<1x64x128xbf16, #tpu.memory_space<vmem>>, %arg2: memref<128x32xbf16, #tpu.memory_space<vmem>>, %arg3: memref<1x32xf32, #tpu.memory_space<vmem>>, %arg4: memref<9x32x32xbf16, #tpu.memory_space<vmem>>, %arg5: memref<1x32xf32, #tpu.memory_space<vmem>>, %arg6: memref<32x128xbf16, #tpu.memory_space<vmem>>, %arg7: memref<1x128xf32, #tpu.memory_space<vmem>>, %arg8: memref<1x64x128xbf16, #tpu.memory_space<vmem>>, %arg9: memref<10x10x32xbf16, #tpu.memory_space<vmem>>, %arg10: memref<64x32xf32, #tpu.memory_space<vmem>>) attributes {dimension_semantics = [#tpu.dimension_semantics<parallel>], iteration_bounds = array<i64: 2>, scalar_prefetch = 0 : i64, scratch_operands = 2 : i64, tpu.core_type = #tpu.core_type<tc>, window_params = [{transform_indices = @transform_0, window_bounds = array<i64: 1, 64, 128>}, {pipeline_mode = #tpu.pipeline_mode<synchronous>, transform_indices = @transform_1, window_bounds = array<i64: 128, 32>}, {pipeline_mode = #tpu.pipeline_mode<synchronous>, transform_indices = @transform_2, window_bounds = array<i64: 1, 32>}, {pipeline_mode = #tpu.pipeline_mode<synchronous>, transform_indices = @transform_3, window_bounds = array<i64: 9, 32, 32>}, {pipeline_mode = #tpu.pipeline_mode<synchronous>, transform_indices = @transform_4, window_bounds = array<i64: 1, 32>}, {pipeline_mode = #tpu.pipeline_mode<synchronous>, transform_indices = @transform_5, window_bounds = array<i64: 32, 128>}, {pipeline_mode = #tpu.pipeline_mode<synchronous>, transform_indices = @transform_6, window_bounds = array<i64: 1, 128>}, {transform_indices = @transform_7, window_bounds = array<i64: 1, 64, 128>}]} {
    %c0 = arith.constant 0 : index
    %c0_0 = arith.constant 0 : index
    %c0_1 = arith.constant 0 : index
    %0 = vector.load %arg1[%c0, %c0_0, %c0_1] : memref<1x64x128xbf16, #tpu.memory_space<vmem>>, vector<1x64x128xbf16>
    %1 = vector.shape_cast %0 : vector<1x64x128xbf16> to vector<64x128xbf16>
    %c0_2 = arith.constant 0 : index
    %c0_3 = arith.constant 0 : index
    %2 = vector.load %arg2[%c0_2, %c0_3] : memref<128x32xbf16, #tpu.memory_space<vmem>>, vector<128x32xbf16>
    %cst = arith.constant dense<0.000000e+00> : vector<64x32xf32>
    %3 = tpu.matmul %1, %2, %cst {dimension_numbers = #tpu.dot_dimension_numbers<[1], [0], [0], [1], [0, 0, 1, 1], [], []>} : vector<64x128xbf16>, vector<128x32xbf16>, vector<64x32xf32> -> vector<64x32xf32>
    %c0_4 = arith.constant 0 : index
    %c0_5 = arith.constant 0 : index
    %4 = vector.load %arg3[%c0_4, %c0_5] : memref<1x32xf32, #tpu.memory_space<vmem>>, vector<1x32xf32>
    %5 = vector.broadcast %4 : vector<1x32xf32> to vector<64x32xf32>
    %6 = arith.addf %3, %5 : vector<64x32xf32>
    %cst_6 = arith.constant 0.000000e+00 : f32
    %7 = vector.broadcast %cst_6 : f32 to vector<64x32xf32>
    %8 = arith.maximumf %6, %7 : vector<64x32xf32>
    %9 = arith.truncf %8 : vector<64x32xf32> to vector<64x32xbf16>
    %cst_7 = arith.constant 0.000000e+00 : bf16
    %10 = vector.broadcast %cst_7 : bf16 to vector<10x10x32xbf16>
    %c0_8 = arith.constant 0 : index
    %c0_9 = arith.constant 0 : index
    %c0_10 = arith.constant 0 : index
    %11 = vector.load %arg9[%c0_8, %c0_9, %c0_10] : memref<10x10x32xbf16, #tpu.memory_space<vmem>>, vector<10x10x32xbf16>
    tpu.vector_store %arg9[%c0_8, %c0_9, %c0_10], %10 {strides = array<i32>} : memref<10x10x32xbf16, #tpu.memory_space<vmem>>, vector<10x10x32xbf16>,
    %12 = vector.shape_cast %9 : vector<64x32xbf16> to vector<8x8x32xbf16>
    %c1 = arith.constant 1 : index
    %c1_11 = arith.constant 1 : index
    %c0_12 = arith.constant 0 : index
    %13 = vector.load %arg9[%c1, %c1_11, %c0_12] : memref<10x10x32xbf16, #tpu.memory_space<vmem>>, vector<8x8x32xbf16>
    tpu.vector_store %arg9[%c1, %c1_11, %c0_12], %12 {strides = array<i32>} : memref<10x10x32xbf16, #tpu.memory_space<vmem>>, vector<8x8x32xbf16>,
    %c0_13 = arith.constant 0 : index
    %c0_14 = arith.constant 0 : index
    %14 = vector.load %arg5[%c0_13, %c0_14] : memref<1x32xf32, #tpu.memory_space<vmem>>, vector<1x32xf32>
    %15 = vector.shape_cast %14 : vector<1x32xf32> to vector<1x32xf32>
    %16 = vector.broadcast %15 : vector<1x32xf32> to vector<64x32xf32>
    %c0_15 = arith.constant 0 : index
    %c0_16 = arith.constant 0 : index
    %17 = vector.load %arg10[%c0_15, %c0_16] : memref<64x32xf32, #tpu.memory_space<vmem>>, vector<64x32xf32>
    tpu.vector_store %arg10[%c0_15, %c0_16], %16 {strides = array<i32>} : memref<64x32xf32, #tpu.memory_space<vmem>>, vector<64x32xf32>,
    %c0_17 = arith.constant 0 : index
    %c0_18 = arith.constant 0 : index
    %c0_19 = arith.constant 0 : index
    %18 = vector.load %arg9[%c0_17, %c0_18, %c0_19] : memref<10x10x32xbf16, #tpu.memory_space<vmem>>, vector<8x8x32xbf16>
    %c0_20 = arith.constant 0 : index
    %c0_21 = arith.constant 0 : index
    %19 = vector.load %arg10[%c0_20, %c0_21] : memref<64x32xf32, #tpu.memory_space<vmem>>, vector<64x32xf32>
    %20 = vector.shape_cast %18 : vector<8x8x32xbf16> to vector<64x32xbf16>
    %c0_22 = arith.constant 0 : index
    %c0_23 = arith.constant 0 : index
    %c0_24 = arith.constant 0 : index
    %21 = vector.load %arg4[%c0_22, %c0_23, %c0_24] : memref<9x32x32xbf16, #tpu.memory_space<vmem>>, vector<1x32x32xbf16>
    %22 = vector.shape_cast %21 : vector<1x32x32xbf16> to vector<32x32xbf16>
    %cst_25 = arith.constant dense<0.000000e+00> : vector<64x32xf32>
    %23 = tpu.matmul %20, %22, %cst_25 {dimension_numbers = #tpu.dot_dimension_numbers<[1], [0], [0], [1], [0, 0, 1, 1], [], []>} : vector<64x32xbf16>, vector<32x32xbf16>, vector<64x32xf32> -> vector<64x32xf32>
    %24 = arith.addf %19, %23 : vector<64x32xf32>
    %c0_26 = arith.constant 0 : index
    %c0_27 = arith.constant 0 : index
    %25 = vector.load %arg10[%c0_26, %c0_27] : memref<64x32xf32, #tpu.memory_space<vmem>>, vector<64x32xf32>
    tpu.vector_store %arg10[%c0_26, %c0_27], %24 {strides = array<i32>} : memref<64x32xf32, #tpu.memory_space<vmem>>, vector<64x32xf32>,
    %c0_28 = arith.constant 0 : index
    %c1_29 = arith.constant 1 : index
    %c0_30 = arith.constant 0 : index
    %26 = vector.load %arg9[%c0_28, %c1_29, %c0_30] : memref<10x10x32xbf16, #tpu.memory_space<vmem>>, vector<8x8x32xbf16>
    %c0_31 = arith.constant 0 : index
    %c0_32 = arith.constant 0 : index
    %27 = vector.load %arg10[%c0_31, %c0_32] : memref<64x32xf32, #tpu.memory_space<vmem>>, vector<64x32xf32>
    %28 = vector.shape_cast %26 : vector<8x8x32xbf16> to vector<64x32xbf16>
    %c1_33 = arith.constant 1 : index
    %c0_34 = arith.constant 0 : index
    %c0_35 = arith.constant 0 : index
    %29 = vector.load %arg4[%c1_33, %c0_34, %c0_35] : memref<9x32x32xbf16, #tpu.memory_space<vmem>>, vector<1x32x32xbf16>
    %30 = vector.shape_cast %29 : vector<1x32x32xbf16> to vector<32x32xbf16>
    %cst_36 = arith.constant dense<0.000000e+00> : vector<64x32xf32>
    %31 = tpu.matmul %28, %30, %cst_36 {dimension_numbers = #tpu.dot_dimension_numbers<[1], [0], [0], [1], [0, 0, 1, 1], [], []>} : vector<64x32xbf16>, vector<32x32xbf16>, vector<64x32xf32> -> vector<64x32xf32>
    %32 = arith.addf %27, %31 : vector<64x32xf32>
    %c0_37 = arith.constant 0 : index
    %c0_38 = arith.constant 0 : index
    %33 = vector.load %arg10[%c0_37, %c0_38] : memref<64x32xf32, #tpu.memory_space<vmem>>, vector<64x32xf32>
    tpu.vector_store %arg10[%c0_37, %c0_38], %32 {strides = array<i32>} : memref<64x32xf32, #tpu.memory_space<vmem>>, vector<64x32xf32>,
    %c0_39 = arith.constant 0 : index
    %c2 = arith.constant 2 : index
    %c0_40 = arith.constant 0 : index
    %34 = vector.load %arg9[%c0_39, %c2, %c0_40] : memref<10x10x32xbf16, #tpu.memory_space<vmem>>, vector<8x8x32xbf16>
    %c0_41 = arith.constant 0 : index
    %c0_42 = arith.constant 0 : index
    %35 = vector.load %arg10[%c0_41, %c0_42] : memref<64x32xf32, #tpu.memory_space<vmem>>, vector<64x32xf32>
    %36 = vector.shape_cast %34 : vector<8x8x32xbf16> to vector<64x32xbf16>
    %c2_43 = arith.constant 2 : index
    %c0_44 = arith.constant 0 : index
    %c0_45 = arith.constant 0 : index
    %37 = vector.load %arg4[%c2_43, %c0_44, %c0_45] : memref<9x32x32xbf16, #tpu.memory_space<vmem>>, vector<1x32x32xbf16>
    %38 = vector.shape_cast %37 : vector<1x32x32xbf16> to vector<32x32xbf16>
    %cst_46 = arith.constant dense<0.000000e+00> : vector<64x32xf32>
    %39 = tpu.matmul %36, %38, %cst_46 {dimension_numbers = #tpu.dot_dimension_numbers<[1], [0], [0], [1], [0, 0, 1, 1], [], []>} : vector<64x32xbf16>, vector<32x32xbf16>, vector<64x32xf32> -> vector<64x32xf32>
    %40 = arith.addf %35, %39 : vector<64x32xf32>
    %c0_47 = arith.constant 0 : index
    %c0_48 = arith.constant 0 : index
    %41 = vector.load %arg10[%c0_47, %c0_48] : memref<64x32xf32, #tpu.memory_space<vmem>>, vector<64x32xf32>
    tpu.vector_store %arg10[%c0_47, %c0_48], %40 {strides = array<i32>} : memref<64x32xf32, #tpu.memory_space<vmem>>, vector<64x32xf32>,
    %c1_49 = arith.constant 1 : index
    %c0_50 = arith.constant 0 : index
    %c0_51 = arith.constant 0 : index
    %42 = vector.load %arg9[%c1_49, %c0_50, %c0_51] : memref<10x10x32xbf16, #tpu.memory_space<vmem>>, vector<8x8x32xbf16>
    %c0_52 = arith.constant 0 : index
    %c0_53 = arith.constant 0 : index
    %43 = vector.load %arg10[%c0_52, %c0_53] : memref<64x32xf32, #tpu.memory_space<vmem>>, vector<64x32xf32>
    %44 = vector.shape_cast %42 : vector<8x8x32xbf16> to vector<64x32xbf16>
    %c3 = arith.constant 3 : index
    %c0_54 = arith.constant 0 : index
    %c0_55 = arith.constant 0 : index
    %45 = vector.load %arg4[%c3, %c0_54, %c0_55] : memref<9x32x32xbf16, #tpu.memory_space<vmem>>, vector<1x32x32xbf16>
    %46 = vector.shape_cast %45 : vector<1x32x32xbf16> to vector<32x32xbf16>
    %cst_56 = arith.constant dense<0.000000e+00> : vector<64x32xf32>
    %47 = tpu.matmul %44, %46, %cst_56 {dimension_numbers = #tpu.dot_dimension_numbers<[1], [0], [0], [1], [0, 0, 1, 1], [], []>} : vector<64x32xbf16>, vector<32x32xbf16>, vector<64x32xf32> -> vector<64x32xf32>
    %48 = arith.addf %43, %47 : vector<64x32xf32>
    %c0_57 = arith.constant 0 : index
    %c0_58 = arith.constant 0 : index
    %49 = vector.load %arg10[%c0_57, %c0_58] : memref<64x32xf32, #tpu.memory_space<vmem>>, vector<64x32xf32>
    tpu.vector_store %arg10[%c0_57, %c0_58], %48 {strides = array<i32>} : memref<64x32xf32, #tpu.memory_space<vmem>>, vector<64x32xf32>,
    %c1_59 = arith.constant 1 : index
    %c1_60 = arith.constant 1 : index
    %c0_61 = arith.constant 0 : index
    %50 = vector.load %arg9[%c1_59, %c1_60, %c0_61] : memref<10x10x32xbf16, #tpu.memory_space<vmem>>, vector<8x8x32xbf16>
    %c0_62 = arith.constant 0 : index
    %c0_63 = arith.constant 0 : index
    %51 = vector.load %arg10[%c0_62, %c0_63] : memref<64x32xf32, #tpu.memory_space<vmem>>, vector<64x32xf32>
    %52 = vector.shape_cast %50 : vector<8x8x32xbf16> to vector<64x32xbf16>
    %c4 = arith.constant 4 : index
    %c0_64 = arith.constant 0 : index
    %c0_65 = arith.constant 0 : index
    %53 = vector.load %arg4[%c4, %c0_64, %c0_65] : memref<9x32x32xbf16, #tpu.memory_space<vmem>>, vector<1x32x32xbf16>
    %54 = vector.shape_cast %53 : vector<1x32x32xbf16> to vector<32x32xbf16>
    %cst_66 = arith.constant dense<0.000000e+00> : vector<64x32xf32>
    %55 = tpu.matmul %52, %54, %cst_66 {dimension_numbers = #tpu.dot_dimension_numbers<[1], [0], [0], [1], [0, 0, 1, 1], [], []>} : vector<64x32xbf16>, vector<32x32xbf16>, vector<64x32xf32> -> vector<64x32xf32>
    %56 = arith.addf %51, %55 : vector<64x32xf32>
    %c0_67 = arith.constant 0 : index
    %c0_68 = arith.constant 0 : index
    %57 = vector.load %arg10[%c0_67, %c0_68] : memref<64x32xf32, #tpu.memory_space<vmem>>, vector<64x32xf32>
    tpu.vector_store %arg10[%c0_67, %c0_68], %56 {strides = array<i32>} : memref<64x32xf32, #tpu.memory_space<vmem>>, vector<64x32xf32>,
    %c1_69 = arith.constant 1 : index
    %c2_70 = arith.constant 2 : index
    %c0_71 = arith.constant 0 : index
    %58 = vector.load %arg9[%c1_69, %c2_70, %c0_71] : memref<10x10x32xbf16, #tpu.memory_space<vmem>>, vector<8x8x32xbf16>
    %c0_72 = arith.constant 0 : index
    %c0_73 = arith.constant 0 : index
    %59 = vector.load %arg10[%c0_72, %c0_73] : memref<64x32xf32, #tpu.memory_space<vmem>>, vector<64x32xf32>
    %60 = vector.shape_cast %58 : vector<8x8x32xbf16> to vector<64x32xbf16>
    %c5 = arith.constant 5 : index
    %c0_74 = arith.constant 0 : index
    %c0_75 = arith.constant 0 : index
    %61 = vector.load %arg4[%c5, %c0_74, %c0_75] : memref<9x32x32xbf16, #tpu.memory_space<vmem>>, vector<1x32x32xbf16>
    %62 = vector.shape_cast %61 : vector<1x32x32xbf16> to vector<32x32xbf16>
    %cst_76 = arith.constant dense<0.000000e+00> : vector<64x32xf32>
    %63 = tpu.matmul %60, %62, %cst_76 {dimension_numbers = #tpu.dot_dimension_numbers<[1], [0], [0], [1], [0, 0, 1, 1], [], []>} : vector<64x32xbf16>, vector<32x32xbf16>, vector<64x32xf32> -> vector<64x32xf32>
    %64 = arith.addf %59, %63 : vector<64x32xf32>
    %c0_77 = arith.constant 0 : index
    %c0_78 = arith.constant 0 : index
    %65 = vector.load %arg10[%c0_77, %c0_78] : memref<64x32xf32, #tpu.memory_space<vmem>>, vector<64x32xf32>
    tpu.vector_store %arg10[%c0_77, %c0_78], %64 {strides = array<i32>} : memref<64x32xf32, #tpu.memory_space<vmem>>, vector<64x32xf32>,
    %c2_79 = arith.constant 2 : index
    %c0_80 = arith.constant 0 : index
    %c0_81 = arith.constant 0 : index
    %66 = vector.load %arg9[%c2_79, %c0_80, %c0_81] : memref<10x10x32xbf16, #tpu.memory_space<vmem>>, vector<8x8x32xbf16>
    %c0_82 = arith.constant 0 : index
    %c0_83 = arith.constant 0 : index
    %67 = vector.load %arg10[%c0_82, %c0_83] : memref<64x32xf32, #tpu.memory_space<vmem>>, vector<64x32xf32>
    %68 = vector.shape_cast %66 : vector<8x8x32xbf16> to vector<64x32xbf16>
    %c6 = arith.constant 6 : index
    %c0_84 = arith.constant 0 : index
    %c0_85 = arith.constant 0 : index
    %69 = vector.load %arg4[%c6, %c0_84, %c0_85] : memref<9x32x32xbf16, #tpu.memory_space<vmem>>, vector<1x32x32xbf16>
    %70 = vector.shape_cast %69 : vector<1x32x32xbf16> to vector<32x32xbf16>
    %cst_86 = arith.constant dense<0.000000e+00> : vector<64x32xf32>
    %71 = tpu.matmul %68, %70, %cst_86 {dimension_numbers = #tpu.dot_dimension_numbers<[1], [0], [0], [1], [0, 0, 1, 1], [], []>} : vector<64x32xbf16>, vector<32x32xbf16>, vector<64x32xf32> -> vector<64x32xf32>
    %72 = arith.addf %67, %71 : vector<64x32xf32>
    %c0_87 = arith.constant 0 : index
    %c0_88 = arith.constant 0 : index
    %73 = vector.load %arg10[%c0_87, %c0_88] : memref<64x32xf32, #tpu.memory_space<vmem>>, vector<64x32xf32>
    tpu.vector_store %arg10[%c0_87, %c0_88], %72 {strides = array<i32>} : memref<64x32xf32, #tpu.memory_space<vmem>>, vector<64x32xf32>,
    %c2_89 = arith.constant 2 : index
    %c1_90 = arith.constant 1 : index
    %c0_91 = arith.constant 0 : index
    %74 = vector.load %arg9[%c2_89, %c1_90, %c0_91] : memref<10x10x32xbf16, #tpu.memory_space<vmem>>, vector<8x8x32xbf16>
    %c0_92 = arith.constant 0 : index
    %c0_93 = arith.constant 0 : index
    %75 = vector.load %arg10[%c0_92, %c0_93] : memref<64x32xf32, #tpu.memory_space<vmem>>, vector<64x32xf32>
    %76 = vector.shape_cast %74 : vector<8x8x32xbf16> to vector<64x32xbf16>
    %c7 = arith.constant 7 : index
    %c0_94 = arith.constant 0 : index
    %c0_95 = arith.constant 0 : index
    %77 = vector.load %arg4[%c7, %c0_94, %c0_95] : memref<9x32x32xbf16, #tpu.memory_space<vmem>>, vector<1x32x32xbf16>
    %78 = vector.shape_cast %77 : vector<1x32x32xbf16> to vector<32x32xbf16>
    %cst_96 = arith.constant dense<0.000000e+00> : vector<64x32xf32>
    %79 = tpu.matmul %76, %78, %cst_96 {dimension_numbers = #tpu.dot_dimension_numbers<[1], [0], [0], [1], [0, 0, 1, 1], [], []>} : vector<64x32xbf16>, vector<32x32xbf16>, vector<64x32xf32> -> vector<64x32xf32>
    %80 = arith.addf %75, %79 : vector<64x32xf32>
    %c0_97 = arith.constant 0 : index
    %c0_98 = arith.constant 0 : index
    %81 = vector.load %arg10[%c0_97, %c0_98] : memref<64x32xf32, #tpu.memory_space<vmem>>, vector<64x32xf32>
    tpu.vector_store %arg10[%c0_97, %c0_98], %80 {strides = array<i32>} : memref<64x32xf32, #tpu.memory_space<vmem>>, vector<64x32xf32>,
    %c2_99 = arith.constant 2 : index
    %c2_100 = arith.constant 2 : index
    %c0_101 = arith.constant 0 : index
    %82 = vector.load %arg9[%c2_99, %c2_100, %c0_101] : memref<10x10x32xbf16, #tpu.memory_space<vmem>>, vector<8x8x32xbf16>
    %c0_102 = arith.constant 0 : index
    %c0_103 = arith.constant 0 : index
    %83 = vector.load %arg10[%c0_102, %c0_103] : memref<64x32xf32, #tpu.memory_space<vmem>>, vector<64x32xf32>
    %84 = vector.shape_cast %82 : vector<8x8x32xbf16> to vector<64x32xbf16>
    %c8 = arith.constant 8 : index
    %c0_104 = arith.constant 0 : index
    %c0_105 = arith.constant 0 : index
    %85 = vector.load %arg4[%c8, %c0_104, %c0_105] : memref<9x32x32xbf16, #tpu.memory_space<vmem>>, vector<1x32x32xbf16>
    %86 = vector.shape_cast %85 : vector<1x32x32xbf16> to vector<32x32xbf16>
    %cst_106 = arith.constant dense<0.000000e+00> : vector<64x32xf32>
    %87 = tpu.matmul %84, %86, %cst_106 {dimension_numbers = #tpu.dot_dimension_numbers<[1], [0], [0], [1], [0, 0, 1, 1], [], []>} : vector<64x32xbf16>, vector<32x32xbf16>, vector<64x32xf32> -> vector<64x32xf32>
    %88 = arith.addf %83, %87 : vector<64x32xf32>
    %c0_107 = arith.constant 0 : index
    %c0_108 = arith.constant 0 : index
    %89 = vector.load %arg10[%c0_107, %c0_108] : memref<64x32xf32, #tpu.memory_space<vmem>>, vector<64x32xf32>
    tpu.vector_store %arg10[%c0_107, %c0_108], %88 {strides = array<i32>} : memref<64x32xf32, #tpu.memory_space<vmem>>, vector<64x32xf32>,
    %c0_109 = arith.constant 0 : index
    %c0_110 = arith.constant 0 : index
    %90 = vector.load %arg10[%c0_109, %c0_110] : memref<64x32xf32, #tpu.memory_space<vmem>>, vector<64x32xf32>
    %cst_111 = arith.constant 0.000000e+00 : f32
    %91 = vector.broadcast %cst_111 : f32 to vector<64x32xf32>
    %92 = arith.maximumf %90, %91 : vector<64x32xf32>
    %93 = arith.truncf %92 : vector<64x32xf32> to vector<64x32xbf16>
    %c0_112 = arith.constant 0 : index
    %c0_113 = arith.constant 0 : index
    %94 = vector.load %arg6[%c0_112, %c0_113] : memref<32x128xbf16, #tpu.memory_space<vmem>>, vector<32x128xbf16>
    %cst_114 = arith.constant dense<0.000000e+00> : vector<64x128xf32>
    %95 = tpu.matmul %93, %94, %cst_114 {dimension_numbers = #tpu.dot_dimension_numbers<[1], [0], [0], [1], [0, 0, 1, 1], [], []>} : vector<64x32xbf16>, vector<32x128xbf16>, vector<64x128xf32> -> vector<64x128xf32>
    %c0_115 = arith.constant 0 : index
    %c0_116 = arith.constant 0 : index
    %96 = vector.load %arg7[%c0_115, %c0_116] : memref<1x128xf32, #tpu.memory_space<vmem>>, vector<1x128xf32>
    %97 = vector.broadcast %96 : vector<1x128xf32> to vector<64x128xf32>
    %98 = arith.addf %95, %97 : vector<64x128xf32>
    %c0_117 = arith.constant 0 : index
    %c0_118 = arith.constant 0 : index
    %c0_119 = arith.constant 0 : index
    %99 = vector.load %arg1[%c0_117, %c0_118, %c0_119] : memref<1x64x128xbf16, #tpu.memory_space<vmem>>, vector<1x64x128xbf16>
    %100 = vector.shape_cast %99 : vector<1x64x128xbf16> to vector<64x128xbf16>
    %101 = arith.extf %100 : vector<64x128xbf16> to vector<64x128xf32>
    %102 = arith.addf %98, %101 : vector<64x128xf32>
    %cst_120 = arith.constant 0.000000e+00 : f32
    %103 = vector.broadcast %cst_120 : f32 to vector<64x128xf32>
    %104 = arith.maximumf %102, %103 : vector<64x128xf32>
    %105 = arith.truncf %104 : vector<64x128xf32> to vector<64x128xbf16>
    %c0_121 = arith.constant 0 : index
    %c0_122 = arith.constant 0 : index
    %c0_123 = arith.constant 0 : index
    %106 = vector.load %arg8[%c0_121, %c0_122, %c0_123] : memref<1x64x128xbf16, #tpu.memory_space<vmem>>, vector<1x64x128xbf16>
    %107 = vector.shape_cast %106 : vector<1x64x128xbf16> to vector<64x128xbf16>
    %108 = vector.shape_cast %105 : vector<64x128xbf16> to vector<1x64x128xbf16>
    tpu.vector_store %arg8[%c0_121, %c0_122, %c0_123], %108 {strides = array<i32>} : memref<1x64x128xbf16, #tpu.memory_space<vmem>>, vector<1x64x128xbf16>,
    return
  }
  func.func @transform_0(%arg0: i32) -> (i32, i32, i32) {
    %c0_i32 = arith.constant 0 : i32
    %c0_i32_0 = arith.constant 0 : i32
    %c0_i32_1 = arith.constant 0 : i32
    return %arg0, %c0_i32, %c0_i32_0 : i32, i32, i32
  }
  func.func @transform_1(%arg0: i32) -> (i32, i32) {
    %c0_i32 = arith.constant 0 : i32
    %c0_i32_0 = arith.constant 0 : i32
    %c0_i32_1 = arith.constant 0 : i32
    return %c0_i32, %c0_i32_0 : i32, i32
  }
  func.func @transform_2(%arg0: i32) -> (i32, i32) {
    %c0_i32 = arith.constant 0 : i32
    %c0_i32_0 = arith.constant 0 : i32
    %c0_i32_1 = arith.constant 0 : i32
    return %c0_i32, %c0_i32_0 : i32, i32
  }
  func.func @transform_3(%arg0: i32) -> (i32, i32, i32) {
    %c0_i32 = arith.constant 0 : i32
    %c0_i32_0 = arith.constant 0 : i32
    %c0_i32_1 = arith.constant 0 : i32
    %c0_i32_2 = arith.constant 0 : i32
    return %c0_i32, %c0_i32_0, %c0_i32_1 : i32, i32, i32
  }
  func.func @transform_4(%arg0: i32) -> (i32, i32) {
    %c0_i32 = arith.constant 0 : i32
    %c0_i32_0 = arith.constant 0 : i32
    %c0_i32_1 = arith.constant 0 : i32
    return %c0_i32, %c0_i32_0 : i32, i32
  }
  func.func @transform_5(%arg0: i32) -> (i32, i32) {
    %c0_i32 = arith.constant 0 : i32
    %c0_i32_0 = arith.constant 0 : i32
    %c0_i32_1 = arith.constant 0 : i32
    return %c0_i32, %c0_i32_0 : i32, i32
  }
  func.func @transform_6(%arg0: i32) -> (i32, i32) {
    %c0_i32 = arith.constant 0 : i32
    %c0_i32_0 = arith.constant 0 : i32
    %c0_i32_1 = arith.constant 0 : i32
    return %c0_i32, %c0_i32_0 : i32, i32
  }
  func.func @transform_7(%arg0: i32) -> (i32, i32, i32) {
    %c0_i32 = arith.constant 0 : i32
    %c0_i32_0 = arith.constant 0 : i32
    %c0_i32_1 = arith.constant 0 : i32
    return %arg0, %c0_i32, %c0_i32_0 : i32, i32, i32
  }
}

</mosaic_0001>

<llo_original>
// kernel: forward.3
$region0: #{forward.3}
  #allocation0 [shape = 'u32[]', space=smem, size = 0x4, offset = 0x4, fixed_abs, tag = 'smem constant byte address 0x4 - core index']
  #allocation1 [shape = 'u32[72,128]{1,0:T(1,128)}', space=vmem, size = 0x9000, scoped, tag = 'internal scratch']
  #allocation2 [shape = 'bf16[10,10,32]{2,1,0:T(8,128)(2,1)}', space=vmem, size = 0xa000, scoped, tag = 'scratch operand']
  #allocation3 [shape = 'f32[64,32]{1,0:T(8,128)}', space=vmem, size = 0x8000, scoped, tag = 'scratch operand']
  %s0 = inlined_call_operand.vmem [shape: bf16[2,64,128], index: 0, kind: input, shape index: {}]
  %s1 = inlined_call_operand.vmem [shape: bf16[128,32], index: 1, kind: input, shape index: {}]
  %s2 = inlined_call_operand.vmem [shape: f32[1,32], index: 2, kind: input, shape index: {}]
  %s3 = inlined_call_operand.vmem [shape: bf16[9,32,32], index: 3, kind: input, shape index: {}]
  %s4 = inlined_call_operand.vmem [shape: f32[1,32], index: 4, kind: input, shape index: {}]
  %s5 = inlined_call_operand.vmem [shape: bf16[32,128], index: 5, kind: input, shape index: {}]
  %s6 = inlined_call_operand.vmem [shape: f32[1,128], index: 6, kind: input, shape index: {}]
  %s7 = inlined_call_operand.vmem [shape: bf16[2,64,128], index: 7, kind: output, shape index: {}]
  %s8 = sld [smem:[#allocation0]]
  $region61: #{forward.3} parent=0
    _
  %s10 = ssub.s32 1, %s8
  %s11 = scalar_select 0, %s10, %s8
  loop: start=0, step=1, limit=4
  $region2: #{forward.3} parent=0 // loop_pre_header
    _
  $region3: #{forward.3} parent=0 // loop_header
    %s13 = sphi 0, %s17
    %p14 = scmp.ge.s32.totalorder %s13, 4
    %s23 = sphi 0, %s25
    %s26 = sphi 0, %s23
    %s27 = sphi 0, %s26
    %s43 = sphi 0, %s27
    %s47 = sphi 0, %s47
    %s49 = sphi 0, %s47
    %s50 = sphi 0, %s49
    %s64 = sphi 0, %s50
    %s68 = sphi 0, %s68
    %s70 = sphi 0, %s68
    %s71 = sphi 0, %s70
    %s85 = sphi 0, %s71
    %s89 = sphi 0, %s89
    %s91 = sphi 0, %s89
    %s92 = sphi 0, %s91
    %s106 = sphi 0, %s92
    %s110 = sphi 0, %s110
    %s112 = sphi 0, %s110
    %s113 = sphi 0, %s112
    %s127 = sphi 0, %s113
    %s131 = sphi 0, %s131
    %s133 = sphi 0, %s131
    %s134 = sphi 0, %s133
    %s148 = sphi 0, %s134
    %s152 = sphi 0, %s152
    %s154 = sphi 0, %s152
    %s155 = sphi 0, %s154
    %s169 = sphi 0, %s155
    %s175 = sphi 0, %s177
    %s178 = sphi 0, %s175
    %s179 = sphi 0, %s178
    %s195 = sphi 0, %s179
  $region4: #{forward.3} parent=0 // loop_header_branch
    %16 = sbr.rel (%p14) target = $region8
  $region5: #{forward.3} parent=0 // loop_body
    %s18 = ssub.s32 %s13, 1
    %s19 = ssub.s32 %s13, 2
    %s20 = sadd.s32 %s13, 1
    %s21 = ssub.s32 %s13, %s20
    %p22 = scmp.eq.s32.totalorder %s21, 0
    %s24 = sadd.s32 %s23, 1
    %s25 = scalar_select %p22, %s23, %s24
    %p28 = pneg %p22
    %p29 = scmp.eq.s32.totalorder %s13, 1
    %p30 = por %p28, %p29
    %p31 = scmp.ne.s32.totalorder %s23, %s26
    %p32 = scmp.eq.s32.totalorder %s13, 0
    %p33 = por %p31, %p32
    %p34 = scmp.ne.s32.totalorder %s23, %s26
    %p35 = scmp.eq.s32.totalorder %s18, 1
    %p36 = por %p34, %p35
    %p37 = scmp.ne.s32.totalorder %s26, %s27
    %p38 = scmp.eq.s32.totalorder %s18, 0
    %p39 = por %p37, %p38
    %p40 = scmp.ne.s32.totalorder %s26, %s27
    %p41 = scmp.eq.s32.totalorder %s19, 1
    %p42 = por %p40, %p41
    %p44 = scmp.ne.s32.totalorder %s27, %s43
    %p45 = scmp.eq.s32.totalorder %s19, 0
    %p46 = por %p44, %p45
    %s48 = sadd.s32 %s47, 1
    %p51 = scmp.eq.s32.totalorder %s13, 1
    %p52 = scmp.ne.s32.totalorder %s47, %s49
    %p53 = scmp.eq.s32.totalorder %s13, 0
    %p54 = por %p52, %p53
    %p55 = scmp.ne.s32.totalorder %s47, %s49
    %p56 = scmp.eq.s32.totalorder %s18, 1
    %p57 = por %p55, %p56
    %p58 = scmp.ne.s32.totalorder %s49, %s50
    %p59 = scmp.eq.s32.totalorder %s18, 0
    %p60 = por %p58, %p59
    %p61 = scmp.ne.s32.totalorder %s49, %s50
    %p62 = scmp.eq.s32.totalorder %s19, 1
    %p63 = por %p61, %p62
    %p65 = scmp.ne.s32.totalorder %s50, %s64
    %p66 = scmp.eq.s32.totalorder %s19, 0
    %p67 = por %p65, %p66
    %s69 = sadd.s32 %s68, 1
    %p72 = scmp.eq.s32.totalorder %s13, 1
    %p73 = scmp.ne.s32.totalorder %s68, %s70
    %p74 = scmp.eq.s32.totalorder %s13, 0
    %p75 = por %p73, %p74
    %p76 = scmp.ne.s32.totalorder %s68, %s70
    %p77 = scmp.eq.s32.totalorder %s18, 1
    %p78 = por %p76, %p77
    %p79 = scmp.ne.s32.totalorder %s70, %s71
    %p80 = scmp.eq.s32.totalorder %s18, 0
    %p81 = por %p79, %p80
    %p82 = scmp.ne.s32.totalorder %s70, %s71
    %p83 = scmp.eq.s32.totalorder %s19, 1
    %p84 = por %p82, %p83
    %p86 = scmp.ne.s32.totalorder %s71, %s85
    %p87 = scmp.eq.s32.totalorder %s19, 0
    %p88 = por %p86, %p87
    %s90 = sadd.s32 %s89, 1
    %p93 = scmp.eq.s32.totalorder %s13, 1
    %p94 = scmp.ne.s32.totalorder %s89, %s91
    %p95 = scmp.eq.s32.totalorder %s13, 0
    %p96 = por %p94, %p95
    %p97 = scmp.ne.s32.totalorder %s89, %s91
    %p98 = scmp.eq.s32.totalorder %s18, 1
    %p99 = por %p97, %p98
    %p100 = scmp.ne.s32.totalorder %s91, %s92
    %p101 = scmp.eq.s32.totalorder %s18, 0
    %p102 = por %p100, %p101
    %p103 = scmp.ne.s32.totalorder %s91, %s92
    %p104 = scmp.eq.s32.totalorder %s19, 1
    %p105 = por %p103, %p104
    %p107 = scmp.ne.s32.totalorder %s92, %s106
    %p108 = scmp.eq.s32.totalorder %s19, 0
    %p109 = por %p107, %p108
    %s111 = sadd.s32 %s110, 1
    %p114 = scmp.eq.s32.totalorder %s13, 1
    %p115 = scmp.ne.s32.totalorder %s110, %s112
    %p116 = scmp.eq.s32.totalorder %s13, 0
    %p117 = por %p115, %p116
    %p118 = scmp.ne.s32.totalorder %s110, %s112
    %p119 = scmp.eq.s32.totalorder %s18, 1
    %p120 = por %p118, %p119
    %p121 = scmp.ne.s32.totalorder %s112, %s113
    %p122 = scmp.eq.s32.totalorder %s18, 0
    %p123 = por %p121, %p122
    %p124 = scmp.ne.s32.totalorder %s112, %s113
    %p125 = scmp.eq.s32.totalorder %s19, 1
    %p126 = por %p124, %p125
    %p128 = scmp.ne.s32.totalorder %s113, %s127
    %p129 = scmp.eq.s32.totalorder %s19, 0
    %p130 = por %p128, %p129
    %s132 = sadd.s32 %s131, 1
    %p135 = scmp.eq.s32.totalorder %s13, 1
    %p136 = scmp.ne.s32.totalorder %s131, %s133
    %p137 = scmp.eq.s32.totalorder %s13, 0
    %p138 = por %p136, %p137
    %p139 = scmp.ne.s32.totalorder %s131, %s133
    %p140 = scmp.eq.s32.totalorder %s18, 1
    %p141 = por %p139, %p140
    %p142 = scmp.ne.s32.totalorder %s133, %s134
    %p143 = scmp.eq.s32.totalorder %s18, 0
    %p144 = por %p142, %p143
    %p145 = scmp.ne.s32.totalorder %s133, %s134
    %p146 = scmp.eq.s32.totalorder %s19, 1
    %p147 = por %p145, %p146
    %p149 = scmp.ne.s32.totalorder %s134, %s148
    %p150 = scmp.eq.s32.totalorder %s19, 0
    %p151 = por %p149, %p150
    %s153 = sadd.s32 %s152, 1
    %p156 = scmp.eq.s32.totalorder %s13, 1
    %p157 = scmp.ne.s32.totalorder %s152, %s154
    %p158 = scmp.eq.s32.totalorder %s13, 0
    %p159 = por %p157, %p158
    %p160 = scmp.ne.s32.totalorder %s152, %s154
    %p161 = scmp.eq.s32.totalorder %s18, 1
    %p162 = por %p160, %p161
    %p163 = scmp.ne.s32.totalorder %s154, %s155
    %p164 = scmp.eq.s32.totalorder %s18, 0
    %p165 = por %p163, %p164
    %p166 = scmp.ne.s32.totalorder %s154, %s155
    %p167 = scmp.eq.s32.totalorder %s19, 1
    %p168 = por %p166, %p167
    %p170 = scmp.ne.s32.totalorder %s155, %s169
    %p171 = scmp.eq.s32.totalorder %s19, 0
    %p172 = por %p170, %p171
    %s173 = ssub.s32 %s13, %s20
    %p174 = scmp.eq.s32.totalorder %s173, 0
    %s176 = sadd.s32 %s175, 1
    %s177 = scalar_select %p174, %s175, %s176
    %p180 = pneg %p174
    %p181 = scmp.eq.s32.totalorder %s13, 1
    %p182 = por %p180, %p181
    %p183 = scmp.ne.s32.totalorder %s175, %s178
    %p184 = scmp.eq.s32.totalorder %s13, 0
    %p185 = por %p183, %p184
    %p186 = scmp.ne.s32.totalorder %s175, %s178
    %p187 = scmp.eq.s32.totalorder %s18, 1
    %p188 = por %p186, %p187
    %p189 = scmp.ne.s32.totalorder %s178, %s179
    %p190 = scmp.eq.s32.totalorder %s18, 0
    %p191 = por %p189, %p190
    %p192 = scmp.ne.s32.totalorder %s178, %s179
    %p193 = scmp.eq.s32.totalorder %s19, 1
    %p194 = por %p192, %p193
    %p196 = scmp.ne.s32.totalorder %s179, %s195
    %p197 = scmp.eq.s32.totalorder %s19, 0
    %p198 = por %p196, %p197
    %p199 = scmp.le.s32.totalorder 1, %s13
    %p200 = scmp.lt.s32.totalorder %s13, 3
    %p201 = pnand %p199, %p200
    %p202 = pneg %p201
    // Predicated region
    $region9: #{forward.3} parent=5 // pred_check
      _
    $region10: #{forward.3} parent=5 // pred_check_branch
      %204 = sbr.rel (%p201) target = $region12
    $region11: #{forward.3} parent=5 // pred_region
      %s205 = ssub.s32 %s13, 1
      // Predicated region
      $region13: #{forward.3} parent=11 // pred_check
        %p206 = pneg %p60
      $region14: #{forward.3} parent=11 // pred_check_branch
        %208 = sbr.rel (%p206) target = $region16
      $region15: #{forward.3} parent=11 // pred_region
        _
      $region16: #{forward.3} parent=11 // pred_fallthru
        _
      // Predicated region
      $region17: #{forward.3} parent=11 // pred_check
        %p209 = pneg %p81
      $region18: #{forward.3} parent=11 // pred_check_branch
        %211 = sbr.rel (%p209) target = $region20
      $region19: #{forward.3} parent=11 // pred_region
        _
      $region20: #{forward.3} parent=11 // pred_fallthru
        _
      // Predicated region
      $region21: #{forward.3} parent=11 // pred_check
        %p212 = pneg %p102
      $region22: #{forward.3} parent=11 // pred_check_branch
        %214 = sbr.rel (%p212) target = $region24
      $region23: #{forward.3} parent=11 // pred_region
        _
      $region24: #{forward.3} parent=11 // pred_fallthru
        _
      // Predicated region
      $region25: #{forward.3} parent=11 // pred_check
        %p215 = pneg %p123
      $region26: #{forward.3} parent=11 // pred_check_branch
        %217 = sbr.rel (%p215) target = $region28
      $region27: #{forward.3} parent=11 // pred_region
        _
      $region28: #{forward.3} parent=11 // pred_fallthru
        _
      // Predicated region
      $region29: #{forward.3} parent=11 // pred_check
        %p218 = pneg %p144
      $region30: #{forward.3} parent=11 // pred_check_branch
        %220 = sbr.rel (%p218) target = $region32
      $region31: #{forward.3} parent=11 // pred_region
        _
      $region32: #{forward.3} parent=11 // pred_fallthru
        _
      // Predicated region
      $region33: #{forward.3} parent=11 // pred_check
        %p221 = pneg %p165
      $region34: #{forward.3} parent=11 // pred_check_branch
        %223 = sbr.rel (%p221) target = $region36
      $region35: #{forward.3} parent=11 // pred_region
        _
      $region36: #{forward.3} parent=11 // pred_fallthru
        _
    $region12: #{forward.3} parent=5 // pred_fallthru
      _
    %p224 = scmp.lt.s32.totalorder %s13, 2
    // Predicated region
    $region37: #{forward.3} parent=5 // pred_check
      %p225 = pneg %p224
    $region38: #{forward.3} parent=5 // pred_check_branch
      %227 = sbr.rel (%p225) target = $region40
    $region39: #{forward.3} parent=5 // pred_region
      // Predicated region
      $region41: #{forward.3} parent=39 // pred_check
        %p228 = pneg %p33
      $region42: #{forward.3} parent=39 // pred_check_branch
        %230 = sbr.rel (%p228) target = $region44
      $region43: #{forward.3} parent=39 // pred_region
        %p231 = scmp.lt.s32.totalorder %s13, 1
        %s232 = scalar_select %p231, %s13, 1
        %s233 = smul.addr %s232, 8
        %s234 = smul.addr %s233, 4
        %s235 = scalar_lea.vmem %s0, %s234
      $region44: #{forward.3} parent=39 // pred_fallthru
        _
    $region40: #{forward.3} parent=5 // pred_fallthru
      _
    %p236 = scmp.le.s32.totalorder 1, %s13
    %p237 = scmp.lt.s32.totalorder %s13, 3
    %p238 = pnand %p236, %p237
    %p239 = pneg %p238
    // Predicated region
    $region45: #{forward.3} parent=5 // pred_check
      _
    $region46: #{forward.3} parent=5 // pred_check_branch
      %241 = sbr.rel (%p238) target = $region48
    $region47: #{forward.3} parent=5 // pred_region
      %s242 = ssub.s32 %s13, 1
      %p243 = scmp.lt.s32.totalorder %s18, 1
      %s244 = scalar_select %p243, %s18, 1
      %s245 = smul.addr %s244, 8
      %s246 = smul.addr %s245, 4
      %s247 = scalar_lea.vmem %s0, %s246
      %p248 = pneg %p39
      %p249 = pneg %p36
      %p250 = pneg %p60
      %p251 = pneg %p57
      %p252 = pneg %p81
      %p253 = pneg %p78
      %p254 = pneg %p102
      %p255 = pneg %p99
      %p256 = pneg %p123
      %p257 = pneg %p120
      %p258 = pneg %p144
      %p259 = pneg %p141
      %p260 = pneg %p165
      %p261 = pneg %p162
      %p262 = pneg %p191
      %p263 = pneg %p188
      %p264 = scmp.lt.s32.totalorder %s18, 1
      %s265 = scalar_select %p264, %s18, 1
      %s266 = smul.addr %s265, 8
      %s267 = smul.addr %s266, 4
      %s268 = scalar_lea.vmem %s7, %s267
      %p269 = scmp.lt.s32.totalorder %s18, 1
      %s270 = scalar_select %p269, %s18, 1
      %s271 = smul.addr %s270, 8
      %s272 = smul.addr %s271, 4
      %s273 = scalar_lea.vmem %s0, %s272
      %p274 = scmp.lt.s32.totalorder %s18, 1
      %s275 = scalar_select %p274, %s18, 1
      %s276 = smul.addr %s275, 8
      %s277 = smul.addr %s276, 4
      %s278 = scalar_lea.vmem %s7, %s277
      %v280 = vld [vmem:[%s273] sm:$0xf]
      %v281 = vld [vmem:[%s273 + $0x4] sm:$0xf]
      %v282 = vld [vmem:[%s273 + $0x8] sm:$0xf]
      %v283 = vld [vmem:[%s273 + $0xc] sm:$0xf]
      %v284 = vld [vmem:[%s273 + $0x10] sm:$0xf]
      %v285 = vld [vmem:[%s273 + $0x14] sm:$0xf]
      %v286 = vld [vmem:[%s273 + $0x18] sm:$0xf]
      %v287 = vld [vmem:[%s273 + $0x1c] sm:$0xf]
      %v288 = vld [vmem:[%s1] sm:$0xf]
      %v289 = vld [vmem:[%s1 + $0x4] sm:$0xf]
      %v290 = vld [vmem:[%s1 + $0x8] sm:$0xf]
      %v291 = vld [vmem:[%s1 + $0xc] sm:$0xf]
      %v292 = vld [vmem:[%s1 + $0x10] sm:$0xf]
      %v293 = vld [vmem:[%s1 + $0x14] sm:$0xf]
      %v294 = vld [vmem:[%s1 + $0x18] sm:$0xf]
      %v295 = vld [vmem:[%s1 + $0x1c] sm:$0xf]
      %v296 = vld [vmem:[%s1 + $0x20] sm:$0xf]
      %v297 = vld [vmem:[%s1 + $0x24] sm:$0xf]
      %v298 = vld [vmem:[%s1 + $0x28] sm:$0xf]
      %v299 = vld [vmem:[%s1 + $0x2c] sm:$0xf]
      %v300 = vld [vmem:[%s1 + $0x30] sm:$0xf]
      %v301 = vld [vmem:[%s1 + $0x34] sm:$0xf]
      %v302 = vld [vmem:[%s1 + $0x38] sm:$0xf]
      %v303 = vld [vmem:[%s1 + $0x3c] sm:$0xf]
      %v304 = vld [vmem:[%s2] sm:$0x1]
      %v306 = vperm.slane %v304, 0
      %v316 = vunpack.c.l.b16 %v280
      %v317 = vunpack.c.l.b16 %v281
      %v318 = vunpack.c.l.b16 %v282
      %v319 = vunpack.c.l.b16 %v283
      %v320 = vunpack.c.l.b16 %v284
      %v321 = vunpack.c.l.b16 %v285
      %v322 = vunpack.c.l.b16 %v286
      %v323 = vunpack.c.l.b16 %v287
      %v324 = vpack.c.b16 %v317, %v316
      %v325 = vpack.c.b16 %v319, %v318
      %v326 = vpack.c.b16 %v321, %v320
      %v327 = vpack.c.b16 %v323, %v322
      %v348 = vunpack.c.l.b16 %v288
      %v349 = vunpack.c.l.b16 %v289
      %v350 = vunpack.c.l.b16 %v290
      %v351 = vunpack.c.l.b16 %v291
      %v352 = vunpack.c.l.b16 %v292
      %v353 = vunpack.c.l.b16 %v293
      %v354 = vunpack.c.l.b16 %v294
      %v355 = vunpack.c.l.b16 %v295
      %v356 = vunpack.c.l.b16 %v296
      %v357 = vunpack.c.l.b16 %v297
      %v358 = vunpack.c.l.b16 %v298
      %v359 = vunpack.c.l.b16 %v299
      %v360 = vunpack.c.l.b16 %v300
      %v361 = vunpack.c.l.b16 %v301
      %v362 = vunpack.c.l.b16 %v302
      %v363 = vunpack.c.l.b16 %v303
      %v364 = vpack.c.b16 %v349, %v348
      %v365 = vpack.c.b16 %v351, %v350
      %v366 = vpack.c.b16 %v353, %v352
      %v367 = vpack.c.b16 %v355, %v354
      %v368 = vpack.c.b16 %v357, %v356
      %v369 = vpack.c.b16 %v359, %v358
      %v370 = vpack.c.b16 %v361, %v360
      %v371 = vpack.c.b16 %v363, %v362
      %380 = vmatpush.bf16.msra.mxu0 %v371
      %381 = vmatpush.bf16.msra.mxu0 %v370
      %382 = vmatpush.bf16.msra.mxu0 %v369
      %383 = vmatpush.bf16.msra.mxu0 %v368
      %384 = vmatpush.bf16.msra.mxu0 %v367
      %385 = vmatpush.bf16.msra.mxu0 %v366
      %386 = vmatpush.bf16.msra.mxu0 %v365
      %387 = vmatpush.bf16.msra.mxu0 %v364
      %388 = vmatmul.bf16.gmra.mxu0 %v324
      %v389 = vpop.f32.mrf.mxu0
      %v390 = vadd.f32 %v306, %v389
      %v391 = vpop.f32.mrf.mxu0
      %v392 = vadd.f32 %v306, %v391
      %393 = vmatmul.bf16.gmra.mxu0 %v325
      %v394 = vpop.f32.mrf.mxu0
      %v395 = vadd.f32 %v306, %v394
      %v396 = vpop.f32.mrf.mxu0
      %v397 = vadd.f32 %v306, %v396
      %398 = vmatmul.bf16.gmra.mxu0 %v326
      %v399 = vpop.f32.mrf.mxu0
      %v400 = vadd.f32 %v306, %v399
      %v401 = vpop.f32.mrf.mxu0
      %v402 = vadd.f32 %v306, %v401
      %403 = vmatmul.bf16.gmra.mxu0 %v327
      %v404 = vpop.f32.mrf.mxu0
      %v405 = vadd.f32 %v306, %v404
      %v406 = vpop.f32.mrf.mxu0
      %v407 = vadd.f32 %v306, %v406
      %408 = vdwg.mxu0
      %v409 = vmax.f32 %v390, 0.0
      %v410 = vmax.f32 %v392, 0.0
      %v411 = vmax.f32 %v395, 0.0
      %v412 = vmax.f32 %v397, 0.0
      %v413 = vmax.f32 %v400, 0.0
      %v414 = vmax.f32 %v402, 0.0
      %v415 = vmax.f32 %v405, 0.0
      %v416 = vmax.f32 %v407, 0.0
      %v417 = vpack.c.bf16 %v409, %v409
      %v418 = vpack.c.bf16 %v410, %v410
      %v419 = vpack.c.bf16 %v411, %v411
      %v420 = vpack.c.bf16 %v412, %v412
      %v421 = vpack.c.bf16 %v413, %v413
      %v422 = vpack.c.bf16 %v414, %v414
      %v423 = vpack.c.bf16 %v415, %v415
      %v424 = vpack.c.bf16 %v416, %v416
      %vm425 = vcmask 257024
      %426 = vst.msk [vmem:[#allocation2] sm:$0xf] %vm425, 0
      %vm427 = vcmask 253952
      %428 = vst.msk [vmem:[#allocation2 + $0x4] sm:$0x1] %vm427, 0
      %429 = vst.msk [vmem:[#allocation2 + $0x8] sm:$0xf] %vm425, 0
      %430 = vst.msk [vmem:[#allocation2 + $0xc] sm:$0x1] %vm427, 0
      %431 = vst.msk [vmem:[#allocation2 + $0x10] sm:$0xf] %vm425, 0
      %432 = vst.msk [vmem:[#allocation2 + $0x14] sm:$0x1] %vm427, 0
      %433 = vst.msk [vmem:[#allocation2 + $0x18] sm:$0xf] %vm425, 0
      %434 = vst.msk [vmem:[#allocation2 + $0x1c] sm:$0x1] %vm427, 0
      %435 = vst.msk [vmem:[#allocation2 + $0x20] sm:$0xf] %vm425, 0
      %436 = vst.msk [vmem:[#allocation2 + $0x24] sm:$0x1] %vm427, 0
      %437 = vst.msk [vmem:[#allocation2 + $0x28] sm:$0xf] %vm425, 0
      %438 = vst.msk [vmem:[#allocation2 + $0x2c] sm:$0x1] %vm427, 0
      %439 = vst.msk [vmem:[#allocation2 + $0x30] sm:$0xf] %vm425, 0
      %440 = vst.msk [vmem:[#allocation2 + $0x34] sm:$0x1] %vm427, 0
      %441 = vst.msk [vmem:[#allocation2 + $0x38] sm:$0xf] %vm425, 0
      %442 = vst.msk [vmem:[#allocation2 + $0x3c] sm:$0x1] %vm427, 0
      %443 = vst.msk [vmem:[#allocation2 + $0x40] sm:$0xf] %vm425, 0
      %444 = vst.msk [vmem:[#allocation2 + $0x44] sm:$0x1] %vm427, 0
      %445 = vst.msk [vmem:[#allocation2 + $0x48] sm:$0xf] %vm425, 0
      %446 = vst.msk [vmem:[#allocation2 + $0x4c] sm:$0x1] %vm427, 0
      %v448 = vshrl.u32 %v417, 16
      %v450 = vrot.slane %v448, 7
      %v451 = vshll.u32 %v417, 16
      %v453 = vor.u32 %v450, %v451
      %v454 = vrot.slane %v450, 4
      %v456 = vshrl.u32 %v418, 16
      %v458 = vrot.slane %v456, 7
      %v459 = vshll.u32 %v418, 16
      %v461 = vor.u32 %v458, %v459
      %v462 = vrot.slane %v458, 4
      %v464 = vshrl.u32 %v419, 16
      %v466 = vrot.slane %v464, 7
      %v467 = vshll.u32 %v419, 16
      %v469 = vor.u32 %v466, %v467
      %v470 = vrot.slane %v466, 4
      %v472 = vshrl.u32 %v420, 16
      %v474 = vrot.slane %v472, 7
      %v475 = vshll.u32 %v420, 16
      %v477 = vor.u32 %v474, %v475
      %v478 = vrot.slane %v474, 4
      %v480 = vshrl.u32 %v421, 16
      %v482 = vrot.slane %v480, 7
      %v483 = vshll.u32 %v421, 16
      %v485 = vor.u32 %v482, %v483
      %v486 = vrot.slane %v482, 4
      %v488 = vshrl.u32 %v422, 16
      %v490 = vrot.slane %v488, 7
      %v491 = vshll.u32 %v422, 16
      %v493 = vor.u32 %v490, %v491
      %v494 = vrot.slane %v490, 4
      %v496 = vshrl.u32 %v423, 16
      %v498 = vrot.slane %v496, 7
      %v499 = vshll.u32 %v423, 16
      %v501 = vor.u32 %v498, %v499
      %v502 = vrot.slane %v498, 4
      %v504 = vshrl.u32 %v424, 16
      %v506 = vrot.slane %v504, 7
      %v507 = vshll.u32 %v424, 16
      %v509 = vor.u32 %v506, %v507
      %v510 = vrot.slane %v506, 4
      %s527 = scalar_lea.vmem [#allocation2], 8
      %vm528 = vcmask 257024
      %vm529 = vsmask.f32 7938
      %vm530 = vmand %vm528, %vm529
      %v531 = vld [vmem:[%s527] sm:$0xf]
      %v532 = vsel %vm530, %v453, %v531
      %533 = vst [vmem:[%s527] sm:$0xf] %v532
      %vm534 = vcmask 253952
      %vm535 = vsmask.f32 256
      %vm536 = vmand %vm534, %vm535
      %v537 = vld [vmem:[%s527 + $0x4] sm:$0x1]
      %v538 = vsel %vm536, %v454, %v537
      %539 = vst [vmem:[%s527 + $0x4] sm:$0x1] %v538
      %v540 = vld [vmem:[%s527 + $0x8] sm:$0xf]
      %v541 = vsel %vm530, %v461, %v540
      %542 = vst [vmem:[%s527 + $0x8] sm:$0xf] %v541
      %v543 = vld [vmem:[%s527 + $0xc] sm:$0x1]
      %v544 = vsel %vm536, %v462, %v543
      %545 = vst [vmem:[%s527 + $0xc] sm:$0x1] %v544
      %v546 = vld [vmem:[%s527 + $0x10] sm:$0xf]
      %v547 = vsel %vm530, %v469, %v546
      %548 = vst [vmem:[%s527 + $0x10] sm:$0xf] %v547
      %v549 = vld [vmem:[%s527 + $0x14] sm:$0x1]
      %v550 = vsel %vm536, %v470, %v549
      %551 = vst [vmem:[%s527 + $0x14] sm:$0x1] %v550
      %v552 = vld [vmem:[%s527 + $0x18] sm:$0xf]
      %v553 = vsel %vm530, %v477, %v552
      %554 = vst [vmem:[%s527 + $0x18] sm:$0xf] %v553
      %v555 = vld [vmem:[%s527 + $0x1c] sm:$0x1]
      %v556 = vsel %vm536, %v478, %v555
      %557 = vst [vmem:[%s527 + $0x1c] sm:$0x1] %v556
      %v558 = vld [vmem:[%s527 + $0x20] sm:$0xf]
      %v559 = vsel %vm530, %v485, %v558
      %560 = vst [vmem:[%s527 + $0x20] sm:$0xf] %v559
      %v561 = vld [vmem:[%s527 + $0x24] sm:$0x1]
      %v562 = vsel %vm536, %v486, %v561
      %563 = vst [vmem:[%s527 + $0x24] sm:$0x1] %v562
      %v564 = vld [vmem:[%s527 + $0x28] sm:$0xf]
      %v565 = vsel %vm530, %v493, %v564
      %566 = vst [vmem:[%s527 + $0x28] sm:$0xf] %v565
      %v567 = vld [vmem:[%s527 + $0x2c] sm:$0x1]
      %v568 = vsel %vm536, %v494, %v567
      %569 = vst [vmem:[%s527 + $0x2c] sm:$0x1] %v568
      %v570 = vld [vmem:[%s527 + $0x30] sm:$0xf]
      %v571 = vsel %vm530, %v501, %v570
      %572 = vst [vmem:[%s527 + $0x30] sm:$0xf] %v571
      %v573 = vld [vmem:[%s527 + $0x34] sm:$0x1]
      %v574 = vsel %vm536, %v502, %v573
      %575 = vst [vmem:[%s527 + $0x34] sm:$0x1] %v574
      %v576 = vld [vmem:[%s527 + $0x38] sm:$0xf]
      %v577 = vsel %vm530, %v509, %v576
      %578 = vst [vmem:[%s527 + $0x38] sm:$0xf] %v577
      %v579 = vld [vmem:[%s527 + $0x3c] sm:$0x1]
      %v580 = vsel %vm536, %v510, %v579
      %581 = vst [vmem:[%s527 + $0x3c] sm:$0x1] %v580
      %v582 = vld [vmem:[%s4] sm:$0x1]
      %v584 = vperm.slane %v582, 0
      %vm586 = vcmask 261120
      %587 = vst.msk [vmem:[#allocation3] sm:$0xff] %vm586, %v584
      %588 = vst.msk [vmem:[#allocation3 + $0x8] sm:$0xff] %vm586, %v584
      %589 = vst.msk [vmem:[#allocation3 + $0x10] sm:$0xff] %vm586, %v584
      %590 = vst.msk [vmem:[#allocation3 + $0x18] sm:$0xff] %vm586, %v584
      %591 = vst.msk [vmem:[#allocation3 + $0x20] sm:$0xff] %vm586, %v584
      %592 = vst.msk [vmem:[#allocation3 + $0x28] sm:$0xff] %vm586, %v584
      %593 = vst.msk [vmem:[#allocation3 + $0x30] sm:$0xff] %vm586, %v584
      %594 = vst.msk [vmem:[#allocation3 + $0x38] sm:$0xff] %vm586, %v584
      %v595 = vld [vmem:[#allocation2] sm:$0xf]
      %v596 = vld [vmem:[#allocation2 + $0x8] sm:$0xf]
      %v597 = vld [vmem:[#allocation2 + $0x10] sm:$0xf]
      %v598 = vld [vmem:[#allocation2 + $0x18] sm:$0xf]
      %v599 = vld [vmem:[#allocation2 + $0x20] sm:$0xf]
      %v600 = vld [vmem:[#allocation2 + $0x28] sm:$0xf]
      %v601 = vld [vmem:[#allocation2 + $0x30] sm:$0xf]
      %v602 = vld [vmem:[#allocation2 + $0x38] sm:$0xf]
      %v603 = vld [vmem:[#allocation3] sm:$0xff]
      %v604 = vld [vmem:[#allocation3 + $0x8] sm:$0xff]
      %v605 = vld [vmem:[#allocation3 + $0x10] sm:$0xff]
      %v606 = vld [vmem:[#allocation3 + $0x18] sm:$0xff]
      %v607 = vld [vmem:[#allocation3 + $0x20] sm:$0xff]
      %v608 = vld [vmem:[#allocation3 + $0x28] sm:$0xff]
      %v609 = vld [vmem:[#allocation3 + $0x30] sm:$0xff]
      %v610 = vld [vmem:[#allocation3 + $0x38] sm:$0xff]
      %v611 = vld [vmem:[%s3] sm:$0xf]
      %v612 = vld [vmem:[%s3 + $0x4] sm:$0xf]
      %v613 = vld [vmem:[%s3 + $0x8] sm:$0xf]
      %v614 = vld [vmem:[%s3 + $0xc] sm:$0xf]
      %v623 = vunpack.c.l.b16 %v595
      %v624 = vunpack.c.l.b16 %v596
      %v625 = vunpack.c.l.b16 %v597
      %v626 = vunpack.c.l.b16 %v598
      %v627 = vunpack.c.l.b16 %v599
      %v628 = vunpack.c.l.b16 %v600
      %v629 = vunpack.c.l.b16 %v601
      %v630 = vunpack.c.l.b16 %v602
      %v631 = vpack.c.b16 %v624, %v623
      %v632 = vpack.c.b16 %v626, %v625
      %v633 = vpack.c.b16 %v628, %v627
      %v634 = vpack.c.b16 %v630, %v629
      %v639 = vunpack.c.l.b16 %v611
      %v640 = vunpack.c.l.b16 %v612
      %v641 = vunpack.c.l.b16 %v613
      %v642 = vunpack.c.l.b16 %v614
      %v643 = vpack.c.b16 %v640, %v639
      %v644 = vpack.c.b16 %v642, %v641
      %v648 = vsel %vm586, %v631, 0
      %v651 = vsel %vm586, %v632, 0
      %v654 = vsel %vm586, %v633, 0
      %v657 = vsel %vm586, %v634, 0
      %659 = vmatpush.bf16.msra.mxu0 0
      %660 = vmatpush.bf16.msra.mxu0 0
      %661 = vmatpush.bf16.msra.mxu0 0
      %662 = vmatpush.bf16.msra.mxu0 0
      %663 = vmatpush.bf16.msra.mxu0 0
      %664 = vmatpush.bf16.msra.mxu0 0
      %665 = vmatpush.bf16.msra.mxu0 %v644
      %666 = vmatpush.bf16.msra.mxu0 %v643
      %667 = vmatmul.bf16.gmra.mxu0 %v648
      %v668 = vpop.f32.mrf.mxu0
      %v669 = vadd.f32 0.0, %v668
      %v670 = vpop.f32.mrf.mxu0
      %v671 = vadd.f32 0.0, %v670
      %672 = vmatmul.bf16.gmra.mxu0 %v651
      %v673 = vpop.f32.mrf.mxu0
      %v674 = vadd.f32 0.0, %v673
      %v675 = vpop.f32.mrf.mxu0
      %v676 = vadd.f32 0.0, %v675
      %677 = vmatmul.bf16.gmra.mxu0 %v654
      %v678 = vpop.f32.mrf.mxu0
      %v679 = vadd.f32 0.0, %v678
      %v680 = vpop.f32.mrf.mxu0
      %v681 = vadd.f32 0.0, %v680
      %682 = vmatmul.bf16.gmra.mxu0 %v657
      %v683 = vpop.f32.mrf.mxu0
      %v684 = vadd.f32 0.0, %v683
      %v685 = vpop.f32.mrf.mxu0
      %v686 = vadd.f32 0.0, %v685
      %687 = vdwg.mxu0
      %v688 = vadd.f32 %v603, %v669
      %v689 = vadd.f32 %v604, %v671
      %v690 = vadd.f32 %v605, %v674
      %v691 = vadd.f32 %v606, %v676
      %v692 = vadd.f32 %v607, %v679
      %v693 = vadd.f32 %v608, %v681
      %v694 = vadd.f32 %v609, %v684
      %v695 = vadd.f32 %v610, %v686
      %696 = vst.msk [vmem:[#allocation3] sm:$0xff] %vm586, %v688
      %697 = vst.msk [vmem:[#allocation3 + $0x8] sm:$0xff] %vm586, %v689
      %698 = vst.msk [vmem:[#allocation3 + $0x10] sm:$0xff] %vm586, %v690
      %699 = vst.msk [vmem:[#allocation3 + $0x18] sm:$0xff] %vm586, %v691
      %700 = vst.msk [vmem:[#allocation3 + $0x20] sm:$0xff] %vm586, %v692
      %701 = vst.msk [vmem:[#allocation3 + $0x28] sm:$0xff] %vm586, %v693
      %702 = vst.msk [vmem:[#allocation3 + $0x30] sm:$0xff] %vm586, %v694
      %703 = vst.msk [vmem:[#allocation3 + $0x38] sm:$0xff] %vm586, %v695
      %v704 = vld [vmem:[#allocation2] sm:$0xf]
      %v705 = vld [vmem:[#allocation2 + $0x4] sm:$0x1]
      %v706 = vld [vmem:[#allocation2 + $0x8] sm:$0xf]
      %v707 = vld [vmem:[#allocation2 + $0xc] sm:$0x1]
      %v708 = vld [vmem:[#allocation2 + $0x10] sm:$0xf]
      %v709 = vld [vmem:[#allocation2 + $0x14] sm:$0x1]
      %v710 = vld [vmem:[#allocation2 + $0x18] sm:$0xf]
      %v711 = vld [vmem:[#allocation2 + $0x1c] sm:$0x1]
      %v712 = vld [vmem:[#allocation2 + $0x20] sm:$0xf]
      %v713 = vld [vmem:[#allocation2 + $0x24] sm:$0x1]
      %v714 = vld [vmem:[#allocation2 + $0x28] sm:$0xf]
      %v715 = vld [vmem:[#allocation2 + $0x2c] sm:$0x1]
      %v716 = vld [vmem:[#allocation2 + $0x30] sm:$0xf]
      %v717 = vld [vmem:[#allocation2 + $0x34] sm:$0x1]
      %v718 = vld [vmem:[#allocation2 + $0x38] sm:$0xf]
      %v719 = vld [vmem:[#allocation2 + $0x3c] sm:$0x1]
      %v720 = vld [vmem:[#allocation3] sm:$0xff]
      %v721 = vld [vmem:[#allocation3 + $0x8] sm:$0xff]
      %v722 = vld [vmem:[#allocation3 + $0x10] sm:$0xff]
      %v723 = vld [vmem:[#allocation3 + $0x18] sm:$0xff]
      %v724 = vld [vmem:[#allocation3 + $0x20] sm:$0xff]
      %v725 = vld [vmem:[#allocation3 + $0x28] sm:$0xff]
      %v726 = vld [vmem:[#allocation3 + $0x30] sm:$0xff]
      %v727 = vld [vmem:[#allocation3 + $0x38] sm:$0xff]
      %vm728 = vsmask.f32 3328
      %vm729 = vsmask.f32 7440
      %vm730 = vmor %vm728, %vm729
      %v732 = vshrl.u32 %v704, 16
      %v734 = vrot.slane %v732, 4
      %v735 = vshll.u32 %v704, 16
      %v737 = vrot.slane %v735, 5
      %v738 = vor.u32 %v734, %v737
      %v739 = vrot.slane %v738, 4
      %v741 = vshll.u32 %v705, 16
      %v743 = vrot.slane %v741, 5
      %v744 = vsel %vm730, %v739, %v743
      %v746 = vshrl.u32 %v706, 16
      %v748 = vrot.slane %v746, 4
      %v749 = vshll.u32 %v706, 16
      %v751 = vrot.slane %v749, 5
      %v752 = vor.u32 %v748, %v751
      %v753 = vrot.slane %v752, 4
      %v755 = vshll.u32 %v707, 16
      %v757 = vrot.slane %v755, 5
      %v758 = vsel %vm730, %v753, %v757
      %v760 = vshrl.u32 %v708, 16
      %v762 = vrot.slane %v760, 4
      %v763 = vshll.u32 %v708, 16
      %v765 = vrot.slane %v763, 5
      %v766 = vor.u32 %v762, %v765
      %v767 = vrot.slane %v766, 4
      %v769 = vshll.u32 %v709, 16
      %v771 = vrot.slane %v769, 5
      %v772 = vsel %vm730, %v767, %v771
      %v774 = vshrl.u32 %v710, 16
      %v776 = vrot.slane %v774, 4
      %v777 = vshll.u32 %v710, 16
      %v779 = vrot.slane %v777, 5
      %v780 = vor.u32 %v776, %v779
      %v781 = vrot.slane %v780, 4
      %v783 = vshll.u32 %v711, 16
      %v785 = vrot.slane %v783, 5
      %v786 = vsel %vm730, %v781, %v785
      %v788 = vshrl.u32 %v712, 16
      %v790 = vrot.slane %v788, 4
      %v791 = vshll.u32 %v712, 16
      %v793 = vrot.slane %v791, 5
      %v794 = vor.u32 %v790, %v793
      %v795 = vrot.slane %v794, 4
      %v797 = vshll.u32 %v713, 16
      %v799 = vrot.slane %v797, 5
      %v800 = vsel %vm730, %v795, %v799
      %v802 = vshrl.u32 %v714, 16
      %v804 = vrot.slane %v802, 4
      %v805 = vshll.u32 %v714, 16
      %v807 = vrot.slane %v805, 5
      %v808 = vor.u32 %v804, %v807
      %v809 = vrot.slane %v808, 4
      %v811 = vshll.u32 %v715, 16
      %v813 = vrot.slane %v811, 5
      %v814 = vsel %vm730, %v809, %v813
      %v816 = vshrl.u32 %v716, 16
      %v818 = vrot.slane %v816, 4
      %v819 = vshll.u32 %v716, 16
      %v821 = vrot.slane %v819, 5
      %v822 = vor.u32 %v818, %v821
      %v823 = vrot.slane %v822, 4
      %v825 = vshll.u32 %v717, 16
      %v827 = vrot.slane %v825, 5
      %v828 = vsel %vm730, %v823, %v827
      %v830 = vshrl.u32 %v718, 16
      %v832 = vrot.slane %v830, 4
      %v833 = vshll.u32 %v718, 16
      %v835 = vrot.slane %v833, 5
      %v836 = vor.u32 %v832, %v835
      %v837 = vrot.slane %v836, 4
      %v839 = vshll.u32 %v719, 16
      %v841 = vrot.slane %v839, 5
      %v842 = vsel %vm730, %v837, %v841
      %s843 = scalar_lea.vmem %s3, 16
      %v844 = vld [vmem:[%s843] sm:$0xf]
      %v845 = vld [vmem:[%s843 + $0x4] sm:$0xf]
      %v846 = vld [vmem:[%s843 + $0x8] sm:$0xf]
      %v847 = vld [vmem:[%s843 + $0xc] sm:$0xf]
      %v848 = vunpack.c.l.b16 %v744
      %v849 = vunpack.c.l.b16 %v758
      %v850 = vunpack.c.l.b16 %v772
      %v851 = vunpack.c.l.b16 %v786
      %v852 = vunpack.c.l.b16 %v800
      %v853 = vunpack.c.l.b16 %v814
      %v854 = vunpack.c.l.b16 %v828
      %v855 = vunpack.c.l.b16 %v842
      %v856 = vpack.c.b16 %v849, %v848
      %v857 = vpack.c.b16 %v851, %v850
      %v858 = vpack.c.b16 %v853, %v852
      %v859 = vpack.c.b16 %v855, %v854
      %v864 = vunpack.c.l.b16 %v844
      %v865 = vunpack.c.l.b16 %v845
      %v866 = vunpack.c.l.b16 %v846
      %v867 = vunpack.c.l.b16 %v847
      %v868 = vpack.c.b16 %v865, %v864
      %v869 = vpack.c.b16 %v867, %v866
      %v873 = vsel %vm586, %v856, 0
      %v876 = vsel %vm586, %v857, 0
      %v879 = vsel %vm586, %v858, 0
      %v882 = vsel %vm586, %v859, 0
      %884 = vmatpush.bf16.msra.mxu0 0
      %885 = vmatpush.bf16.msra.mxu0 0
      %886 = vmatpush.bf16.msra.mxu0 0
      %887 = vmatpush.bf16.msra.mxu0 0
      %888 = vmatpush.bf16.msra.mxu0 0
      %889 = vmatpush.bf16.msra.mxu0 0
      %890 = vmatpush.bf16.msra.mxu0 %v869
      %891 = vmatpush.bf16.msra.mxu0 %v868
      %892 = vmatmul.bf16.gmra.mxu0 %v873
      %v893 = vpop.f32.mrf.mxu0
      %v894 = vadd.f32 0.0, %v893
      %v895 = vpop.f32.mrf.mxu0
      %v896 = vadd.f32 0.0, %v895
      %897 = vmatmul.bf16.gmra.mxu0 %v876
      %v898 = vpop.f32.mrf.mxu0
      %v899 = vadd.f32 0.0, %v898
      %v900 = vpop.f32.mrf.mxu0
      %v901 = vadd.f32 0.0, %v900
      %902 = vmatmul.bf16.gmra.mxu0 %v879
      %v903 = vpop.f32.mrf.mxu0
      %v904 = vadd.f32 0.0, %v903
      %v905 = vpop.f32.mrf.mxu0
      %v906 = vadd.f32 0.0, %v905
      %907 = vmatmul.bf16.gmra.mxu0 %v882
      %v908 = vpop.f32.mrf.mxu0
      %v909 = vadd.f32 0.0, %v908
      %v910 = vpop.f32.mrf.mxu0
      %v911 = vadd.f32 0.0, %v910
      %912 = vdwg.mxu0
      %v913 = vadd.f32 %v720, %v894
      %v914 = vadd.f32 %v721, %v896
      %v915 = vadd.f32 %v722, %v899
      %v916 = vadd.f32 %v723, %v901
      %v917 = vadd.f32 %v724, %v904
      %v918 = vadd.f32 %v725, %v906
      %v919 = vadd.f32 %v726, %v909
      %v920 = vadd.f32 %v727, %v911
      %921 = vst.msk [vmem:[#allocation3] sm:$0xff] %vm586, %v913
      %922 = vst.msk [vmem:[#allocation3 + $0x8] sm:$0xff] %vm586, %v914
      %923 = vst.msk [vmem:[#allocation3 + $0x10] sm:$0xff] %vm586, %v915
      %924 = vst.msk [vmem:[#allocation3 + $0x18] sm:$0xff] %vm586, %v916
      %925 = vst.msk [vmem:[#allocation3 + $0x20] sm:$0xff] %vm586, %v917
      %926 = vst.msk [vmem:[#allocation3 + $0x28] sm:$0xff] %vm586, %v918
      %927 = vst.msk [vmem:[#allocation3 + $0x30] sm:$0xff] %vm586, %v919
      %928 = vst.msk [vmem:[#allocation3 + $0x38] sm:$0xff] %vm586, %v920
      %v929 = vld [vmem:[#allocation2] sm:$0xe]
      %v930 = vld [vmem:[#allocation2 + $0x4] sm:$0x1]
      %v931 = vld [vmem:[#allocation2 + $0x8] sm:$0xe]
      %v932 = vld [vmem:[#allocation2 + $0xc] sm:$0x1]
      %v933 = vld [vmem:[#allocation2 + $0x10] sm:$0xe]
      %v934 = vld [vmem:[#allocation2 + $0x14] sm:$0x1]
      %v935 = vld [vmem:[#allocation2 + $0x18] sm:$0xe]
      %v936 = vld [vmem:[#allocation2 + $0x1c] sm:$0x1]
      %v937 = vld [vmem:[#allocation2 + $0x20] sm:$0xe]
      %v938 = vld [vmem:[#allocation2 + $0x24] sm:$0x1]
      %v939 = vld [vmem:[#allocation2 + $0x28] sm:$0xe]
      %v940 = vld [vmem:[#allocation2 + $0x2c] sm:$0x1]
      %v941 = vld [vmem:[#allocation2 + $0x30] sm:$0xe]
      %v942 = vld [vmem:[#allocation2 + $0x34] sm:$0x1]
      %v943 = vld [vmem:[#allocation2 + $0x38] sm:$0xe]
      %v944 = vld [vmem:[#allocation2 + $0x3c] sm:$0x1]
      %v945 = vld [vmem:[#allocation3] sm:$0xff]
      %v946 = vld [vmem:[#allocation3 + $0x8] sm:$0xff]
      %v947 = vld [vmem:[#allocation3 + $0x10] sm:$0xff]
      %v948 = vld [vmem:[#allocation3 + $0x18] sm:$0xff]
      %v949 = vld [vmem:[#allocation3 + $0x20] sm:$0xff]
      %v950 = vld [vmem:[#allocation3 + $0x28] sm:$0xff]
      %v951 = vld [vmem:[#allocation3 + $0x30] sm:$0xff]
      %v952 = vld [vmem:[#allocation3 + $0x38] sm:$0xff]
      %vm969 = vcmask 1042432
      %vm970 = vcmask 1046532
      %vm971 = vmor %vm969, %vm970
      %v972 = vrot.slane %v929, 5
      %v973 = vrot.slane %v972, 4
      %v974 = vrot.slane %v930, 5
      %v975 = vsel %vm971, %v973, %v974
      %v976 = vrot.slane %v931, 5
      %v977 = vrot.slane %v976, 4
      %v978 = vrot.slane %v932, 5
      %v979 = vsel %vm971, %v977, %v978
      %v980 = vrot.slane %v933, 5
      %v981 = vrot.slane %v980, 4
      %v982 = vrot.slane %v934, 5
      %v983 = vsel %vm971, %v981, %v982
      %v984 = vrot.slane %v935, 5
      %v985 = vrot.slane %v984, 4
      %v986 = vrot.slane %v936, 5
      %v987 = vsel %vm971, %v985, %v986
      %v988 = vrot.slane %v937, 5
      %v989 = vrot.slane %v988, 4
      %v990 = vrot.slane %v938, 5
      %v991 = vsel %vm971, %v989, %v990
      %v992 = vrot.slane %v939, 5
      %v993 = vrot.slane %v992, 4
      %v994 = vrot.slane %v940, 5
      %v995 = vsel %vm971, %v993, %v994
      %v996 = vrot.slane %v941, 5
      %v997 = vrot.slane %v996, 4
      %v998 = vrot.slane %v942, 5
      %v999 = vsel %vm971, %v997, %v998
      %v1000 = vrot.slane %v943, 5
      %v1001 = vrot.slane %v1000, 4
      %v1002 = vrot.slane %v944, 5
      %v1003 = vsel %vm971, %v1001, %v1002
      %s1004 = scalar_lea.vmem %s3, 32
      %v1005 = vld [vmem:[%s1004] sm:$0xf]
      %v1006 = vld [vmem:[%s1004 + $0x4] sm:$0xf]
      %v1007 = vld [vmem:[%s1004 + $0x8] sm:$0xf]
      %v1008 = vld [vmem:[%s1004 + $0xc] sm:$0xf]
      %v1009 = vunpack.c.l.b16 %v975
      %v1010 = vunpack.c.l.b16 %v979
      %v1011 = vunpack.c.l.b16 %v983
      %v1012 = vunpack.c.l.b16 %v987
      %v1013 = vunpack.c.l.b16 %v991
      %v1014 = vunpack.c.l.b16 %v995
      %v1015 = vunpack.c.l.b16 %v999
      %v1016 = vunpack.c.l.b16 %v1003
      %v1017 = vpack.c.b16 %v1010, %v1009
      %v1018 = vpack.c.b16 %v1012, %v1011
      %v1019 = vpack.c.b16 %v1014, %v1013
      %v1020 = vpack.c.b16 %v1016, %v1015
      %v1025 = vunpack.c.l.b16 %v1005
      %v1026 = vunpack.c.l.b16 %v1006
      %v1027 = vunpack.c.l.b16 %v1007
      %v1028 = vunpack.c.l.b16 %v1008
      %v1029 = vpack.c.b16 %v1026, %v1025
      %v1030 = vpack.c.b16 %v1028, %v1027
      %v1034 = vsel %vm586, %v1017, 0
      %v1037 = vsel %vm586, %v1018, 0
      %v1040 = vsel %vm586, %v1019, 0
      %v1043 = vsel %vm586, %v1020, 0
      %1045 = vmatpush.bf16.msra.mxu0 0
      %1046 = vmatpush.bf16.msra.mxu0 0
      %1047 = vmatpush.bf16.msra.mxu0 0
      %1048 = vmatpush.bf16.msra.mxu0 0
      %1049 = vmatpush.bf16.msra.mxu0 0
      %1050 = vmatpush.bf16.msra.mxu0 0
      %1051 = vmatpush.bf16.msra.mxu0 %v1030
      %1052 = vmatpush.bf16.msra.mxu0 %v1029
      %1053 = vmatmul.bf16.gmra.mxu0 %v1034
      %v1054 = vpop.f32.mrf.mxu0
      %v1055 = vadd.f32 0.0, %v1054
      %v1056 = vpop.f32.mrf.mxu0
      %v1057 = vadd.f32 0.0, %v1056
      %1058 = vmatmul.bf16.gmra.mxu0 %v1037
      %v1059 = vpop.f32.mrf.mxu0
      %v1060 = vadd.f32 0.0, %v1059
      %v1061 = vpop.f32.mrf.mxu0
      %v1062 = vadd.f32 0.0, %v1061
      %1063 = vmatmul.bf16.gmra.mxu0 %v1040
      %v1064 = vpop.f32.mrf.mxu0
      %v1065 = vadd.f32 0.0, %v1064
      %v1066 = vpop.f32.mrf.mxu0
      %v1067 = vadd.f32 0.0, %v1066
      %1068 = vmatmul.bf16.gmra.mxu0 %v1043
      %v1069 = vpop.f32.mrf.mxu0
      %v1070 = vadd.f32 0.0, %v1069
      %v1071 = vpop.f32.mrf.mxu0
      %v1072 = vadd.f32 0.0, %v1071
      %1073 = vdwg.mxu0
      %v1074 = vadd.f32 %v945, %v1055
      %v1075 = vadd.f32 %v946, %v1057
      %v1076 = vadd.f32 %v947, %v1060
      %v1077 = vadd.f32 %v948, %v1062
      %v1078 = vadd.f32 %v949, %v1065
      %v1079 = vadd.f32 %v950, %v1067
      %v1080 = vadd.f32 %v951, %v1070
      %v1081 = vadd.f32 %v952, %v1072
      %1082 = vst.msk [vmem:[#allocation3] sm:$0xff] %vm586, %v1074
      %1083 = vst.msk [vmem:[#allocation3 + $0x8] sm:$0xff] %vm586, %v1075
      %1084 = vst.msk [vmem:[#allocation3 + $0x10] sm:$0xff] %vm586, %v1076
      %1085 = vst.msk [vmem:[#allocation3 + $0x18] sm:$0xff] %vm586, %v1077
      %1086 = vst.msk [vmem:[#allocation3 + $0x20] sm:$0xff] %vm586, %v1078
      %1087 = vst.msk [vmem:[#allocation3 + $0x28] sm:$0xff] %vm586, %v1079
      %1088 = vst.msk [vmem:[#allocation3 + $0x30] sm:$0xff] %vm586, %v1080
      %1089 = vst.msk [vmem:[#allocation3 + $0x38] sm:$0xff] %vm586, %v1081
      %v1090 = vld [vmem:[%s527] sm:$0xf]
      %v1091 = vld [vmem:[%s527 + $0x8] sm:$0xf]
      %v1092 = vld [vmem:[%s527 + $0x10] sm:$0xf]
      %v1093 = vld [vmem:[%s527 + $0x18] sm:$0xf]
      %v1094 = vld [vmem:[%s527 + $0x20] sm:$0xf]
      %v1095 = vld [vmem:[%s527 + $0x28] sm:$0xf]
      %v1096 = vld [vmem:[%s527 + $0x30] sm:$0xf]
      %v1097 = vld [vmem:[%s527 + $0x38] sm:$0xf]
      %v1098 = vld [vmem:[#allocation3] sm:$0xff]
      %v1099 = vld [vmem:[#allocation3 + $0x8] sm:$0xff]
      %v1100 = vld [vmem:[#allocation3 + $0x10] sm:$0xff]
      %v1101 = vld [vmem:[#allocation3 + $0x18] sm:$0xff]
      %v1102 = vld [vmem:[#allocation3 + $0x20] sm:$0xff]
      %v1103 = vld [vmem:[#allocation3 + $0x28] sm:$0xff]
      %v1104 = vld [vmem:[#allocation3 + $0x30] sm:$0xff]
      %v1105 = vld [vmem:[#allocation3 + $0x38] sm:$0xff]
      %s1106 = scalar_lea.vmem %s3, 48
      %v1107 = vld [vmem:[%s1106] sm:$0xf]
      %v1108 = vld [vmem:[%s1106 + $0x4] sm:$0xf]
      %v1109 = vld [vmem:[%s1106 + $0x8] sm:$0xf]
      %v1110 = vld [vmem:[%s1106 + $0xc] sm:$0xf]
      %v1119 = vunpack.c.l.b16 %v1090
      %v1120 = vunpack.c.l.b16 %v1091
      %v1121 = vunpack.c.l.b16 %v1092
      %v1122 = vunpack.c.l.b16 %v1093
      %v1123 = vunpack.c.l.b16 %v1094
      %v1124 = vunpack.c.l.b16 %v1095
      %v1125 = vunpack.c.l.b16 %v1096
      %v1126 = vunpack.c.l.b16 %v1097
      %v1127 = vpack.c.b16 %v1120, %v1119
      %v1128 = vpack.c.b16 %v1122, %v1121
      %v1129 = vpack.c.b16 %v1124, %v1123
      %v1130 = vpack.c.b16 %v1126, %v1125
      %v1135 = vunpack.c.l.b16 %v1107
      %v1136 = vunpack.c.l.b16 %v1108
      %v1137 = vunpack.c.l.b16 %v1109
      %v1138 = vunpack.c.l.b16 %v1110
      %v1139 = vpack.c.b16 %v1136, %v1135
      %v1140 = vpack.c.b16 %v1138, %v1137
      %v1144 = vsel %vm586, %v1127, 0
      %v1147 = vsel %vm586, %v1128, 0
      %v1150 = vsel %vm586, %v1129, 0
      %v1153 = vsel %vm586, %v1130, 0
      %1155 = vmatpush.bf16.msra.mxu0 0
      %1156 = vmatpush.bf16.msra.mxu0 0
      %1157 = vmatpush.bf16.msra.mxu0 0
      %1158 = vmatpush.bf16.msra.mxu0 0
      %1159 = vmatpush.bf16.msra.mxu0 0
      %1160 = vmatpush.bf16.msra.mxu0 0
      %1161 = vmatpush.bf16.msra.mxu0 %v1140
      %1162 = vmatpush.bf16.msra.mxu0 %v1139
      %1163 = vmatmul.bf16.gmra.mxu0 %v1144
      %v1164 = vpop.f32.mrf.mxu0
      %v1165 = vadd.f32 0.0, %v1164
      %v1166 = vpop.f32.mrf.mxu0
      %v1167 = vadd.f32 0.0, %v1166
      %1168 = vmatmul.bf16.gmra.mxu0 %v1147
      %v1169 = vpop.f32.mrf.mxu0
      %v1170 = vadd.f32 0.0, %v1169
      %v1171 = vpop.f32.mrf.mxu0
      %v1172 = vadd.f32 0.0, %v1171
      %1173 = vmatmul.bf16.gmra.mxu0 %v1150
      %v1174 = vpop.f32.mrf.mxu0
      %v1175 = vadd.f32 0.0, %v1174
      %v1176 = vpop.f32.mrf.mxu0
      %v1177 = vadd.f32 0.0, %v1176
      %1178 = vmatmul.bf16.gmra.mxu0 %v1153
      %v1179 = vpop.f32.mrf.mxu0
      %v1180 = vadd.f32 0.0, %v1179
      %v1181 = vpop.f32.mrf.mxu0
      %v1182 = vadd.f32 0.0, %v1181
      %1183 = vdwg.mxu0
      %v1184 = vadd.f32 %v1098, %v1165
      %v1185 = vadd.f32 %v1099, %v1167
      %v1186 = vadd.f32 %v1100, %v1170
      %v1187 = vadd.f32 %v1101, %v1172
      %v1188 = vadd.f32 %v1102, %v1175
      %v1189 = vadd.f32 %v1103, %v1177
      %v1190 = vadd.f32 %v1104, %v1180
      %v1191 = vadd.f32 %v1105, %v1182
      %1192 = vst.msk [vmem:[#allocation3] sm:$0xff] %vm586, %v1184
      %1193 = vst.msk [vmem:[#allocation3 + $0x8] sm:$0xff] %vm586, %v1185
      %1194 = vst.msk [vmem:[#allocation3 + $0x10] sm:$0xff] %vm586, %v1186
      %1195 = vst.msk [vmem:[#allocation3 + $0x18] sm:$0xff] %vm586, %v1187
      %1196 = vst.msk [vmem:[#allocation3 + $0x20] sm:$0xff] %vm586, %v1188
      %1197 = vst.msk [vmem:[#allocation3 + $0x28] sm:$0xff] %vm586, %v1189
      %1198 = vst.msk [vmem:[#allocation3 + $0x30] sm:$0xff] %vm586, %v1190
      %1199 = vst.msk [vmem:[#allocation3 + $0x38] sm:$0xff] %vm586, %v1191
      %v1200 = vld [vmem:[%s527] sm:$0xf]
      %v1201 = vld [vmem:[%s527 + $0x4] sm:$0x1]
      %v1202 = vld [vmem:[%s527 + $0x8] sm:$0xf]
      %v1203 = vld [vmem:[%s527 + $0xc] sm:$0x1]
      %v1204 = vld [vmem:[%s527 + $0x10] sm:$0xf]
      %v1205 = vld [vmem:[%s527 + $0x14] sm:$0x1]
      %v1206 = vld [vmem:[%s527 + $0x18] sm:$0xf]
      %v1207 = vld [vmem:[%s527 + $0x1c] sm:$0x1]
      %v1208 = vld [vmem:[%s527 + $0x20] sm:$0xf]
      %v1209 = vld [vmem:[%s527 + $0x24] sm:$0x1]
      %v1210 = vld [vmem:[%s527 + $0x28] sm:$0xf]
      %v1211 = vld [vmem:[%s527 + $0x2c] sm:$0x1]
      %v1212 = vld [vmem:[%s527 + $0x30] sm:$0xf]
      %v1213 = vld [vmem:[%s527 + $0x34] sm:$0x1]
      %v1214 = vld [vmem:[%s527 + $0x38] sm:$0xf]
      %v1215 = vld [vmem:[%s527 + $0x3c] sm:$0x1]
      %v1216 = vld [vmem:[#allocation3] sm:$0xff]
      %v1217 = vld [vmem:[#allocation3 + $0x8] sm:$0xff]
      %v1218 = vld [vmem:[#allocation3 + $0x10] sm:$0xff]
      %v1219 = vld [vmem:[#allocation3 + $0x18] sm:$0xff]
      %v1220 = vld [vmem:[#allocation3 + $0x20] sm:$0xff]
      %v1221 = vld [vmem:[#allocation3 + $0x28] sm:$0xff]
      %v1222 = vld [vmem:[#allocation3 + $0x30] sm:$0xff]
      %v1223 = vld [vmem:[#allocation3 + $0x38] sm:$0xff]
      %v1225 = vshrl.u32 %v1200, 16
      %v1227 = vrot.slane %v1225, 4
      %v1228 = vshll.u32 %v1200, 16
      %v1230 = vrot.slane %v1228, 5
      %v1231 = vor.u32 %v1227, %v1230
      %v1232 = vrot.slane %v1231, 4
      %v1234 = vshll.u32 %v1201, 16
      %v1236 = vrot.slane %v1234, 5
      %v1237 = vsel %vm730, %v1232, %v1236
      %v1239 = vshrl.u32 %v1202, 16
      %v1241 = vrot.slane %v1239, 4
      %v1242 = vshll.u32 %v1202, 16
      %v1244 = vrot.slane %v1242, 5
      %v1245 = vor.u32 %v1241, %v1244
      %v1246 = vrot.slane %v1245, 4
      %v1248 = vshll.u32 %v1203, 16
      %v1250 = vrot.slane %v1248, 5
      %v1251 = vsel %vm730, %v1246, %v1250
      %v1253 = vshrl.u32 %v1204, 16
      %v1255 = vrot.slane %v1253, 4
      %v1256 = vshll.u32 %v1204, 16
      %v1258 = vrot.slane %v1256, 5
      %v1259 = vor.u32 %v1255, %v1258
      %v1260 = vrot.slane %v1259, 4
      %v1262 = vshll.u32 %v1205, 16
      %v1264 = vrot.slane %v1262, 5
      %v1265 = vsel %vm730, %v1260, %v1264
      %v1267 = vshrl.u32 %v1206, 16
      %v1269 = vrot.slane %v1267, 4
      %v1270 = vshll.u32 %v1206, 16
      %v1272 = vrot.slane %v1270, 5
      %v1273 = vor.u32 %v1269, %v1272
      %v1274 = vrot.slane %v1273, 4
      %v1276 = vshll.u32 %v1207, 16
      %v1278 = vrot.slane %v1276, 5
      %v1279 = vsel %vm730, %v1274, %v1278
      %v1281 = vshrl.u32 %v1208, 16
      %v1283 = vrot.slane %v1281, 4
      %v1284 = vshll.u32 %v1208, 16
      %v1286 = vrot.slane %v1284, 5
      %v1287 = vor.u32 %v1283, %v1286
      %v1288 = vrot.slane %v1287, 4
      %v1290 = vshll.u32 %v1209, 16
      %v1292 = vrot.slane %v1290, 5
      %v1293 = vsel %vm730, %v1288, %v1292
      %v1295 = vshrl.u32 %v1210, 16
      %v1297 = vrot.slane %v1295, 4
      %v1298 = vshll.u32 %v1210, 16
      %v1300 = vrot.slane %v1298, 5
      %v1301 = vor.u32 %v1297, %v1300
      %v1302 = vrot.slane %v1301, 4
      %v1304 = vshll.u32 %v1211, 16
      %v1306 = vrot.slane %v1304, 5
      %v1307 = vsel %vm730, %v1302, %v1306
      %v1309 = vshrl.u32 %v1212, 16
      %v1311 = vrot.slane %v1309, 4
      %v1312 = vshll.u32 %v1212, 16
      %v1314 = vrot.slane %v1312, 5
      %v1315 = vor.u32 %v1311, %v1314
      %v1316 = vrot.slane %v1315, 4
      %v1318 = vshll.u32 %v1213, 16
      %v1320 = vrot.slane %v1318, 5
      %v1321 = vsel %vm730, %v1316, %v1320
      %v1323 = vshrl.u32 %v1214, 16
      %v1325 = vrot.slane %v1323, 4
      %v1326 = vshll.u32 %v1214, 16
      %v1328 = vrot.slane %v1326, 5
      %v1329 = vor.u32 %v1325, %v1328
      %v1330 = vrot.slane %v1329, 4
      %v1332 = vshll.u32 %v1215, 16
      %v1334 = vrot.slane %v1332, 5
      %v1335 = vsel %vm730, %v1330, %v1334
      %s1336 = scalar_lea.vmem %s3, 64
      %v1337 = vld [vmem:[%s1336] sm:$0xf]
      %v1338 = vld [vmem:[%s1336 + $0x4] sm:$0xf]
      %v1339 = vld [vmem:[%s1336 + $0x8] sm:$0xf]
      %v1340 = vld [vmem:[%s1336 + $0xc] sm:$0xf]
      %v1341 = vunpack.c.l.b16 %v1237
      %v1342 = vunpack.c.l.b16 %v1251
      %v1343 = vunpack.c.l.b16 %v1265
      %v1344 = vunpack.c.l.b16 %v1279
      %v1345 = vunpack.c.l.b16 %v1293
      %v1346 = vunpack.c.l.b16 %v1307
      %v1347 = vunpack.c.l.b16 %v1321
      %v1348 = vunpack.c.l.b16 %v1335
      %v1349 = vpack.c.b16 %v1342, %v1341
      %v1350 = vpack.c.b16 %v1344, %v1343
      %v1351 = vpack.c.b16 %v1346, %v1345
      %v1352 = vpack.c.b16 %v1348, %v1347
      %v1357 = vunpack.c.l.b16 %v1337
      %v1358 = vunpack.c.l.b16 %v1338
      %v1359 = vunpack.c.l.b16 %v1339
      %v1360 = vunpack.c.l.b16 %v1340
      %v1361 = vpack.c.b16 %v1358, %v1357
      %v1362 = vpack.c.b16 %v1360, %v1359
      %v1366 = vsel %vm586, %v1349, 0
      %v1369 = vsel %vm586, %v1350, 0
      %v1372 = vsel %vm586, %v1351, 0
      %v1375 = vsel %vm586, %v1352, 0
      %1377 = vmatpush.bf16.msra.mxu0 0
      %1378 = vmatpush.bf16.msra.mxu0 0
      %1379 = vmatpush.bf16.msra.mxu0 0
      %1380 = vmatpush.bf16.msra.mxu0 0
      %1381 = vmatpush.bf16.msra.mxu0 0
      %1382 = vmatpush.bf16.msra.mxu0 0
      %1383 = vmatpush.bf16.msra.mxu0 %v1362
      %1384 = vmatpush.bf16.msra.mxu0 %v1361
      %1385 = vmatmul.bf16.gmra.mxu0 %v1366
      %v1386 = vpop.f32.mrf.mxu0
      %v1387 = vadd.f32 0.0, %v1386
      %v1388 = vpop.f32.mrf.mxu0
      %v1389 = vadd.f32 0.0, %v1388
      %1390 = vmatmul.bf16.gmra.mxu0 %v1369
      %v1391 = vpop.f32.mrf.mxu0
      %v1392 = vadd.f32 0.0, %v1391
      %v1393 = vpop.f32.mrf.mxu0
      %v1394 = vadd.f32 0.0, %v1393
      %1395 = vmatmul.bf16.gmra.mxu0 %v1372
      %v1396 = vpop.f32.mrf.mxu0
      %v1397 = vadd.f32 0.0, %v1396
      %v1398 = vpop.f32.mrf.mxu0
      %v1399 = vadd.f32 0.0, %v1398
      %1400 = vmatmul.bf16.gmra.mxu0 %v1375
      %v1401 = vpop.f32.mrf.mxu0
      %v1402 = vadd.f32 0.0, %v1401
      %v1403 = vpop.f32.mrf.mxu0
      %v1404 = vadd.f32 0.0, %v1403
      %1405 = vdwg.mxu0
      %v1406 = vadd.f32 %v1216, %v1387
      %v1407 = vadd.f32 %v1217, %v1389
      %v1408 = vadd.f32 %v1218, %v1392
      %v1409 = vadd.f32 %v1219, %v1394
      %v1410 = vadd.f32 %v1220, %v1397
      %v1411 = vadd.f32 %v1221, %v1399
      %v1412 = vadd.f32 %v1222, %v1402
      %v1413 = vadd.f32 %v1223, %v1404
      %1414 = vst.msk [vmem:[#allocation3] sm:$0xff] %vm586, %v1406
      %1415 = vst.msk [vmem:[#allocation3 + $0x8] sm:$0xff] %vm586, %v1407
      %1416 = vst.msk [vmem:[#allocation3 + $0x10] sm:$0xff] %vm586, %v1408
      %1417 = vst.msk [vmem:[#allocation3 + $0x18] sm:$0xff] %vm586, %v1409
      %1418 = vst.msk [vmem:[#allocation3 + $0x20] sm:$0xff] %vm586, %v1410
      %1419 = vst.msk [vmem:[#allocation3 + $0x28] sm:$0xff] %vm586, %v1411
      %1420 = vst.msk [vmem:[#allocation3 + $0x30] sm:$0xff] %vm586, %v1412
      %1421 = vst.msk [vmem:[#allocation3 + $0x38] sm:$0xff] %vm586, %v1413
      %v1422 = vld [vmem:[%s527] sm:$0xe]
      %v1423 = vld [vmem:[%s527 + $0x4] sm:$0x1]
      %v1424 = vld [vmem:[%s527 + $0x8] sm:$0xe]
      %v1425 = vld [vmem:[%s527 + $0xc] sm:$0x1]
      %v1426 = vld [vmem:[%s527 + $0x10] sm:$0xe]
      %v1427 = vld [vmem:[%s527 + $0x14] sm:$0x1]
      %v1428 = vld [vmem:[%s527 + $0x18] sm:$0xe]
      %v1429 = vld [vmem:[%s527 + $0x1c] sm:$0x1]
      %v1430 = vld [vmem:[%s527 + $0x20] sm:$0xe]
      %v1431 = vld [vmem:[%s527 + $0x24] sm:$0x1]
      %v1432 = vld [vmem:[%s527 + $0x28] sm:$0xe]
      %v1433 = vld [vmem:[%s527 + $0x2c] sm:$0x1]
      %v1434 = vld [vmem:[%s527 + $0x30] sm:$0xe]
      %v1435 = vld [vmem:[%s527 + $0x34] sm:$0x1]
      %v1436 = vld [vmem:[%s527 + $0x38] sm:$0xe]
      %v1437 = vld [vmem:[%s527 + $0x3c] sm:$0x1]
      %v1438 = vld [vmem:[#allocation3] sm:$0xff]
      %v1439 = vld [vmem:[#allocation3 + $0x8] sm:$0xff]
      %v1440 = vld [vmem:[#allocation3 + $0x10] sm:$0xff]
      %v1441 = vld [vmem:[#allocation3 + $0x18] sm:$0xff]
      %v1442 = vld [vmem:[#allocation3 + $0x20] sm:$0xff]
      %v1443 = vld [vmem:[#allocation3 + $0x28] sm:$0xff]
      %v1444 = vld [vmem:[#allocation3 + $0x30] sm:$0xff]
      %v1445 = vld [vmem:[#allocation3 + $0x38] sm:$0xff]
      %v1462 = vrot.slane %v1422, 5
      %v1463 = vrot.slane %v1462, 4
      %v1464 = vrot.slane %v1423, 5
      %v1465 = vsel %vm971, %v1463, %v1464
      %v1466 = vrot.slane %v1424, 5
      %v1467 = vrot.slane %v1466, 4
      %v1468 = vrot.slane %v1425, 5
      %v1469 = vsel %vm971, %v1467, %v1468
      %v1470 = vrot.slane %v1426, 5
      %v1471 = vrot.slane %v1470, 4
      %v1472 = vrot.slane %v1427, 5
      %v1473 = vsel %vm971, %v1471, %v1472
      %v1474 = vrot.slane %v1428, 5
      %v1475 = vrot.slane %v1474, 4
      %v1476 = vrot.slane %v1429, 5
      %v1477 = vsel %vm971, %v1475, %v1476
      %v1478 = vrot.slane %v1430, 5
      %v1479 = vrot.slane %v1478, 4
      %v1480 = vrot.slane %v1431, 5
      %v1481 = vsel %vm971, %v1479, %v1480
      %v1482 = vrot.slane %v1432, 5
      %v1483 = vrot.slane %v1482, 4
      %v1484 = vrot.slane %v1433, 5
      %v1485 = vsel %vm971, %v1483, %v1484
      %v1486 = vrot.slane %v1434, 5
      %v1487 = vrot.slane %v1486, 4
      %v1488 = vrot.slane %v1435, 5
      %v1489 = vsel %vm971, %v1487, %v1488
      %v1490 = vrot.slane %v1436, 5
      %v1491 = vrot.slane %v1490, 4
      %v1492 = vrot.slane %v1437, 5
      %v1493 = vsel %vm971, %v1491, %v1492
      %s1494 = scalar_lea.vmem %s3, 80
      %v1495 = vld [vmem:[%s1494] sm:$0xf]
      %v1496 = vld [vmem:[%s1494 + $0x4] sm:$0xf]
      %v1497 = vld [vmem:[%s1494 + $0x8] sm:$0xf]
      %v1498 = vld [vmem:[%s1494 + $0xc] sm:$0xf]
      %v1499 = vunpack.c.l.b16 %v1465
      %v1500 = vunpack.c.l.b16 %v1469
      %v1501 = vunpack.c.l.b16 %v1473
      %v1502 = vunpack.c.l.b16 %v1477
      %v1503 = vunpack.c.l.b16 %v1481
      %v1504 = vunpack.c.l.b16 %v1485
      %v1505 = vunpack.c.l.b16 %v1489
      %v1506 = vunpack.c.l.b16 %v1493
      %v1507 = vpack.c.b16 %v1500, %v1499
      %v1508 = vpack.c.b16 %v1502, %v1501
      %v1509 = vpack.c.b16 %v1504, %v1503
      %v1510 = vpack.c.b16 %v1506, %v1505
      %v1515 = vunpack.c.l.b16 %v1495
      %v1516 = vunpack.c.l.b16 %v1496
      %v1517 = vunpack.c.l.b16 %v1497
      %v1518 = vunpack.c.l.b16 %v1498
      %v1519 = vpack.c.b16 %v1516, %v1515
      %v1520 = vpack.c.b16 %v1518, %v1517
      %v1524 = vsel %vm586, %v1507, 0
      %v1527 = vsel %vm586, %v1508, 0
      %v1530 = vsel %vm586, %v1509, 0
      %v1533 = vsel %vm586, %v1510, 0
      %1535 = vmatpush.bf16.msra.mxu0 0
      %1536 = vmatpush.bf16.msra.mxu0 0
      %1537 = vmatpush.bf16.msra.mxu0 0
      %1538 = vmatpush.bf16.msra.mxu0 0
      %1539 = vmatpush.bf16.msra.mxu0 0
      %1540 = vmatpush.bf16.msra.mxu0 0
      %1541 = vmatpush.bf16.msra.mxu0 %v1520
      %1542 = vmatpush.bf16.msra.mxu0 %v1519
      %1543 = vmatmul.bf16.gmra.mxu0 %v1524
      %v1544 = vpop.f32.mrf.mxu0
      %v1545 = vadd.f32 0.0, %v1544
      %v1546 = vpop.f32.mrf.mxu0
      %v1547 = vadd.f32 0.0, %v1546
      %1548 = vmatmul.bf16.gmra.mxu0 %v1527
      %v1549 = vpop.f32.mrf.mxu0
      %v1550 = vadd.f32 0.0, %v1549
      %v1551 = vpop.f32.mrf.mxu0
      %v1552 = vadd.f32 0.0, %v1551
      %1553 = vmatmul.bf16.gmra.mxu0 %v1530
      %v1554 = vpop.f32.mrf.mxu0
      %v1555 = vadd.f32 0.0, %v1554
      %v1556 = vpop.f32.mrf.mxu0
      %v1557 = vadd.f32 0.0, %v1556
      %1558 = vmatmul.bf16.gmra.mxu0 %v1533
      %v1559 = vpop.f32.mrf.mxu0
      %v1560 = vadd.f32 0.0, %v1559
      %v1561 = vpop.f32.mrf.mxu0
      %v1562 = vadd.f32 0.0, %v1561
      %1563 = vdwg.mxu0
      %v1564 = vadd.f32 %v1438, %v1545
      %v1565 = vadd.f32 %v1439, %v1547
      %v1566 = vadd.f32 %v1440, %v1550
      %v1567 = vadd.f32 %v1441, %v1552
      %v1568 = vadd.f32 %v1442, %v1555
      %v1569 = vadd.f32 %v1443, %v1557
      %v1570 = vadd.f32 %v1444, %v1560
      %v1571 = vadd.f32 %v1445, %v1562
      %1572 = vst.msk [vmem:[#allocation3] sm:$0xff] %vm586, %v1564
      %1573 = vst.msk [vmem:[#allocation3 + $0x8] sm:$0xff] %vm586, %v1565
      %1574 = vst.msk [vmem:[#allocation3 + $0x10] sm:$0xff] %vm586, %v1566
      %1575 = vst.msk [vmem:[#allocation3 + $0x18] sm:$0xff] %vm586, %v1567
      %1576 = vst.msk [vmem:[#allocation3 + $0x20] sm:$0xff] %vm586, %v1568
      %1577 = vst.msk [vmem:[#allocation3 + $0x28] sm:$0xff] %vm586, %v1569
      %1578 = vst.msk [vmem:[#allocation3 + $0x30] sm:$0xff] %vm586, %v1570
      %1579 = vst.msk [vmem:[#allocation3 + $0x38] sm:$0xff] %vm586, %v1571
      %s1580 = scalar_lea.vmem [#allocation2], 16
      %v1581 = vld [vmem:[%s1580] sm:$0xf]
      %v1582 = vld [vmem:[%s1580 + $0x8] sm:$0xf]
      %v1583 = vld [vmem:[%s1580 + $0x10] sm:$0xf]
      %v1584 = vld [vmem:[%s1580 + $0x18] sm:$0xf]
      %v1585 = vld [vmem:[%s1580 + $0x20] sm:$0xf]
      %v1586 = vld [vmem:[%s1580 + $0x28] sm:$0xf]
      %v1587 = vld [vmem:[%s1580 + $0x30] sm:$0xf]
      %v1588 = vld [vmem:[%s1580 + $0x38] sm:$0xf]
      %v1589 = vld [vmem:[#allocation3] sm:$0xff]
      %v1590 = vld [vmem:[#allocation3 + $0x8] sm:$0xff]
      %v1591 = vld [vmem:[#allocation3 + $0x10] sm:$0xff]
      %v1592 = vld [vmem:[#allocation3 + $0x18] sm:$0xff]
      %v1593 = vld [vmem:[#allocation3 + $0x20] sm:$0xff]
      %v1594 = vld [vmem:[#allocation3 + $0x28] sm:$0xff]
      %v1595 = vld [vmem:[#allocation3 + $0x30] sm:$0xff]
      %v1596 = vld [vmem:[#allocation3 + $0x38] sm:$0xff]
      %s1597 = scalar_lea.vmem %s3, 96
      %v1598 = vld [vmem:[%s1597] sm:$0xf]
      %v1599 = vld [vmem:[%s1597 + $0x4] sm:$0xf]
      %v1600 = vld [vmem:[%s1597 + $0x8] sm:$0xf]
      %v1601 = vld [vmem:[%s1597 + $0xc] sm:$0xf]
      %v1610 = vunpack.c.l.b16 %v1581
      %v1611 = vunpack.c.l.b16 %v1582
      %v1612 = vunpack.c.l.b16 %v1583
      %v1613 = vunpack.c.l.b16 %v1584
      %v1614 = vunpack.c.l.b16 %v1585
      %v1615 = vunpack.c.l.b16 %v1586
      %v1616 = vunpack.c.l.b16 %v1587
      %v1617 = vunpack.c.l.b16 %v1588
      %v1618 = vpack.c.b16 %v1611, %v1610
      %v1619 = vpack.c.b16 %v1613, %v1612
      %v1620 = vpack.c.b16 %v1615, %v1614
      %v1621 = vpack.c.b16 %v1617, %v1616
      %v1626 = vunpack.c.l.b16 %v1598
      %v1627 = vunpack.c.l.b16 %v1599
      %v1628 = vunpack.c.l.b16 %v1600
      %v1629 = vunpack.c.l.b16 %v1601
      %v1630 = vpack.c.b16 %v1627, %v1626
      %v1631 = vpack.c.b16 %v1629, %v1628
      %v1635 = vsel %vm586, %v1618, 0
      %v1638 = vsel %vm586, %v1619, 0
      %v1641 = vsel %vm586, %v1620, 0
      %v1644 = vsel %vm586, %v1621, 0
      %1646 = vmatpush.bf16.msra.mxu0 0
      %1647 = vmatpush.bf16.msra.mxu0 0
      %1648 = vmatpush.bf16.msra.mxu0 0
      %1649 = vmatpush.bf16.msra.mxu0 0
      %1650 = vmatpush.bf16.msra.mxu0 0
      %1651 = vmatpush.bf16.msra.mxu0 0
      %1652 = vmatpush.bf16.msra.mxu0 %v1631
      %1653 = vmatpush.bf16.msra.mxu0 %v1630
      %1654 = vmatmul.bf16.gmra.mxu0 %v1635
      %v1655 = vpop.f32.mrf.mxu0
      %v1656 = vadd.f32 0.0, %v1655
      %v1657 = vpop.f32.mrf.mxu0
      %v1658 = vadd.f32 0.0, %v1657
      %1659 = vmatmul.bf16.gmra.mxu0 %v1638
      %v1660 = vpop.f32.mrf.mxu0
      %v1661 = vadd.f32 0.0, %v1660
      %v1662 = vpop.f32.mrf.mxu0
      %v1663 = vadd.f32 0.0, %v1662
      %1664 = vmatmul.bf16.gmra.mxu0 %v1641
      %v1665 = vpop.f32.mrf.mxu0
      %v1666 = vadd.f32 0.0, %v1665
      %v1667 = vpop.f32.mrf.mxu0
      %v1668 = vadd.f32 0.0, %v1667
      %1669 = vmatmul.bf16.gmra.mxu0 %v1644
      %v1670 = vpop.f32.mrf.mxu0
      %v1671 = vadd.f32 0.0, %v1670
      %v1672 = vpop.f32.mrf.mxu0
      %v1673 = vadd.f32 0.0, %v1672
      %1674 = vdwg.mxu0
      %v1675 = vadd.f32 %v1589, %v1656
      %v1676 = vadd.f32 %v1590, %v1658
      %v1677 = vadd.f32 %v1591, %v1661
      %v1678 = vadd.f32 %v1592, %v1663
      %v1679 = vadd.f32 %v1593, %v1666
      %v1680 = vadd.f32 %v1594, %v1668
      %v1681 = vadd.f32 %v1595, %v1671
      %v1682 = vadd.f32 %v1596, %v1673
      %1683 = vst.msk [vmem:[#allocation3] sm:$0xff] %vm586, %v1675
      %1684 = vst.msk [vmem:[#allocation3 + $0x8] sm:$0xff] %vm586, %v1676
      %1685 = vst.msk [vmem:[#allocation3 + $0x10] sm:$0xff] %vm586, %v1677
      %1686 = vst.msk [vmem:[#allocation3 + $0x18] sm:$0xff] %vm586, %v1678
      %1687 = vst.msk [vmem:[#allocation3 + $0x20] sm:$0xff] %vm586, %v1679
      %1688 = vst.msk [vmem:[#allocation3 + $0x28] sm:$0xff] %vm586, %v1680
      %1689 = vst.msk [vmem:[#allocation3 + $0x30] sm:$0xff] %vm586, %v1681
      %1690 = vst.msk [vmem:[#allocation3 + $0x38] sm:$0xff] %vm586, %v1682
      %v1691 = vld [vmem:[%s1580] sm:$0xf]
      %v1692 = vld [vmem:[%s1580 + $0x4] sm:$0x1]
      %v1693 = vld [vmem:[%s1580 + $0x8] sm:$0xf]
      %v1694 = vld [vmem:[%s1580 + $0xc] sm:$0x1]
      %v1695 = vld [vmem:[%s1580 + $0x10] sm:$0xf]
      %v1696 = vld [vmem:[%s1580 + $0x14] sm:$0x1]
      %v1697 = vld [vmem:[%s1580 + $0x18] sm:$0xf]
      %v1698 = vld [vmem:[%s1580 + $0x1c] sm:$0x1]
      %v1699 = vld [vmem:[%s1580 + $0x20] sm:$0xf]
      %v1700 = vld [vmem:[%s1580 + $0x24] sm:$0x1]
      %v1701 = vld [vmem:[%s1580 + $0x28] sm:$0xf]
      %v1702 = vld [vmem:[%s1580 + $0x2c] sm:$0x1]
      %v1703 = vld [vmem:[%s1580 + $0x30] sm:$0xf]
      %v1704 = vld [vmem:[%s1580 + $0x34] sm:$0x1]
      %v1705 = vld [vmem:[%s1580 + $0x38] sm:$0xf]
      %v1706 = vld [vmem:[%s1580 + $0x3c] sm:$0x1]
      %v1707 = vld [vmem:[#allocation3] sm:$0xff]
      %v1708 = vld [vmem:[#allocation3 + $0x8] sm:$0xff]
      %v1709 = vld [vmem:[#allocation3 + $0x10] sm:$0xff]
      %v1710 = vld [vmem:[#allocation3 + $0x18] sm:$0xff]
      %v1711 = vld [vmem:[#allocation3 + $0x20] sm:$0xff]
      %v1712 = vld [vmem:[#allocation3 + $0x28] sm:$0xff]
      %v1713 = vld [vmem:[#allocation3 + $0x30] sm:$0xff]
      %v1714 = vld [vmem:[#allocation3 + $0x38] sm:$0xff]
      %v1716 = vshrl.u32 %v1691, 16
      %v1718 = vrot.slane %v1716, 4
      %v1719 = vshll.u32 %v1691, 16
      %v1721 = vrot.slane %v1719, 5
      %v1722 = vor.u32 %v1718, %v1721
      %v1723 = vrot.slane %v1722, 4
      %v1725 = vshll.u32 %v1692, 16
      %v1727 = vrot.slane %v1725, 5
      %v1728 = vsel %vm730, %v1723, %v1727
      %v1730 = vshrl.u32 %v1693, 16
      %v1732 = vrot.slane %v1730, 4
      %v1733 = vshll.u32 %v1693, 16
      %v1735 = vrot.slane %v1733, 5
      %v1736 = vor.u32 %v1732, %v1735
      %v1737 = vrot.slane %v1736, 4
      %v1739 = vshll.u32 %v1694, 16
      %v1741 = vrot.slane %v1739, 5
      %v1742 = vsel %vm730, %v1737, %v1741
      %v1744 = vshrl.u32 %v1695, 16
      %v1746 = vrot.slane %v1744, 4
      %v1747 = vshll.u32 %v1695, 16
      %v1749 = vrot.slane %v1747, 5
      %v1750 = vor.u32 %v1746, %v1749
      %v1751 = vrot.slane %v1750, 4
      %v1753 = vshll.u32 %v1696, 16
      %v1755 = vrot.slane %v1753, 5
      %v1756 = vsel %vm730, %v1751, %v1755
      %v1758 = vshrl.u32 %v1697, 16
      %v1760 = vrot.slane %v1758, 4
      %v1761 = vshll.u32 %v1697, 16
      %v1763 = vrot.slane %v1761, 5
      %v1764 = vor.u32 %v1760, %v1763
      %v1765 = vrot.slane %v1764, 4
      %v1767 = vshll.u32 %v1698, 16
      %v1769 = vrot.slane %v1767, 5
      %v1770 = vsel %vm730, %v1765, %v1769
      %v1772 = vshrl.u32 %v1699, 16
      %v1774 = vrot.slane %v1772, 4
      %v1775 = vshll.u32 %v1699, 16
      %v1777 = vrot.slane %v1775, 5
      %v1778 = vor.u32 %v1774, %v1777
      %v1779 = vrot.slane %v1778, 4
      %v1781 = vshll.u32 %v1700, 16
      %v1783 = vrot.slane %v1781, 5
      %v1784 = vsel %vm730, %v1779, %v1783
      %v1786 = vshrl.u32 %v1701, 16
      %v1788 = vrot.slane %v1786, 4
      %v1789 = vshll.u32 %v1701, 16
      %v1791 = vrot.slane %v1789, 5
      %v1792 = vor.u32 %v1788, %v1791
      %v1793 = vrot.slane %v1792, 4
      %v1795 = vshll.u32 %v1702, 16
      %v1797 = vrot.slane %v1795, 5
      %v1798 = vsel %vm730, %v1793, %v1797
      %v1800 = vshrl.u32 %v1703, 16
      %v1802 = vrot.slane %v1800, 4
      %v1803 = vshll.u32 %v1703, 16
      %v1805 = vrot.slane %v1803, 5
      %v1806 = vor.u32 %v1802, %v1805
      %v1807 = vrot.slane %v1806, 4
      %v1809 = vshll.u32 %v1704, 16
      %v1811 = vrot.slane %v1809, 5
      %v1812 = vsel %vm730, %v1807, %v1811
      %v1814 = vshrl.u32 %v1705, 16
      %v1816 = vrot.slane %v1814, 4
      %v1817 = vshll.u32 %v1705, 16
      %v1819 = vrot.slane %v1817, 5
      %v1820 = vor.u32 %v1816, %v1819
      %v1821 = vrot.slane %v1820, 4
      %v1823 = vshll.u32 %v1706, 16
      %v1825 = vrot.slane %v1823, 5
      %v1826 = vsel %vm730, %v1821, %v1825
      %s1827 = scalar_lea.vmem %s3, 112
      %v1828 = vld [vmem:[%s1827] sm:$0xf]
      %v1829 = vld [vmem:[%s1827 + $0x4] sm:$0xf]
      %v1830 = vld [vmem:[%s1827 + $0x8] sm:$0xf]
      %v1831 = vld [vmem:[%s1827 + $0xc] sm:$0xf]
      %v1832 = vunpack.c.l.b16 %v1728
      %v1833 = vunpack.c.l.b16 %v1742
      %v1834 = vunpack.c.l.b16 %v1756
      %v1835 = vunpack.c.l.b16 %v1770
      %v1836 = vunpack.c.l.b16 %v1784
      %v1837 = vunpack.c.l.b16 %v1798
      %v1838 = vunpack.c.l.b16 %v1812
      %v1839 = vunpack.c.l.b16 %v1826
      %v1840 = vpack.c.b16 %v1833, %v1832
      %v1841 = vpack.c.b16 %v1835, %v1834
      %v1842 = vpack.c.b16 %v1837, %v1836
      %v1843 = vpack.c.b16 %v1839, %v1838
      %v1848 = vunpack.c.l.b16 %v1828
      %v1849 = vunpack.c.l.b16 %v1829
      %v1850 = vunpack.c.l.b16 %v1830
      %v1851 = vunpack.c.l.b16 %v1831
      %v1852 = vpack.c.b16 %v1849, %v1848
      %v1853 = vpack.c.b16 %v1851, %v1850
      %v1857 = vsel %vm586, %v1840, 0
      %v1860 = vsel %vm586, %v1841, 0
      %v1863 = vsel %vm586, %v1842, 0
      %v1866 = vsel %vm586, %v1843, 0
      %1868 = vmatpush.bf16.msra.mxu0 0
      %1869 = vmatpush.bf16.msra.mxu0 0
      %1870 = vmatpush.bf16.msra.mxu0 0
      %1871 = vmatpush.bf16.msra.mxu0 0
      %1872 = vmatpush.bf16.msra.mxu0 0
      %1873 = vmatpush.bf16.msra.mxu0 0
      %1874 = vmatpush.bf16.msra.mxu0 %v1853
      %1875 = vmatpush.bf16.msra.mxu0 %v1852
      %1876 = vmatmul.bf16.gmra.mxu0 %v1857
      %v1877 = vpop.f32.mrf.mxu0
      %v1878 = vadd.f32 0.0, %v1877
      %v1879 = vpop.f32.mrf.mxu0
      %v1880 = vadd.f32 0.0, %v1879
      %1881 = vmatmul.bf16.gmra.mxu0 %v1860
      %v1882 = vpop.f32.mrf.mxu0
      %v1883 = vadd.f32 0.0, %v1882
      %v1884 = vpop.f32.mrf.mxu0
      %v1885 = vadd.f32 0.0, %v1884
      %1886 = vmatmul.bf16.gmra.mxu0 %v1863
      %v1887 = vpop.f32.mrf.mxu0
      %v1888 = vadd.f32 0.0, %v1887
      %v1889 = vpop.f32.mrf.mxu0
      %v1890 = vadd.f32 0.0, %v1889
      %1891 = vmatmul.bf16.gmra.mxu0 %v1866
      %v1892 = vpop.f32.mrf.mxu0
      %v1893 = vadd.f32 0.0, %v1892
      %v1894 = vpop.f32.mrf.mxu0
      %v1895 = vadd.f32 0.0, %v1894
      %1896 = vdwg.mxu0
      %v1897 = vadd.f32 %v1707, %v1878
      %v1898 = vadd.f32 %v1708, %v1880
      %v1899 = vadd.f32 %v1709, %v1883
      %v1900 = vadd.f32 %v1710, %v1885
      %v1901 = vadd.f32 %v1711, %v1888
      %v1902 = vadd.f32 %v1712, %v1890
      %v1903 = vadd.f32 %v1713, %v1893
      %v1904 = vadd.f32 %v1714, %v1895
      %1905 = vst.msk [vmem:[#allocation3] sm:$0xff] %vm586, %v1897
      %1906 = vst.msk [vmem:[#allocation3 + $0x8] sm:$0xff] %vm586, %v1898
      %1907 = vst.msk [vmem:[#allocation3 + $0x10] sm:$0xff] %vm586, %v1899
      %1908 = vst.msk [vmem:[#allocation3 + $0x18] sm:$0xff] %vm586, %v1900
      %1909 = vst.msk [vmem:[#allocation3 + $0x20] sm:$0xff] %vm586, %v1901
      %1910 = vst.msk [vmem:[#allocation3 + $0x28] sm:$0xff] %vm586, %v1902
      %1911 = vst.msk [vmem:[#allocation3 + $0x30] sm:$0xff] %vm586, %v1903
      %1912 = vst.msk [vmem:[#allocation3 + $0x38] sm:$0xff] %vm586, %v1904
      %v1913 = vld [vmem:[%s1580] sm:$0xe]
      %v1914 = vld [vmem:[%s1580 + $0x4] sm:$0x1]
      %v1915 = vld [vmem:[%s1580 + $0x8] sm:$0xe]
      %v1916 = vld [vmem:[%s1580 + $0xc] sm:$0x1]
      %v1917 = vld [vmem:[%s1580 + $0x10] sm:$0xe]
      %v1918 = vld [vmem:[%s1580 + $0x14] sm:$0x1]
      %v1919 = vld [vmem:[%s1580 + $0x18] sm:$0xe]
      %v1920 = vld [vmem:[%s1580 + $0x1c] sm:$0x1]
      %v1921 = vld [vmem:[%s1580 + $0x20] sm:$0xe]
      %v1922 = vld [vmem:[%s1580 + $0x24] sm:$0x1]
      %v1923 = vld [vmem:[%s1580 + $0x28] sm:$0xe]
      %v1924 = vld [vmem:[%s1580 + $0x2c] sm:$0x1]
      %v1925 = vld [vmem:[%s1580 + $0x30] sm:$0xe]
      %v1926 = vld [vmem:[%s1580 + $0x34] sm:$0x1]
      %v1927 = vld [vmem:[%s1580 + $0x38] sm:$0xe]
      %v1928 = vld [vmem:[%s1580 + $0x3c] sm:$0x1]
      %v1929 = vld [vmem:[#allocation3] sm:$0xff]
      %v1930 = vld [vmem:[#allocation3 + $0x8] sm:$0xff]
      %v1931 = vld [vmem:[#allocation3 + $0x10] sm:$0xff]
      %v1932 = vld [vmem:[#allocation3 + $0x18] sm:$0xff]
      %v1933 = vld [vmem:[#allocation3 + $0x20] sm:$0xff]
      %v1934 = vld [vmem:[#allocation3 + $0x28] sm:$0xff]
      %v1935 = vld [vmem:[#allocation3 + $0x30] sm:$0xff]
      %v1936 = vld [vmem:[#allocation3 + $0x38] sm:$0xff]
      %v1953 = vrot.slane %v1913, 5
      %v1954 = vrot.slane %v1953, 4
      %v1955 = vrot.slane %v1914, 5
      %v1956 = vsel %vm971, %v1954, %v1955
      %v1957 = vrot.slane %v1915, 5
      %v1958 = vrot.slane %v1957, 4
      %v1959 = vrot.slane %v1916, 5
      %v1960 = vsel %vm971, %v1958, %v1959
      %v1961 = vrot.slane %v1917, 5
      %v1962 = vrot.slane %v1961, 4
      %v1963 = vrot.slane %v1918, 5
      %v1964 = vsel %vm971, %v1962, %v1963
      %v1965 = vrot.slane %v1919, 5
      %v1966 = vrot.slane %v1965, 4
      %v1967 = vrot.slane %v1920, 5
      %v1968 = vsel %vm971, %v1966, %v1967
      %v1969 = vrot.slane %v1921, 5
      %v1970 = vrot.slane %v1969, 4
      %v1971 = vrot.slane %v1922, 5
      %v1972 = vsel %vm971, %v1970, %v1971
      %v1973 = vrot.slane %v1923, 5
      %v1974 = vrot.slane %v1973, 4
      %v1975 = vrot.slane %v1924, 5
      %v1976 = vsel %vm971, %v1974, %v1975
      %v1977 = vrot.slane %v1925, 5
      %v1978 = vrot.slane %v1977, 4
      %v1979 = vrot.slane %v1926, 5
      %v1980 = vsel %vm971, %v1978, %v1979
      %v1981 = vrot.slane %v1927, 5
      %v1982 = vrot.slane %v1981, 4
      %v1983 = vrot.slane %v1928, 5
      %v1984 = vsel %vm971, %v1982, %v1983
      %s1985 = scalar_lea.vmem %s3, 128
      %v1986 = vld [vmem:[%s1985] sm:$0xf]
      %v1987 = vld [vmem:[%s1985 + $0x4] sm:$0xf]
      %v1988 = vld [vmem:[%s1985 + $0x8] sm:$0xf]
      %v1989 = vld [vmem:[%s1985 + $0xc] sm:$0xf]
      %v1990 = vunpack.c.l.b16 %v1956
      %v1991 = vunpack.c.l.b16 %v1960
      %v1992 = vunpack.c.l.b16 %v1964
      %v1993 = vunpack.c.l.b16 %v1968
      %v1994 = vunpack.c.l.b16 %v1972
      %v1995 = vunpack.c.l.b16 %v1976
      %v1996 = vunpack.c.l.b16 %v1980
      %v1997 = vunpack.c.l.b16 %v1984
      %v1998 = vpack.c.b16 %v1991, %v1990
      %v1999 = vpack.c.b16 %v1993, %v1992
      %v2000 = vpack.c.b16 %v1995, %v1994
      %v2001 = vpack.c.b16 %v1997, %v1996
      %v2006 = vunpack.c.l.b16 %v1986
      %v2007 = vunpack.c.l.b16 %v1987
      %v2008 = vunpack.c.l.b16 %v1988
      %v2009 = vunpack.c.l.b16 %v1989
      %v2010 = vpack.c.b16 %v2007, %v2006
      %v2011 = vpack.c.b16 %v2009, %v2008
      %v2015 = vsel %vm586, %v1998, 0
      %v2018 = vsel %vm586, %v1999, 0
      %v2021 = vsel %vm586, %v2000, 0
      %v2024 = vsel %vm586, %v2001, 0
      %2026 = vmatpush.bf16.msra.mxu0 0
      %2027 = vmatpush.bf16.msra.mxu0 0
      %2028 = vmatpush.bf16.msra.mxu0 0
      %2029 = vmatpush.bf16.msra.mxu0 0
      %2030 = vmatpush.bf16.msra.mxu0 0
      %2031 = vmatpush.bf16.msra.mxu0 0
      %2032 = vmatpush.bf16.msra.mxu0 %v2011
      %2033 = vmatpush.bf16.msra.mxu0 %v2010
      %2034 = vmatmul.bf16.gmra.mxu0 %v2015
      %v2035 = vpop.f32.mrf.mxu0
      %v2036 = vadd.f32 0.0, %v2035
      %v2037 = vpop.f32.mrf.mxu0
      %v2038 = vadd.f32 0.0, %v2037
      %2039 = vmatmul.bf16.gmra.mxu0 %v2018
      %v2040 = vpop.f32.mrf.mxu0
      %v2041 = vadd.f32 0.0, %v2040
      %v2042 = vpop.f32.mrf.mxu0
      %v2043 = vadd.f32 0.0, %v2042
      %2044 = vmatmul.bf16.gmra.mxu0 %v2021
      %v2045 = vpop.f32.mrf.mxu0
      %v2046 = vadd.f32 0.0, %v2045
      %v2047 = vpop.f32.mrf.mxu0
      %v2048 = vadd.f32 0.0, %v2047
      %2049 = vmatmul.bf16.gmra.mxu0 %v2024
      %v2050 = vpop.f32.mrf.mxu0
      %v2051 = vadd.f32 0.0, %v2050
      %v2052 = vpop.f32.mrf.mxu0
      %v2053 = vadd.f32 0.0, %v2052
      %2054 = vdwg.mxu0
      %v2055 = vadd.f32 %v1929, %v2036
      %v2056 = vadd.f32 %v1930, %v2038
      %v2057 = vadd.f32 %v1931, %v2041
      %v2058 = vadd.f32 %v1932, %v2043
      %v2059 = vadd.f32 %v1933, %v2046
      %v2060 = vadd.f32 %v1934, %v2048
      %v2061 = vadd.f32 %v1935, %v2051
      %v2062 = vadd.f32 %v1936, %v2053
      %2063 = vst.msk [vmem:[#allocation3] sm:$0xff] %vm586, %v2055
      %2064 = vst.msk [vmem:[#allocation3 + $0x8] sm:$0xff] %vm586, %v2056
      %2065 = vst.msk [vmem:[#allocation3 + $0x10] sm:$0xff] %vm586, %v2057
      %2066 = vst.msk [vmem:[#allocation3 + $0x18] sm:$0xff] %vm586, %v2058
      %2067 = vst.msk [vmem:[#allocation3 + $0x20] sm:$0xff] %vm586, %v2059
      %2068 = vst.msk [vmem:[#allocation3 + $0x28] sm:$0xff] %vm586, %v2060
      %2069 = vst.msk [vmem:[#allocation3 + $0x30] sm:$0xff] %vm586, %v2061
      %2070 = vst.msk [vmem:[#allocation3 + $0x38] sm:$0xff] %vm586, %v2062
      %v2071 = vld [vmem:[#allocation3] sm:$0xff]
      %v2072 = vld [vmem:[#allocation3 + $0x8] sm:$0xff]
      %v2073 = vld [vmem:[#allocation3 + $0x10] sm:$0xff]
      %v2074 = vld [vmem:[#allocation3 + $0x18] sm:$0xff]
      %v2075 = vld [vmem:[#allocation3 + $0x20] sm:$0xff]
      %v2076 = vld [vmem:[#allocation3 + $0x28] sm:$0xff]
      %v2077 = vld [vmem:[#allocation3 + $0x30] sm:$0xff]
      %v2078 = vld [vmem:[#allocation3 + $0x38] sm:$0xff]
      %v2079 = vmax.f32 %v2071, 0.0
      %v2080 = vmax.f32 %v2072, 0.0
      %v2081 = vmax.f32 %v2073, 0.0
      %v2082 = vmax.f32 %v2074, 0.0
      %v2083 = vmax.f32 %v2075, 0.0
      %v2084 = vmax.f32 %v2076, 0.0
      %v2085 = vmax.f32 %v2077, 0.0
      %v2086 = vmax.f32 %v2078, 0.0
      %v2087 = vpack.c.bf16 %v2080, %v2079
      %v2088 = vpack.c.bf16 %v2082, %v2081
      %v2089 = vpack.c.bf16 %v2084, %v2083
      %v2090 = vpack.c.bf16 %v2086, %v2085
      %v2091 = vld [vmem:[%s5] sm:$0xf]
      %v2092 = vld [vmem:[%s5 + $0x4] sm:$0xf]
      %v2093 = vld [vmem:[%s5 + $0x8] sm:$0xf]
      %v2094 = vld [vmem:[%s5 + $0xc] sm:$0xf]
      %v2095 = vld [vmem:[%s6] sm:$0x1]
      %v2097 = vperm.slane %v2095, 0
      %v2103 = vunpack.c.l.b16 %v2091
      %v2104 = vunpack.c.l.b16 %v2092
      %v2105 = vunpack.c.l.b16 %v2093
      %v2106 = vunpack.c.l.b16 %v2094
      %v2107 = vpack.c.b16 %v2104, %v2103
      %v2108 = vpack.c.b16 %v2106, %v2105
      %v2112 = vsel %vm586, %v2087, 0
      %v2115 = vsel %vm586, %v2088, 0
      %v2118 = vsel %vm586, %v2089, 0
      %v2121 = vsel %vm586, %v2090, 0
      %2123 = vmatpush.bf16.msra.mxu0 0
      %2124 = vmatpush.bf16.msra.mxu0 0
      %2125 = vmatpush.bf16.msra.mxu0 0
      %2126 = vmatpush.bf16.msra.mxu0 0
      %2127 = vmatpush.bf16.msra.mxu0 0
      %2128 = vmatpush.bf16.msra.mxu0 0
      %2129 = vmatpush.bf16.msra.mxu0 %v2108
      %2130 = vmatpush.bf16.msra.mxu0 %v2107
      %2131 = vmatmul.bf16.gmra.mxu0 %v2112
      %v2132 = vpop.f32.mrf.mxu0
      %v2133 = vadd.f32 %v2097, %v2132
      %v2134 = vpop.f32.mrf.mxu0
      %v2135 = vadd.f32 %v2097, %v2134
      %2136 = vmatmul.bf16.gmra.mxu0 %v2115
      %v2137 = vpop.f32.mrf.mxu0
      %v2138 = vadd.f32 %v2097, %v2137
      %v2139 = vpop.f32.mrf.mxu0
      %v2140 = vadd.f32 %v2097, %v2139
      %2141 = vmatmul.bf16.gmra.mxu0 %v2118
      %v2142 = vpop.f32.mrf.mxu0
      %v2143 = vadd.f32 %v2097, %v2142
      %v2144 = vpop.f32.mrf.mxu0
      %v2145 = vadd.f32 %v2097, %v2144
      %2146 = vmatmul.bf16.gmra.mxu0 %v2121
      %v2147 = vpop.f32.mrf.mxu0
      %v2148 = vadd.f32 %v2097, %v2147
      %v2149 = vpop.f32.mrf.mxu0
      %v2150 = vadd.f32 %v2097, %v2149
      %2151 = vdwg.mxu0
      %v2152 = vld [vmem:[%s273] sm:$0xf]
      %v2153 = vld [vmem:[%s273 + $0x4] sm:$0xf]
      %v2154 = vld [vmem:[%s273 + $0x8] sm:$0xf]
      %v2155 = vld [vmem:[%s273 + $0xc] sm:$0xf]
      %v2156 = vld [vmem:[%s273 + $0x10] sm:$0xf]
      %v2157 = vld [vmem:[%s273 + $0x14] sm:$0xf]
      %v2158 = vld [vmem:[%s273 + $0x18] sm:$0xf]
      %v2159 = vld [vmem:[%s273 + $0x1c] sm:$0xf]
      %v2160 = vunpack.c.l.bf16 %v2152
      %v2161 = vunpack.c.l.bf16 %v2153
      %v2162 = vunpack.c.l.bf16 %v2154
      %v2163 = vunpack.c.l.bf16 %v2155
      %v2164 = vunpack.c.l.bf16 %v2156
      %v2165 = vunpack.c.l.bf16 %v2157
      %v2166 = vunpack.c.l.bf16 %v2158
      %v2167 = vunpack.c.l.bf16 %v2159
      %v2168 = vadd.f32 %v2133, %v2160
      %v2169 = vadd.f32 %v2135, %v2161
      %v2170 = vadd.f32 %v2138, %v2162
      %v2171 = vadd.f32 %v2140, %v2163
      %v2172 = vadd.f32 %v2143, %v2164
      %v2173 = vadd.f32 %v2145, %v2165
      %v2174 = vadd.f32 %v2148, %v2166
      %v2175 = vadd.f32 %v2150, %v2167
      %v2176 = vmax.f32 %v2168, 0.0
      %v2177 = vmax.f32 %v2169, 0.0
      %v2178 = vmax.f32 %v2170, 0.0
      %v2179 = vmax.f32 %v2171, 0.0
      %v2180 = vmax.f32 %v2172, 0.0
      %v2181 = vmax.f32 %v2173, 0.0
      %v2182 = vmax.f32 %v2174, 0.0
      %v2183 = vmax.f32 %v2175, 0.0
      %v2184 = vpack.c.bf16 %v2176, %v2176
      %v2185 = vpack.c.bf16 %v2177, %v2177
      %v2186 = vpack.c.bf16 %v2178, %v2178
      %v2187 = vpack.c.bf16 %v2179, %v2179
      %v2188 = vpack.c.bf16 %v2180, %v2180
      %v2189 = vpack.c.bf16 %v2181, %v2181
      %v2190 = vpack.c.bf16 %v2182, %v2182
      %v2191 = vpack.c.bf16 %v2183, %v2183
      %2192 = vst [vmem:[%s278] sm:$0xf] %v2184
      %2193 = vst [vmem:[%s278 + $0x4] sm:$0xf] %v2185
      %2194 = vst [vmem:[%s278 + $0x8] sm:$0xf] %v2186
      %2195 = vst [vmem:[%s278 + $0xc] sm:$0xf] %v2187
      %2196 = vst [vmem:[%s278 + $0x10] sm:$0xf] %v2188
      %2197 = vst [vmem:[%s278 + $0x14] sm:$0xf] %v2189
      %2198 = vst [vmem:[%s278 + $0x18] sm:$0xf] %v2190
      %2199 = vst [vmem:[%s278 + $0x1c] sm:$0xf] %v2191
      %p2200 = scmp.lt.s32.totalorder %s18, 1
      %s2201 = scalar_select %p2200, %s18, 1
      %s2202 = smul.addr %s2201, 8
      %s2203 = smul.addr %s2202, 4
      %s2204 = scalar_lea.vmem %s7, %s2203
      // Predicated region
      $region49: #{forward.3} parent=47 // pred_check
        %p2205 = pneg %p188
      $region50: #{forward.3} parent=47 // pred_check_branch
        %2207 = sbr.rel (%p2205) target = $region52
      $region51: #{forward.3} parent=47 // pred_region
        _
      $region52: #{forward.3} parent=47 // pred_fallthru
        _
    $region48: #{forward.3} parent=5 // pred_fallthru
      _
    %p2208 = scmp.le.s32.totalorder 2, %s13
    // Predicated region
    $region53: #{forward.3} parent=5 // pred_check
      %p2209 = pneg %p2208
    $region54: #{forward.3} parent=5 // pred_check_branch
      %2211 = sbr.rel (%p2209) target = $region56
    $region55: #{forward.3} parent=5 // pred_region
      %s2212 = ssub.s32 %s13, 2
      // Predicated region
      $region57: #{forward.3} parent=55 // pred_check
        %p2213 = pneg %p194
      $region58: #{forward.3} parent=55 // pred_check_branch
        %2215 = sbr.rel (%p2213) target = $region60
      $region59: #{forward.3} parent=55 // pred_region
        %p2216 = scmp.lt.s32.totalorder %s19, 1
        %s2217 = scalar_select %p2216, %s19, 1
        %s2218 = smul.addr %s2217, 8
        %s2219 = smul.addr %s2218, 4
        %s2220 = scalar_lea.vmem %s7, %s2219
      $region60: #{forward.3} parent=55 // pred_fallthru
        _
    $region56: #{forward.3} parent=5 // pred_fallthru
      _
  $region6: #{forward.3} parent=0 // loop_footer
    %s17 = sadd.s32 1, %s13
  $region7: #{forward.3} parent=0 // loop_footer_branch
    %12 = sbr.rel target = $region3
  $region8: #{forward.3} parent=0 // loop_exit
    _

// kernel: forward.2
$region0: #{forward.2}
  #allocation0 [shape = 'u32[]', space=smem, size = 0x4, offset = 0x4, fixed_abs, tag = 'smem constant byte address 0x4 - core index']
  #allocation1 [shape = 'u32[72,128]{1,0:T(1,128)}', space=vmem, size = 0x9000, scoped, tag = 'internal scratch']
  #allocation2 [shape = 'bf16[10,10,32]{2,1,0:T(8,128)(2,1)}', space=vmem, size = 0xa000, scoped, tag = 'scratch operand']
  #allocation3 [shape = 'f32[64,32]{1,0:T(8,128)}', space=vmem, size = 0x8000, scoped, tag = 'scratch operand']
  %s0 = inlined_call_operand.vmem [shape: bf16[2,64,64], index: 0, kind: input, shape index: {}]
  %s1 = inlined_call_operand.vmem [shape: bf16[64,32], index: 1, kind: input, shape index: {}]
  %s2 = inlined_call_operand.vmem [shape: f32[1,32], index: 2, kind: input, shape index: {}]
  %s3 = inlined_call_operand.vmem [shape: bf16[9,32,32], index: 3, kind: input, shape index: {}]
  %s4 = inlined_call_operand.vmem [shape: f32[1,32], index: 4, kind: input, shape index: {}]
  %s5 = inlined_call_operand.vmem [shape: bf16[32,128], index: 5, kind: input, shape index: {}]
  %s6 = inlined_call_operand.vmem [shape: f32[1,128], index: 6, kind: input, shape index: {}]
  %s7 = inlined_call_operand.vmem [shape: bf16[64,128], index: 7, kind: input, shape index: {}]
  %s8 = inlined_call_operand.vmem [shape: f32[1,128], index: 8, kind: input, shape index: {}]
  %s9 = inlined_call_operand.vmem [shape: bf16[2,64,128], index: 9, kind: output, shape index: {}]
  %s10 = sld [smem:[#allocation0]]
  $region69: #{forward.2} parent=0
    _
  %s12 = ssub.s32 1, %s10
  %s13 = scalar_select 0, %s12, %s10
  loop: start=0, step=1, limit=4
  $region2: #{forward.2} parent=0 // loop_pre_header
    _
  $region3: #{forward.2} parent=0 // loop_header
    %s15 = sphi 0, %s19
    %p16 = scmp.ge.s32.totalorder %s15, 4
    %s25 = sphi 0, %s27
    %s28 = sphi 0, %s25
    %s29 = sphi 0, %s28
    %s45 = sphi 0, %s29
    %s49 = sphi 0, %s49
    %s51 = sphi 0, %s49
    %s52 = sphi 0, %s51
    %s66 = sphi 0, %s52
    %s70 = sphi 0, %s70
    %s72 = sphi 0, %s70
    %s73 = sphi 0, %s72
    %s87 = sphi 0, %s73
    %s91 = sphi 0, %s91
    %s93 = sphi 0, %s91
    %s94 = sphi 0, %s93
    %s108 = sphi 0, %s94
    %s112 = sphi 0, %s112
    %s114 = sphi 0, %s112
    %s115 = sphi 0, %s114
    %s129 = sphi 0, %s115
    %s133 = sphi 0, %s133
    %s135 = sphi 0, %s133
    %s136 = sphi 0, %s135
    %s150 = sphi 0, %s136
    %s154 = sphi 0, %s154
    %s156 = sphi 0, %s154
    %s157 = sphi 0, %s156
    %s171 = sphi 0, %s157
    %s175 = sphi 0, %s175
    %s177 = sphi 0, %s175
    %s178 = sphi 0, %s177
    %s192 = sphi 0, %s178
    %s196 = sphi 0, %s196
    %s198 = sphi 0, %s196
    %s199 = sphi 0, %s198
    %s213 = sphi 0, %s199
    %s219 = sphi 0, %s221
    %s222 = sphi 0, %s219
    %s223 = sphi 0, %s222
    %s239 = sphi 0, %s223
  $region4: #{forward.2} parent=0 // loop_header_branch
    %18 = sbr.rel (%p16) target = $region8
  $region5: #{forward.2} parent=0 // loop_body
    %s20 = ssub.s32 %s15, 1
    %s21 = ssub.s32 %s15, 2
    %s22 = sadd.s32 %s15, 1
    %s23 = ssub.s32 %s15, %s22
    %p24 = scmp.eq.s32.totalorder %s23, 0
    %s26 = sadd.s32 %s25, 1
    %s27 = scalar_select %p24, %s25, %s26
    %p30 = pneg %p24
    %p31 = scmp.eq.s32.totalorder %s15, 1
    %p32 = por %p30, %p31
    %p33 = scmp.ne.s32.totalorder %s25, %s28
    %p34 = scmp.eq.s32.totalorder %s15, 0
    %p35 = por %p33, %p34
    %p36 = scmp.ne.s32.totalorder %s25, %s28
    %p37 = scmp.eq.s32.totalorder %s20, 1
    %p38 = por %p36, %p37
    %p39 = scmp.ne.s32.totalorder %s28, %s29
    %p40 = scmp.eq.s32.totalorder %s20, 0
    %p41 = por %p39, %p40
    %p42 = scmp.ne.s32.totalorder %s28, %s29
    %p43 = scmp.eq.s32.totalorder %s21, 1
    %p44 = por %p42, %p43
    %p46 = scmp.ne.s32.totalorder %s29, %s45
    %p47 = scmp.eq.s32.totalorder %s21, 0
    %p48 = por %p46, %p47
    %s50 = sadd.s32 %s49, 1
    %p53 = scmp.eq.s32.totalorder %s15, 1
    %p54 = scmp.ne.s32.totalorder %s49, %s51
    %p55 = scmp.eq.s32.totalorder %s15, 0
    %p56 = por %p54, %p55
    %p57 = scmp.ne.s32.totalorder %s49, %s51
    %p58 = scmp.eq.s32.totalorder %s20, 1
    %p59 = por %p57, %p58
    %p60 = scmp.ne.s32.totalorder %s51, %s52
    %p61 = scmp.eq.s32.totalorder %s20, 0
    %p62 = por %p60, %p61
    %p63 = scmp.ne.s32.totalorder %s51, %s52
    %p64 = scmp.eq.s32.totalorder %s21, 1
    %p65 = por %p63, %p64
    %p67 = scmp.ne.s32.totalorder %s52, %s66
    %p68 = scmp.eq.s32.totalorder %s21, 0
    %p69 = por %p67, %p68
    %s71 = sadd.s32 %s70, 1
    %p74 = scmp.eq.s32.totalorder %s15, 1
    %p75 = scmp.ne.s32.totalorder %s70, %s72
    %p76 = scmp.eq.s32.totalorder %s15, 0
    %p77 = por %p75, %p76
    %p78 = scmp.ne.s32.totalorder %s70, %s72
    %p79 = scmp.eq.s32.totalorder %s20, 1
    %p80 = por %p78, %p79
    %p81 = scmp.ne.s32.totalorder %s72, %s73
    %p82 = scmp.eq.s32.totalorder %s20, 0
    %p83 = por %p81, %p82
    %p84 = scmp.ne.s32.totalorder %s72, %s73
    %p85 = scmp.eq.s32.totalorder %s21, 1
    %p86 = por %p84, %p85
    %p88 = scmp.ne.s32.totalorder %s73, %s87
    %p89 = scmp.eq.s32.totalorder %s21, 0
    %p90 = por %p88, %p89
    %s92 = sadd.s32 %s91, 1
    %p95 = scmp.eq.s32.totalorder %s15, 1
    %p96 = scmp.ne.s32.totalorder %s91, %s93
    %p97 = scmp.eq.s32.totalorder %s15, 0
    %p98 = por %p96, %p97
    %p99 = scmp.ne.s32.totalorder %s91, %s93
    %p100 = scmp.eq.s32.totalorder %s20, 1
    %p101 = por %p99, %p100
    %p102 = scmp.ne.s32.totalorder %s93, %s94
    %p103 = scmp.eq.s32.totalorder %s20, 0
    %p104 = por %p102, %p103
    %p105 = scmp.ne.s32.totalorder %s93, %s94
    %p106 = scmp.eq.s32.totalorder %s21, 1
    %p107 = por %p105, %p106
    %p109 = scmp.ne.s32.totalorder %s94, %s108
    %p110 = scmp.eq.s32.totalorder %s21, 0
    %p111 = por %p109, %p110
    %s113 = sadd.s32 %s112, 1
    %p116 = scmp.eq.s32.totalorder %s15, 1
    %p117 = scmp.ne.s32.totalorder %s112, %s114
    %p118 = scmp.eq.s32.totalorder %s15, 0
    %p119 = por %p117, %p118
    %p120 = scmp.ne.s32.totalorder %s112, %s114
    %p121 = scmp.eq.s32.totalorder %s20, 1
    %p122 = por %p120, %p121
    %p123 = scmp.ne.s32.totalorder %s114, %s115
    %p124 = scmp.eq.s32.totalorder %s20, 0
    %p125 = por %p123, %p124
    %p126 = scmp.ne.s32.totalorder %s114, %s115
    %p127 = scmp.eq.s32.totalorder %s21, 1
    %p128 = por %p126, %p127
    %p130 = scmp.ne.s32.totalorder %s115, %s129
    %p131 = scmp.eq.s32.totalorder %s21, 0
    %p132 = por %p130, %p131
    %s134 = sadd.s32 %s133, 1
    %p137 = scmp.eq.s32.totalorder %s15, 1
    %p138 = scmp.ne.s32.totalorder %s133, %s135
    %p139 = scmp.eq.s32.totalorder %s15, 0
    %p140 = por %p138, %p139
    %p141 = scmp.ne.s32.totalorder %s133, %s135
    %p142 = scmp.eq.s32.totalorder %s20, 1
    %p143 = por %p141, %p142
    %p144 = scmp.ne.s32.totalorder %s135, %s136
    %p145 = scmp.eq.s32.totalorder %s20, 0
    %p146 = por %p144, %p145
    %p147 = scmp.ne.s32.totalorder %s135, %s136
    %p148 = scmp.eq.s32.totalorder %s21, 1
    %p149 = por %p147, %p148
    %p151 = scmp.ne.s32.totalorder %s136, %s150
    %p152 = scmp.eq.s32.totalorder %s21, 0
    %p153 = por %p151, %p152
    %s155 = sadd.s32 %s154, 1
    %p158 = scmp.eq.s32.totalorder %s15, 1
    %p159 = scmp.ne.s32.totalorder %s154, %s156
    %p160 = scmp.eq.s32.totalorder %s15, 0
    %p161 = por %p159, %p160
    %p162 = scmp.ne.s32.totalorder %s154, %s156
    %p163 = scmp.eq.s32.totalorder %s20, 1
    %p164 = por %p162, %p163
    %p165 = scmp.ne.s32.totalorder %s156, %s157
    %p166 = scmp.eq.s32.totalorder %s20, 0
    %p167 = por %p165, %p166
    %p168 = scmp.ne.s32.totalorder %s156, %s157
    %p169 = scmp.eq.s32.totalorder %s21, 1
    %p170 = por %p168, %p169
    %p172 = scmp.ne.s32.totalorder %s157, %s171
    %p173 = scmp.eq.s32.totalorder %s21, 0
    %p174 = por %p172, %p173
    %s176 = sadd.s32 %s175, 1
    %p179 = scmp.eq.s32.totalorder %s15, 1
    %p180 = scmp.ne.s32.totalorder %s175, %s177
    %p181 = scmp.eq.s32.totalorder %s15, 0
    %p182 = por %p180, %p181
    %p183 = scmp.ne.s32.totalorder %s175, %s177
    %p184 = scmp.eq.s32.totalorder %s20, 1
    %p185 = por %p183, %p184
    %p186 = scmp.ne.s32.totalorder %s177, %s178
    %p187 = scmp.eq.s32.totalorder %s20, 0
    %p188 = por %p186, %p187
    %p189 = scmp.ne.s32.totalorder %s177, %s178
    %p190 = scmp.eq.s32.totalorder %s21, 1
    %p191 = por %p189, %p190
    %p193 = scmp.ne.s32.totalorder %s178, %s192
    %p194 = scmp.eq.s32.totalorder %s21, 0
    %p195 = por %p193, %p194
    %s197 = sadd.s32 %s196, 1
    %p200 = scmp.eq.s32.totalorder %s15, 1
    %p201 = scmp.ne.s32.totalorder %s196, %s198
    %p202 = scmp.eq.s32.totalorder %s15, 0
    %p203 = por %p201, %p202
    %p204 = scmp.ne.s32.totalorder %s196, %s198
    %p205 = scmp.eq.s32.totalorder %s20, 1
    %p206 = por %p204, %p205
    %p207 = scmp.ne.s32.totalorder %s198, %s199
    %p208 = scmp.eq.s32.totalorder %s20, 0
    %p209 = por %p207, %p208
    %p210 = scmp.ne.s32.totalorder %s198, %s199
    %p211 = scmp.eq.s32.totalorder %s21, 1
    %p212 = por %p210, %p211
    %p214 = scmp.ne.s32.totalorder %s199, %s213
    %p215 = scmp.eq.s32.totalorder %s21, 0
    %p216 = por %p214, %p215
    %s217 = ssub.s32 %s15, %s22
    %p218 = scmp.eq.s32.totalorder %s217, 0
    %s220 = sadd.s32 %s219, 1
    %s221 = scalar_select %p218, %s219, %s220
    %p224 = pneg %p218
    %p225 = scmp.eq.s32.totalorder %s15, 1
    %p226 = por %p224, %p225
    %p227 = scmp.ne.s32.totalorder %s219, %s222
    %p228 = scmp.eq.s32.totalorder %s15, 0
    %p229 = por %p227, %p228
    %p230 = scmp.ne.s32.totalorder %s219, %s222
    %p231 = scmp.eq.s32.totalorder %s20, 1
    %p232 = por %p230, %p231
    %p233 = scmp.ne.s32.totalorder %s222, %s223
    %p234 = scmp.eq.s32.totalorder %s20, 0
    %p235 = por %p233, %p234
    %p236 = scmp.ne.s32.totalorder %s222, %s223
    %p237 = scmp.eq.s32.totalorder %s21, 1
    %p238 = por %p236, %p237
    %p240 = scmp.ne.s32.totalorder %s223, %s239
    %p241 = scmp.eq.s32.totalorder %s21, 0
    %p242 = por %p240, %p241
    %p243 = scmp.le.s32.totalorder 1, %s15
    %p244 = scmp.lt.s32.totalorder %s15, 3
    %p245 = pnand %p243, %p244
    %p246 = pneg %p245
    // Predicated region
    $region9: #{forward.2} parent=5 // pred_check
      _
    $region10: #{forward.2} parent=5 // pred_check_branch
      %248 = sbr.rel (%p245) target = $region12
    $region11: #{forward.2} parent=5 // pred_region
      %s249 = ssub.s32 %s15, 1
      // Predicated region
      $region13: #{forward.2} parent=11 // pred_check
        %p250 = pneg %p62
      $region14: #{forward.2} parent=11 // pred_check_branch
        %252 = sbr.rel (%p250) target = $region16
      $region15: #{forward.2} parent=11 // pred_region
        _
      $region16: #{forward.2} parent=11 // pred_fallthru
        _
      // Predicated region
      $region17: #{forward.2} parent=11 // pred_check
        %p253 = pneg %p83
      $region18: #{forward.2} parent=11 // pred_check_branch
        %255 = sbr.rel (%p253) target = $region20
      $region19: #{forward.2} parent=11 // pred_region
        _
      $region20: #{forward.2} parent=11 // pred_fallthru
        _
      // Predicated region
      $region21: #{forward.2} parent=11 // pred_check
        %p256 = pneg %p104
      $region22: #{forward.2} parent=11 // pred_check_branch
        %258 = sbr.rel (%p256) target = $region24
      $region23: #{forward.2} parent=11 // pred_region
        _
      $region24: #{forward.2} parent=11 // pred_fallthru
        _
      // Predicated region
      $region25: #{forward.2} parent=11 // pred_check
        %p259 = pneg %p125
      $region26: #{forward.2} parent=11 // pred_check_branch
        %261 = sbr.rel (%p259) target = $region28
      $region27: #{forward.2} parent=11 // pred_region
        _
      $region28: #{forward.2} parent=11 // pred_fallthru
        _
      // Predicated region
      $region29: #{forward.2} parent=11 // pred_check
        %p262 = pneg %p146
      $region30: #{forward.2} parent=11 // pred_check_branch
        %264 = sbr.rel (%p262) target = $region32
      $region31: #{forward.2} parent=11 // pred_region
        _
      $region32: #{forward.2} parent=11 // pred_fallthru
        _
      // Predicated region
      $region33: #{forward.2} parent=11 // pred_check
        %p265 = pneg %p167
      $region34: #{forward.2} parent=11 // pred_check_branch
        %267 = sbr.rel (%p265) target = $region36
      $region35: #{forward.2} parent=11 // pred_region
        _
      $region36: #{forward.2} parent=11 // pred_fallthru
        _
      // Predicated region
      $region37: #{forward.2} parent=11 // pred_check
        %p268 = pneg %p188
      $region38: #{forward.2} parent=11 // pred_check_branch
        %270 = sbr.rel (%p268) target = $region40
      $region39: #{forward.2} parent=11 // pred_region
        _
      $region40: #{forward.2} parent=11 // pred_fallthru
        _
      // Predicated region
      $region41: #{forward.2} parent=11 // pred_check
        %p271 = pneg %p209
      $region42: #{forward.2} parent=11 // pred_check_branch
        %273 = sbr.rel (%p271) target = $region44
      $region43: #{forward.2} parent=11 // pred_region
        _
      $region44: #{forward.2} parent=11 // pred_fallthru
        _
    $region12: #{forward.2} parent=5 // pred_fallthru
      _
    %p274 = scmp.lt.s32.totalorder %s15, 2
    // Predicated region
    $region45: #{forward.2} parent=5 // pred_check
      %p275 = pneg %p274
    $region46: #{forward.2} parent=5 // pred_check_branch
      %277 = sbr.rel (%p275) target = $region48
    $region47: #{forward.2} parent=5 // pred_region
      // Predicated region
      $region49: #{forward.2} parent=47 // pred_check
        %p278 = pneg %p35
      $region50: #{forward.2} parent=47 // pred_check_branch
        %280 = sbr.rel (%p278) target = $region52
      $region51: #{forward.2} parent=47 // pred_region
        %p281 = scmp.lt.s32.totalorder %s15, 1
        %s282 = scalar_select %p281, %s15, 1
        %s283 = smul.addr %s282, 8
        %s284 = smul.addr %s283, 4
        %s285 = scalar_lea.vmem %s0, %s284
      $region52: #{forward.2} parent=47 // pred_fallthru
        _
    $region48: #{forward.2} parent=5 // pred_fallthru
      _
    %p286 = scmp.le.s32.totalorder 1, %s15
    %p287 = scmp.lt.s32.totalorder %s15, 3
    %p288 = pnand %p286, %p287
    %p289 = pneg %p288
    // Predicated region
    $region53: #{forward.2} parent=5 // pred_check
      _
    $region54: #{forward.2} parent=5 // pred_check_branch
      %291 = sbr.rel (%p288) target = $region56
    $region55: #{forward.2} parent=5 // pred_region
      %s292 = ssub.s32 %s15, 1
      %p293 = scmp.lt.s32.totalorder %s20, 1
      %s294 = scalar_select %p293, %s20, 1
      %s295 = smul.addr %s294, 8
      %s296 = smul.addr %s295, 4
      %s297 = scalar_lea.vmem %s0, %s296
      %p298 = pneg %p41
      %p299 = pneg %p38
      %p300 = pneg %p62
      %p301 = pneg %p59
      %p302 = pneg %p83
      %p303 = pneg %p80
      %p304 = pneg %p104
      %p305 = pneg %p101
      %p306 = pneg %p125
      %p307 = pneg %p122
      %p308 = pneg %p146
      %p309 = pneg %p143
      %p310 = pneg %p167
      %p311 = pneg %p164
      %p312 = pneg %p188
      %p313 = pneg %p185
      %p314 = pneg %p209
      %p315 = pneg %p206
      %p316 = pneg %p235
      %p317 = pneg %p232
      %p318 = scmp.lt.s32.totalorder %s20, 1
      %s319 = scalar_select %p318, %s20, 1
      %s320 = smul.addr %s319, 8
      %s321 = smul.addr %s320, 4
      %s322 = scalar_lea.vmem %s9, %s321
      %p323 = scmp.lt.s32.totalorder %s20, 1
      %s324 = scalar_select %p323, %s20, 1
      %s325 = smul.addr %s324, 8
      %s326 = smul.addr %s325, 4
      %s327 = scalar_lea.vmem %s0, %s326
      %p328 = scmp.lt.s32.totalorder %s20, 1
      %s329 = scalar_select %p328, %s20, 1
      %s330 = smul.addr %s329, 8
      %s331 = smul.addr %s330, 4
      %s332 = scalar_lea.vmem %s9, %s331
      %v334 = vld [vmem:[%s327] sm:$0xf]
      %v335 = vld [vmem:[%s327 + $0x4] sm:$0xf]
      %v336 = vld [vmem:[%s327 + $0x8] sm:$0xf]
      %v337 = vld [vmem:[%s327 + $0xc] sm:$0xf]
      %v338 = vld [vmem:[%s327 + $0x10] sm:$0xf]
      %v339 = vld [vmem:[%s327 + $0x14] sm:$0xf]
      %v340 = vld [vmem:[%s327 + $0x18] sm:$0xf]
      %v341 = vld [vmem:[%s327 + $0x1c] sm:$0xf]
      %v342 = vld [vmem:[%s1] sm:$0xf]
      %v343 = vld [vmem:[%s1 + $0x4] sm:$0xf]
      %v344 = vld [vmem:[%s1 + $0x8] sm:$0xf]
      %v345 = vld [vmem:[%s1 + $0xc] sm:$0xf]
      %v346 = vld [vmem:[%s1 + $0x10] sm:$0xf]
      %v347 = vld [vmem:[%s1 + $0x14] sm:$0xf]
      %v348 = vld [vmem:[%s1 + $0x18] sm:$0xf]
      %v349 = vld [vmem:[%s1 + $0x1c] sm:$0xf]
      %v350 = vld [vmem:[%s2] sm:$0x1]
      %v352 = vperm.slane %v350, 0
      %v362 = vunpack.c.l.b16 %v334
      %v363 = vunpack.c.l.b16 %v335
      %v364 = vunpack.c.l.b16 %v336
      %v365 = vunpack.c.l.b16 %v337
      %v366 = vunpack.c.l.b16 %v338
      %v367 = vunpack.c.l.b16 %v339
      %v368 = vunpack.c.l.b16 %v340
      %v369 = vunpack.c.l.b16 %v341
      %v370 = vpack.c.b16 %v363, %v362
      %v371 = vpack.c.b16 %v365, %v364
      %v372 = vpack.c.b16 %v367, %v366
      %v373 = vpack.c.b16 %v369, %v368
      %v382 = vunpack.c.l.b16 %v342
      %v383 = vunpack.c.l.b16 %v343
      %v384 = vunpack.c.l.b16 %v344
      %v385 = vunpack.c.l.b16 %v345
      %v386 = vunpack.c.l.b16 %v346
      %v387 = vunpack.c.l.b16 %v347
      %v388 = vunpack.c.l.b16 %v348
      %v389 = vunpack.c.l.b16 %v349
      %v390 = vpack.c.b16 %v383, %v382
      %v391 = vpack.c.b16 %v385, %v384
      %v392 = vpack.c.b16 %v387, %v386
      %v393 = vpack.c.b16 %v389, %v388
      %vm398 = vcmask 523264
      %v400 = vsel %vm398, %v370, 0
      %v403 = vsel %vm398, %v371, 0
      %v406 = vsel %vm398, %v372, 0
      %v409 = vsel %vm398, %v373, 0
      %411 = vmatpush.bf16.msra.mxu0 0
      %412 = vmatpush.bf16.msra.mxu0 0
      %413 = vmatpush.bf16.msra.mxu0 0
      %414 = vmatpush.bf16.msra.mxu0 0
      %415 = vmatpush.bf16.msra.mxu0 %v393
      %416 = vmatpush.bf16.msra.mxu0 %v392
      %417 = vmatpush.bf16.msra.mxu0 %v391
      %418 = vmatpush.bf16.msra.mxu0 %v390
      %419 = vmatmul.bf16.gmra.mxu0 %v400
      %v420 = vpop.f32.mrf.mxu0
      %v421 = vadd.f32 %v352, %v420
      %v422 = vpop.f32.mrf.mxu0
      %v423 = vadd.f32 %v352, %v422
      %424 = vmatmul.bf16.gmra.mxu0 %v403
      %v425 = vpop.f32.mrf.mxu0
      %v426 = vadd.f32 %v352, %v425
      %v427 = vpop.f32.mrf.mxu0
      %v428 = vadd.f32 %v352, %v427
      %429 = vmatmul.bf16.gmra.mxu0 %v406
      %v430 = vpop.f32.mrf.mxu0
      %v431 = vadd.f32 %v352, %v430
      %v432 = vpop.f32.mrf.mxu0
      %v433 = vadd.f32 %v352, %v432
      %434 = vmatmul.bf16.gmra.mxu0 %v409
      %v435 = vpop.f32.mrf.mxu0
      %v436 = vadd.f32 %v352, %v435
      %v437 = vpop.f32.mrf.mxu0
      %v438 = vadd.f32 %v352, %v437
      %439 = vdwg.mxu0
      %v440 = vmax.f32 %v421, 0.0
      %v441 = vmax.f32 %v423, 0.0
      %v442 = vmax.f32 %v426, 0.0
      %v443 = vmax.f32 %v428, 0.0
      %v444 = vmax.f32 %v431, 0.0
      %v445 = vmax.f32 %v433, 0.0
      %v446 = vmax.f32 %v436, 0.0
      %v447 = vmax.f32 %v438, 0.0
      %v448 = vpack.c.bf16 %v440, %v440
      %v449 = vpack.c.bf16 %v441, %v441
      %v450 = vpack.c.bf16 %v442, %v442
      %v451 = vpack.c.bf16 %v443, %v443
      %v452 = vpack.c.bf16 %v444, %v444
      %v453 = vpack.c.bf16 %v445, %v445
      %v454 = vpack.c.bf16 %v446, %v446
      %v455 = vpack.c.bf16 %v447, %v447
      %vm456 = vcmask 257024
      %457 = vst.msk [vmem:[#allocation2] sm:$0xf] %vm456, 0
      %vm458 = vcmask 253952
      %459 = vst.msk [vmem:[#allocation2 + $0x4] sm:$0x1] %vm458, 0
      %460 = vst.msk [vmem:[#allocation2 + $0x8] sm:$0xf] %vm456, 0
      %461 = vst.msk [vmem:[#allocation2 + $0xc] sm:$0x1] %vm458, 0
      %462 = vst.msk [vmem:[#allocation2 + $0x10] sm:$0xf] %vm456, 0
      %463 = vst.msk [vmem:[#allocation2 + $0x14] sm:$0x1] %vm458, 0
      %464 = vst.msk [vmem:[#allocation2 + $0x18] sm:$0xf] %vm456, 0
      %465 = vst.msk [vmem:[#allocation2 + $0x1c] sm:$0x1] %vm458, 0
      %466 = vst.msk [vmem:[#allocation2 + $0x20] sm:$0xf] %vm456, 0
      %467 = vst.msk [vmem:[#allocation2 + $0x24] sm:$0x1] %vm458, 0
      %468 = vst.msk [vmem:[#allocation2 + $0x28] sm:$0xf] %vm456, 0
      %469 = vst.msk [vmem:[#allocation2 + $0x2c] sm:$0x1] %vm458, 0
      %470 = vst.msk [vmem:[#allocation2 + $0x30] sm:$0xf] %vm456, 0
      %471 = vst.msk [vmem:[#allocation2 + $0x34] sm:$0x1] %vm458, 0
      %472 = vst.msk [vmem:[#allocation2 + $0x38] sm:$0xf] %vm456, 0
      %473 = vst.msk [vmem:[#allocation2 + $0x3c] sm:$0x1] %vm458, 0
      %474 = vst.msk [vmem:[#allocation2 + $0x40] sm:$0xf] %vm456, 0
      %475 = vst.msk [vmem:[#allocation2 + $0x44] sm:$0x1] %vm458, 0
      %476 = vst.msk [vmem:[#allocation2 + $0x48] sm:$0xf] %vm456, 0
      %477 = vst.msk [vmem:[#allocation2 + $0x4c] sm:$0x1] %vm458, 0
      %v479 = vshrl.u32 %v448, 16
      %v481 = vrot.slane %v479, 7
      %v482 = vshll.u32 %v448, 16
      %v484 = vor.u32 %v481, %v482
      %v485 = vrot.slane %v481, 4
      %v487 = vshrl.u32 %v449, 16
      %v489 = vrot.slane %v487, 7
      %v490 = vshll.u32 %v449, 16
      %v492 = vor.u32 %v489, %v490
      %v493 = vrot.slane %v489, 4
      %v495 = vshrl.u32 %v450, 16
      %v497 = vrot.slane %v495, 7
      %v498 = vshll.u32 %v450, 16
      %v500 = vor.u32 %v497, %v498
      %v501 = vrot.slane %v497, 4
      %v503 = vshrl.u32 %v451, 16
      %v505 = vrot.slane %v503, 7
      %v506 = vshll.u32 %v451, 16
      %v508 = vor.u32 %v505, %v506
      %v509 = vrot.slane %v505, 4
      %v511 = vshrl.u32 %v452, 16
      %v513 = vrot.slane %v511, 7
      %v514 = vshll.u32 %v452, 16
      %v516 = vor.u32 %v513, %v514
      %v517 = vrot.slane %v513, 4
      %v519 = vshrl.u32 %v453, 16
      %v521 = vrot.slane %v519, 7
      %v522 = vshll.u32 %v453, 16
      %v524 = vor.u32 %v521, %v522
      %v525 = vrot.slane %v521, 4
      %v527 = vshrl.u32 %v454, 16
      %v529 = vrot.slane %v527, 7
      %v530 = vshll.u32 %v454, 16
      %v532 = vor.u32 %v529, %v530
      %v533 = vrot.slane %v529, 4
      %v535 = vshrl.u32 %v455, 16
      %v537 = vrot.slane %v535, 7
      %v538 = vshll.u32 %v455, 16
      %v540 = vor.u32 %v537, %v538
      %v541 = vrot.slane %v537, 4
      %s558 = scalar_lea.vmem [#allocation2], 8
      %vm559 = vcmask 257024
      %vm560 = vsmask.f32 7938
      %vm561 = vmand %vm559, %vm560
      %v562 = vld [vmem:[%s558] sm:$0xf]
      %v563 = vsel %vm561, %v484, %v562
      %564 = vst [vmem:[%s558] sm:$0xf] %v563
      %vm565 = vcmask 253952
      %vm566 = vsmask.f32 256
      %vm567 = vmand %vm565, %vm566
      %v568 = vld [vmem:[%s558 + $0x4] sm:$0x1]
      %v569 = vsel %vm567, %v485, %v568
      %570 = vst [vmem:[%s558 + $0x4] sm:$0x1] %v569
      %v571 = vld [vmem:[%s558 + $0x8] sm:$0xf]
      %v572 = vsel %vm561, %v492, %v571
      %573 = vst [vmem:[%s558 + $0x8] sm:$0xf] %v572
      %v574 = vld [vmem:[%s558 + $0xc] sm:$0x1]
      %v575 = vsel %vm567, %v493, %v574
      %576 = vst [vmem:[%s558 + $0xc] sm:$0x1] %v575
      %v577 = vld [vmem:[%s558 + $0x10] sm:$0xf]
      %v578 = vsel %vm561, %v500, %v577
      %579 = vst [vmem:[%s558 + $0x10] sm:$0xf] %v578
      %v580 = vld [vmem:[%s558 + $0x14] sm:$0x1]
      %v581 = vsel %vm567, %v501, %v580
      %582 = vst [vmem:[%s558 + $0x14] sm:$0x1] %v581
      %v583 = vld [vmem:[%s558 + $0x18] sm:$0xf]
      %v584 = vsel %vm561, %v508, %v583
      %585 = vst [vmem:[%s558 + $0x18] sm:$0xf] %v584
      %v586 = vld [vmem:[%s558 + $0x1c] sm:$0x1]
      %v587 = vsel %vm567, %v509, %v586
      %588 = vst [vmem:[%s558 + $0x1c] sm:$0x1] %v587
      %v589 = vld [vmem:[%s558 + $0x20] sm:$0xf]
      %v590 = vsel %vm561, %v516, %v589
      %591 = vst [vmem:[%s558 + $0x20] sm:$0xf] %v590
      %v592 = vld [vmem:[%s558 + $0x24] sm:$0x1]
      %v593 = vsel %vm567, %v517, %v592
      %594 = vst [vmem:[%s558 + $0x24] sm:$0x1] %v593
      %v595 = vld [vmem:[%s558 + $0x28] sm:$0xf]
      %v596 = vsel %vm561, %v524, %v595
      %597 = vst [vmem:[%s558 + $0x28] sm:$0xf] %v596
      %v598 = vld [vmem:[%s558 + $0x2c] sm:$0x1]
      %v599 = vsel %vm567, %v525, %v598
      %600 = vst [vmem:[%s558 + $0x2c] sm:$0x1] %v599
      %v601 = vld [vmem:[%s558 + $0x30] sm:$0xf]
      %v602 = vsel %vm561, %v532, %v601
      %603 = vst [vmem:[%s558 + $0x30] sm:$0xf] %v602
      %v604 = vld [vmem:[%s558 + $0x34] sm:$0x1]
      %v605 = vsel %vm567, %v533, %v604
      %606 = vst [vmem:[%s558 + $0x34] sm:$0x1] %v605
      %v607 = vld [vmem:[%s558 + $0x38] sm:$0xf]
      %v608 = vsel %vm561, %v540, %v607
      %609 = vst [vmem:[%s558 + $0x38] sm:$0xf] %v608
      %v610 = vld [vmem:[%s558 + $0x3c] sm:$0x1]
      %v611 = vsel %vm567, %v541, %v610
      %612 = vst [vmem:[%s558 + $0x3c] sm:$0x1] %v611
      %v613 = vld [vmem:[%s4] sm:$0x1]
      %v615 = vperm.slane %v613, 0
      %vm617 = vcmask 261120
      %618 = vst.msk [vmem:[#allocation3] sm:$0xff] %vm617, %v615
      %619 = vst.msk [vmem:[#allocation3 + $0x8] sm:$0xff] %vm617, %v615
      %620 = vst.msk [vmem:[#allocation3 + $0x10] sm:$0xff] %vm617, %v615
      %621 = vst.msk [vmem:[#allocation3 + $0x18] sm:$0xff] %vm617, %v615
      %622 = vst.msk [vmem:[#allocation3 + $0x20] sm:$0xff] %vm617, %v615
      %623 = vst.msk [vmem:[#allocation3 + $0x28] sm:$0xff] %vm617, %v615
      %624 = vst.msk [vmem:[#allocation3 + $0x30] sm:$0xff] %vm617, %v615
      %625 = vst.msk [vmem:[#allocation3 + $0x38] sm:$0xff] %vm617, %v615
      %v626 = vld [vmem:[#allocation2] sm:$0xf]
      %v627 = vld [vmem:[#allocation2 + $0x8] sm:$0xf]
      %v628 = vld [vmem:[#allocation2 + $0x10] sm:$0xf]
      %v629 = vld [vmem:[#allocation2 + $0x18] sm:$0xf]
      %v630 = vld [vmem:[#allocation2 + $0x20] sm:$0xf]
      %v631 = vld [vmem:[#allocation2 + $0x28] sm:$0xf]
      %v632 = vld [vmem:[#allocation2 + $0x30] sm:$0xf]
      %v633 = vld [vmem:[#allocation2 + $0x38] sm:$0xf]
      %v634 = vld [vmem:[#allocation3] sm:$0xff]
      %v635 = vld [vmem:[#allocation3 + $0x8] sm:$0xff]
      %v636 = vld [vmem:[#allocation3 + $0x10] sm:$0xff]
      %v637 = vld [vmem:[#allocation3 + $0x18] sm:$0xff]
      %v638 = vld [vmem:[#allocation3 + $0x20] sm:$0xff]
      %v639 = vld [vmem:[#allocation3 + $0x28] sm:$0xff]
      %v640 = vld [vmem:[#allocation3 + $0x30] sm:$0xff]
      %v641 = vld [vmem:[#allocation3 + $0x38] sm:$0xff]
      %v642 = vld [vmem:[%s3] sm:$0xf]
      %v643 = vld [vmem:[%s3 + $0x4] sm:$0xf]
      %v644 = vld [vmem:[%s3 + $0x8] sm:$0xf]
      %v645 = vld [vmem:[%s3 + $0xc] sm:$0xf]
      %v654 = vunpack.c.l.b16 %v626
      %v655 = vunpack.c.l.b16 %v627
      %v656 = vunpack.c.l.b16 %v628
      %v657 = vunpack.c.l.b16 %v629
      %v658 = vunpack.c.l.b16 %v630
      %v659 = vunpack.c.l.b16 %v631
      %v660 = vunpack.c.l.b16 %v632
      %v661 = vunpack.c.l.b16 %v633
      %v662 = vpack.c.b16 %v655, %v654
      %v663 = vpack.c.b16 %v657, %v656
      %v664 = vpack.c.b16 %v659, %v658
      %v665 = vpack.c.b16 %v661, %v660
      %v670 = vunpack.c.l.b16 %v642
      %v671 = vunpack.c.l.b16 %v643
      %v672 = vunpack.c.l.b16 %v644
      %v673 = vunpack.c.l.b16 %v645
      %v674 = vpack.c.b16 %v671, %v670
      %v675 = vpack.c.b16 %v673, %v672
      %v679 = vsel %vm617, %v662, 0
      %v682 = vsel %vm617, %v663, 0
      %v685 = vsel %vm617, %v664, 0
      %v688 = vsel %vm617, %v665, 0
      %690 = vmatpush.bf16.msra.mxu0 0
      %691 = vmatpush.bf16.msra.mxu0 0
      %692 = vmatpush.bf16.msra.mxu0 0
      %693 = vmatpush.bf16.msra.mxu0 0
      %694 = vmatpush.bf16.msra.mxu0 0
      %695 = vmatpush.bf16.msra.mxu0 0
      %696 = vmatpush.bf16.msra.mxu0 %v675
      %697 = vmatpush.bf16.msra.mxu0 %v674
      %698 = vmatmul.bf16.gmra.mxu0 %v679
      %v699 = vpop.f32.mrf.mxu0
      %v700 = vadd.f32 0.0, %v699
      %v701 = vpop.f32.mrf.mxu0
      %v702 = vadd.f32 0.0, %v701
      %703 = vmatmul.bf16.gmra.mxu0 %v682
      %v704 = vpop.f32.mrf.mxu0
      %v705 = vadd.f32 0.0, %v704
      %v706 = vpop.f32.mrf.mxu0
      %v707 = vadd.f32 0.0, %v706
      %708 = vmatmul.bf16.gmra.mxu0 %v685
      %v709 = vpop.f32.mrf.mxu0
      %v710 = vadd.f32 0.0, %v709
      %v711 = vpop.f32.mrf.mxu0
      %v712 = vadd.f32 0.0, %v711
      %713 = vmatmul.bf16.gmra.mxu0 %v688
      %v714 = vpop.f32.mrf.mxu0
      %v715 = vadd.f32 0.0, %v714
      %v716 = vpop.f32.mrf.mxu0
      %v717 = vadd.f32 0.0, %v716
      %718 = vdwg.mxu0
      %v719 = vadd.f32 %v634, %v700
      %v720 = vadd.f32 %v635, %v702
      %v721 = vadd.f32 %v636, %v705
      %v722 = vadd.f32 %v637, %v707
      %v723 = vadd.f32 %v638, %v710
      %v724 = vadd.f32 %v639, %v712
      %v725 = vadd.f32 %v640, %v715
      %v726 = vadd.f32 %v641, %v717
      %727 = vst.msk [vmem:[#allocation3] sm:$0xff] %vm617, %v719
      %728 = vst.msk [vmem:[#allocation3 + $0x8] sm:$0xff] %vm617, %v720
      %729 = vst.msk [vmem:[#allocation3 + $0x10] sm:$0xff] %vm617, %v721
      %730 = vst.msk [vmem:[#allocation3 + $0x18] sm:$0xff] %vm617, %v722
      %731 = vst.msk [vmem:[#allocation3 + $0x20] sm:$0xff] %vm617, %v723
      %732 = vst.msk [vmem:[#allocation3 + $0x28] sm:$0xff] %vm617, %v724
      %733 = vst.msk [vmem:[#allocation3 + $0x30] sm:$0xff] %vm617, %v725
      %734 = vst.msk [vmem:[#allocation3 + $0x38] sm:$0xff] %vm617, %v726
      %v735 = vld [vmem:[#allocation2] sm:$0xf]
      %v736 = vld [vmem:[#allocation2 + $0x4] sm:$0x1]
      %v737 = vld [vmem:[#allocation2 + $0x8] sm:$0xf]
      %v738 = vld [vmem:[#allocation2 + $0xc] sm:$0x1]
      %v739 = vld [vmem:[#allocation2 + $0x10] sm:$0xf]
      %v740 = vld [vmem:[#allocation2 + $0x14] sm:$0x1]
      %v741 = vld [vmem:[#allocation2 + $0x18] sm:$0xf]
      %v742 = vld [vmem:[#allocation2 + $0x1c] sm:$0x1]
      %v743 = vld [vmem:[#allocation2 + $0x20] sm:$0xf]
      %v744 = vld [vmem:[#allocation2 + $0x24] sm:$0x1]
      %v745 = vld [vmem:[#allocation2 + $0x28] sm:$0xf]
      %v746 = vld [vmem:[#allocation2 + $0x2c] sm:$0x1]
      %v747 = vld [vmem:[#allocation2 + $0x30] sm:$0xf]
      %v748 = vld [vmem:[#allocation2 + $0x34] sm:$0x1]
      %v749 = vld [vmem:[#allocation2 + $0x38] sm:$0xf]
      %v750 = vld [vmem:[#allocation2 + $0x3c] sm:$0x1]
      %v751 = vld [vmem:[#allocation3] sm:$0xff]
      %v752 = vld [vmem:[#allocation3 + $0x8] sm:$0xff]
      %v753 = vld [vmem:[#allocation3 + $0x10] sm:$0xff]
      %v754 = vld [vmem:[#allocation3 + $0x18] sm:$0xff]
      %v755 = vld [vmem:[#allocation3 + $0x20] sm:$0xff]
      %v756 = vld [vmem:[#allocation3 + $0x28] sm:$0xff]
      %v757 = vld [vmem:[#allocation3 + $0x30] sm:$0xff]
      %v758 = vld [vmem:[#allocation3 + $0x38] sm:$0xff]
      %vm759 = vsmask.f32 3328
      %vm760 = vsmask.f32 7440
      %vm761 = vmor %vm759, %vm760
      %v763 = vshrl.u32 %v735, 16
      %v765 = vrot.slane %v763, 4
      %v766 = vshll.u32 %v735, 16
      %v768 = vrot.slane %v766, 5
      %v769 = vor.u32 %v765, %v768
      %v770 = vrot.slane %v769, 4
      %v772 = vshll.u32 %v736, 16
      %v774 = vrot.slane %v772, 5
      %v775 = vsel %vm761, %v770, %v774
      %v777 = vshrl.u32 %v737, 16
      %v779 = vrot.slane %v777, 4
      %v780 = vshll.u32 %v737, 16
      %v782 = vrot.slane %v780, 5
      %v783 = vor.u32 %v779, %v782
      %v784 = vrot.slane %v783, 4
      %v786 = vshll.u32 %v738, 16
      %v788 = vrot.slane %v786, 5
      %v789 = vsel %vm761, %v784, %v788
      %v791 = vshrl.u32 %v739, 16
      %v793 = vrot.slane %v791, 4
      %v794 = vshll.u32 %v739, 16
      %v796 = vrot.slane %v794, 5
      %v797 = vor.u32 %v793, %v796
      %v798 = vrot.slane %v797, 4
      %v800 = vshll.u32 %v740, 16
      %v802 = vrot.slane %v800, 5
      %v803 = vsel %vm761, %v798, %v802
      %v805 = vshrl.u32 %v741, 16
      %v807 = vrot.slane %v805, 4
      %v808 = vshll.u32 %v741, 16
      %v810 = vrot.slane %v808, 5
      %v811 = vor.u32 %v807, %v810
      %v812 = vrot.slane %v811, 4
      %v814 = vshll.u32 %v742, 16
      %v816 = vrot.slane %v814, 5
      %v817 = vsel %vm761, %v812, %v816
      %v819 = vshrl.u32 %v743, 16
      %v821 = vrot.slane %v819, 4
      %v822 = vshll.u32 %v743, 16
      %v824 = vrot.slane %v822, 5
      %v825 = vor.u32 %v821, %v824
      %v826 = vrot.slane %v825, 4
      %v828 = vshll.u32 %v744, 16
      %v830 = vrot.slane %v828, 5
      %v831 = vsel %vm761, %v826, %v830
      %v833 = vshrl.u32 %v745, 16
      %v835 = vrot.slane %v833, 4
      %v836 = vshll.u32 %v745, 16
      %v838 = vrot.slane %v836, 5
      %v839 = vor.u32 %v835, %v838
      %v840 = vrot.slane %v839, 4
      %v842 = vshll.u32 %v746, 16
      %v844 = vrot.slane %v842, 5
      %v845 = vsel %vm761, %v840, %v844
      %v847 = vshrl.u32 %v747, 16
      %v849 = vrot.slane %v847, 4
      %v850 = vshll.u32 %v747, 16
      %v852 = vrot.slane %v850, 5
      %v853 = vor.u32 %v849, %v852
      %v854 = vrot.slane %v853, 4
      %v856 = vshll.u32 %v748, 16
      %v858 = vrot.slane %v856, 5
      %v859 = vsel %vm761, %v854, %v858
      %v861 = vshrl.u32 %v749, 16
      %v863 = vrot.slane %v861, 4
      %v864 = vshll.u32 %v749, 16
      %v866 = vrot.slane %v864, 5
      %v867 = vor.u32 %v863, %v866
      %v868 = vrot.slane %v867, 4
      %v870 = vshll.u32 %v750, 16
      %v872 = vrot.slane %v870, 5
      %v873 = vsel %vm761, %v868, %v872
      %s874 = scalar_lea.vmem %s3, 16
      %v875 = vld [vmem:[%s874] sm:$0xf]
      %v876 = vld [vmem:[%s874 + $0x4] sm:$0xf]
      %v877 = vld [vmem:[%s874 + $0x8] sm:$0xf]
      %v878 = vld [vmem:[%s874 + $0xc] sm:$0xf]
      %v879 = vunpack.c.l.b16 %v775
      %v880 = vunpack.c.l.b16 %v789
      %v881 = vunpack.c.l.b16 %v803
      %v882 = vunpack.c.l.b16 %v817
      %v883 = vunpack.c.l.b16 %v831
      %v884 = vunpack.c.l.b16 %v845
      %v885 = vunpack.c.l.b16 %v859
      %v886 = vunpack.c.l.b16 %v873
      %v887 = vpack.c.b16 %v880, %v879
      %v888 = vpack.c.b16 %v882, %v881
      %v889 = vpack.c.b16 %v884, %v883
      %v890 = vpack.c.b16 %v886, %v885
      %v895 = vunpack.c.l.b16 %v875
      %v896 = vunpack.c.l.b16 %v876
      %v897 = vunpack.c.l.b16 %v877
      %v898 = vunpack.c.l.b16 %v878
      %v899 = vpack.c.b16 %v896, %v895
      %v900 = vpack.c.b16 %v898, %v897
      %v904 = vsel %vm617, %v887, 0
      %v907 = vsel %vm617, %v888, 0
      %v910 = vsel %vm617, %v889, 0
      %v913 = vsel %vm617, %v890, 0
      %915 = vmatpush.bf16.msra.mxu0 0
      %916 = vmatpush.bf16.msra.mxu0 0
      %917 = vmatpush.bf16.msra.mxu0 0
      %918 = vmatpush.bf16.msra.mxu0 0
      %919 = vmatpush.bf16.msra.mxu0 0
      %920 = vmatpush.bf16.msra.mxu0 0
      %921 = vmatpush.bf16.msra.mxu0 %v900
      %922 = vmatpush.bf16.msra.mxu0 %v899
      %923 = vmatmul.bf16.gmra.mxu0 %v904
      %v924 = vpop.f32.mrf.mxu0
      %v925 = vadd.f32 0.0, %v924
      %v926 = vpop.f32.mrf.mxu0
      %v927 = vadd.f32 0.0, %v926
      %928 = vmatmul.bf16.gmra.mxu0 %v907
      %v929 = vpop.f32.mrf.mxu0
      %v930 = vadd.f32 0.0, %v929
      %v931 = vpop.f32.mrf.mxu0
      %v932 = vadd.f32 0.0, %v931
      %933 = vmatmul.bf16.gmra.mxu0 %v910
      %v934 = vpop.f32.mrf.mxu0
      %v935 = vadd.f32 0.0, %v934
      %v936 = vpop.f32.mrf.mxu0
      %v937 = vadd.f32 0.0, %v936
      %938 = vmatmul.bf16.gmra.mxu0 %v913
      %v939 = vpop.f32.mrf.mxu0
      %v940 = vadd.f32 0.0, %v939
      %v941 = vpop.f32.mrf.mxu0
      %v942 = vadd.f32 0.0, %v941
      %943 = vdwg.mxu0
      %v944 = vadd.f32 %v751, %v925
      %v945 = vadd.f32 %v752, %v927
      %v946 = vadd.f32 %v753, %v930
      %v947 = vadd.f32 %v754, %v932
      %v948 = vadd.f32 %v755, %v935
      %v949 = vadd.f32 %v756, %v937
      %v950 = vadd.f32 %v757, %v940
      %v951 = vadd.f32 %v758, %v942
      %952 = vst.msk [vmem:[#allocation3] sm:$0xff] %vm617, %v944
      %953 = vst.msk [vmem:[#allocation3 + $0x8] sm:$0xff] %vm617, %v945
      %954 = vst.msk [vmem:[#allocation3 + $0x10] sm:$0xff] %vm617, %v946
      %955 = vst.msk [vmem:[#allocation3 + $0x18] sm:$0xff] %vm617, %v947
      %956 = vst.msk [vmem:[#allocation3 + $0x20] sm:$0xff] %vm617, %v948
      %957 = vst.msk [vmem:[#allocation3 + $0x28] sm:$0xff] %vm617, %v949
      %958 = vst.msk [vmem:[#allocation3 + $0x30] sm:$0xff] %vm617, %v950
      %959 = vst.msk [vmem:[#allocation3 + $0x38] sm:$0xff] %vm617, %v951
      %v960 = vld [vmem:[#allocation2] sm:$0xe]
      %v961 = vld [vmem:[#allocation2 + $0x4] sm:$0x1]
      %v962 = vld [vmem:[#allocation2 + $0x8] sm:$0xe]
      %v963 = vld [vmem:[#allocation2 + $0xc] sm:$0x1]
      %v964 = vld [vmem:[#allocation2 + $0x10] sm:$0xe]
      %v965 = vld [vmem:[#allocation2 + $0x14] sm:$0x1]
      %v966 = vld [vmem:[#allocation2 + $0x18] sm:$0xe]
      %v967 = vld [vmem:[#allocation2 + $0x1c] sm:$0x1]
      %v968 = vld [vmem:[#allocation2 + $0x20] sm:$0xe]
      %v969 = vld [vmem:[#allocation2 + $0x24] sm:$0x1]
      %v970 = vld [vmem:[#allocation2 + $0x28] sm:$0xe]
      %v971 = vld [vmem:[#allocation2 + $0x2c] sm:$0x1]
      %v972 = vld [vmem:[#allocation2 + $0x30] sm:$0xe]
      %v973 = vld [vmem:[#allocation2 + $0x34] sm:$0x1]
      %v974 = vld [vmem:[#allocation2 + $0x38] sm:$0xe]
      %v975 = vld [vmem:[#allocation2 + $0x3c] sm:$0x1]
      %v976 = vld [vmem:[#allocation3] sm:$0xff]
      %v977 = vld [vmem:[#allocation3 + $0x8] sm:$0xff]
      %v978 = vld [vmem:[#allocation3 + $0x10] sm:$0xff]
      %v979 = vld [vmem:[#allocation3 + $0x18] sm:$0xff]
      %v980 = vld [vmem:[#allocation3 + $0x20] sm:$0xff]
      %v981 = vld [vmem:[#allocation3 + $0x28] sm:$0xff]
      %v982 = vld [vmem:[#allocation3 + $0x30] sm:$0xff]
      %v983 = vld [vmem:[#allocation3 + $0x38] sm:$0xff]
      %vm1000 = vcmask 1042432
      %vm1001 = vcmask 1046532
      %vm1002 = vmor %vm1000, %vm1001
      %v1003 = vrot.slane %v960, 5
      %v1004 = vrot.slane %v1003, 4
      %v1005 = vrot.slane %v961, 5
      %v1006 = vsel %vm1002, %v1004, %v1005
      %v1007 = vrot.slane %v962, 5
      %v1008 = vrot.slane %v1007, 4
      %v1009 = vrot.slane %v963, 5
      %v1010 = vsel %vm1002, %v1008, %v1009
      %v1011 = vrot.slane %v964, 5
      %v1012 = vrot.slane %v1011, 4
      %v1013 = vrot.slane %v965, 5
      %v1014 = vsel %vm1002, %v1012, %v1013
      %v1015 = vrot.slane %v966, 5
      %v1016 = vrot.slane %v1015, 4
      %v1017 = vrot.slane %v967, 5
      %v1018 = vsel %vm1002, %v1016, %v1017
      %v1019 = vrot.slane %v968, 5
      %v1020 = vrot.slane %v1019, 4
      %v1021 = vrot.slane %v969, 5
      %v1022 = vsel %vm1002, %v1020, %v1021
      %v1023 = vrot.slane %v970, 5
      %v1024 = vrot.slane %v1023, 4
      %v1025 = vrot.slane %v971, 5
      %v1026 = vsel %vm1002, %v1024, %v1025
      %v1027 = vrot.slane %v972, 5
      %v1028 = vrot.slane %v1027, 4
      %v1029 = vrot.slane %v973, 5
      %v1030 = vsel %vm1002, %v1028, %v1029
      %v1031 = vrot.slane %v974, 5
      %v1032 = vrot.slane %v1031, 4
      %v1033 = vrot.slane %v975, 5
      %v1034 = vsel %vm1002, %v1032, %v1033
      %s1035 = scalar_lea.vmem %s3, 32
      %v1036 = vld [vmem:[%s1035] sm:$0xf]
      %v1037 = vld [vmem:[%s1035 + $0x4] sm:$0xf]
      %v1038 = vld [vmem:[%s1035 + $0x8] sm:$0xf]
      %v1039 = vld [vmem:[%s1035 + $0xc] sm:$0xf]
      %v1040 = vunpack.c.l.b16 %v1006
      %v1041 = vunpack.c.l.b16 %v1010
      %v1042 = vunpack.c.l.b16 %v1014
      %v1043 = vunpack.c.l.b16 %v1018
      %v1044 = vunpack.c.l.b16 %v1022
      %v1045 = vunpack.c.l.b16 %v1026
      %v1046 = vunpack.c.l.b16 %v1030
      %v1047 = vunpack.c.l.b16 %v1034
      %v1048 = vpack.c.b16 %v1041, %v1040
      %v1049 = vpack.c.b16 %v1043, %v1042
      %v1050 = vpack.c.b16 %v1045, %v1044
      %v1051 = vpack.c.b16 %v1047, %v1046
      %v1056 = vunpack.c.l.b16 %v1036
      %v1057 = vunpack.c.l.b16 %v1037
      %v1058 = vunpack.c.l.b16 %v1038
      %v1059 = vunpack.c.l.b16 %v1039
      %v1060 = vpack.c.b16 %v1057, %v1056
      %v1061 = vpack.c.b16 %v1059, %v1058
      %v1065 = vsel %vm617, %v1048, 0
      %v1068 = vsel %vm617, %v1049, 0
      %v1071 = vsel %vm617, %v1050, 0
      %v1074 = vsel %vm617, %v1051, 0
      %1076 = vmatpush.bf16.msra.mxu0 0
      %1077 = vmatpush.bf16.msra.mxu0 0
      %1078 = vmatpush.bf16.msra.mxu0 0
      %1079 = vmatpush.bf16.msra.mxu0 0
      %1080 = vmatpush.bf16.msra.mxu0 0
      %1081 = vmatpush.bf16.msra.mxu0 0
      %1082 = vmatpush.bf16.msra.mxu0 %v1061
      %1083 = vmatpush.bf16.msra.mxu0 %v1060
      %1084 = vmatmul.bf16.gmra.mxu0 %v1065
      %v1085 = vpop.f32.mrf.mxu0
      %v1086 = vadd.f32 0.0, %v1085
      %v1087 = vpop.f32.mrf.mxu0
      %v1088 = vadd.f32 0.0, %v1087
      %1089 = vmatmul.bf16.gmra.mxu0 %v1068
      %v1090 = vpop.f32.mrf.mxu0
      %v1091 = vadd.f32 0.0, %v1090
      %v1092 = vpop.f32.mrf.mxu0
      %v1093 = vadd.f32 0.0, %v1092
      %1094 = vmatmul.bf16.gmra.mxu0 %v1071
      %v1095 = vpop.f32.mrf.mxu0
      %v1096 = vadd.f32 0.0, %v1095
      %v1097 = vpop.f32.mrf.mxu0
      %v1098 = vadd.f32 0.0, %v1097
      %1099 = vmatmul.bf16.gmra.mxu0 %v1074
      %v1100 = vpop.f32.mrf.mxu0
      %v1101 = vadd.f32 0.0, %v1100
      %v1102 = vpop.f32.mrf.mxu0
      %v1103 = vadd.f32 0.0, %v1102
      %1104 = vdwg.mxu0
      %v1105 = vadd.f32 %v976, %v1086
      %v1106 = vadd.f32 %v977, %v1088
      %v1107 = vadd.f32 %v978, %v1091
      %v1108 = vadd.f32 %v979, %v1093
      %v1109 = vadd.f32 %v980, %v1096
      %v1110 = vadd.f32 %v981, %v1098
      %v1111 = vadd.f32 %v982, %v1101
      %v1112 = vadd.f32 %v983, %v1103
      %1113 = vst.msk [vmem:[#allocation3] sm:$0xff] %vm617, %v1105
      %1114 = vst.msk [vmem:[#allocation3 + $0x8] sm:$0xff] %vm617, %v1106
      %1115 = vst.msk [vmem:[#allocation3 + $0x10] sm:$0xff] %vm617, %v1107
      %1116 = vst.msk [vmem:[#allocation3 + $0x18] sm:$0xff] %vm617, %v1108
      %1117 = vst.msk [vmem:[#allocation3 + $0x20] sm:$0xff] %vm617, %v1109
      %1118 = vst.msk [vmem:[#allocation3 + $0x28] sm:$0xff] %vm617, %v1110
      %1119 = vst.msk [vmem:[#allocation3 + $0x30] sm:$0xff] %vm617, %v1111
      %1120 = vst.msk [vmem:[#allocation3 + $0x38] sm:$0xff] %vm617, %v1112
      %v1121 = vld [vmem:[%s558] sm:$0xf]
      %v1122 = vld [vmem:[%s558 + $0x8] sm:$0xf]
      %v1123 = vld [vmem:[%s558 + $0x10] sm:$0xf]
      %v1124 = vld [vmem:[%s558 + $0x18] sm:$0xf]
      %v1125 = vld [vmem:[%s558 + $0x20] sm:$0xf]
      %v1126 = vld [vmem:[%s558 + $0x28] sm:$0xf]
      %v1127 = vld [vmem:[%s558 + $0x30] sm:$0xf]
      %v1128 = vld [vmem:[%s558 + $0x38] sm:$0xf]
      %v1129 = vld [vmem:[#allocation3] sm:$0xff]
      %v1130 = vld [vmem:[#allocation3 + $0x8] sm:$0xff]
      %v1131 = vld [vmem:[#allocation3 + $0x10] sm:$0xff]
      %v1132 = vld [vmem:[#allocation3 + $0x18] sm:$0xff]
      %v1133 = vld [vmem:[#allocation3 + $0x20] sm:$0xff]
      %v1134 = vld [vmem:[#allocation3 + $0x28] sm:$0xff]
      %v1135 = vld [vmem:[#allocation3 + $0x30] sm:$0xff]
      %v1136 = vld [vmem:[#allocation3 + $0x38] sm:$0xff]
      %s1137 = scalar_lea.vmem %s3, 48
      %v1138 = vld [vmem:[%s1137] sm:$0xf]
      %v1139 = vld [vmem:[%s1137 + $0x4] sm:$0xf]
      %v1140 = vld [vmem:[%s1137 + $0x8] sm:$0xf]
      %v1141 = vld [vmem:[%s1137 + $0xc] sm:$0xf]
      %v1150 = vunpack.c.l.b16 %v1121
      %v1151 = vunpack.c.l.b16 %v1122
      %v1152 = vunpack.c.l.b16 %v1123
      %v1153 = vunpack.c.l.b16 %v1124
      %v1154 = vunpack.c.l.b16 %v1125
      %v1155 = vunpack.c.l.b16 %v1126
      %v1156 = vunpack.c.l.b16 %v1127
      %v1157 = vunpack.c.l.b16 %v1128
      %v1158 = vpack.c.b16 %v1151, %v1150
      %v1159 = vpack.c.b16 %v1153, %v1152
      %v1160 = vpack.c.b16 %v1155, %v1154
      %v1161 = vpack.c.b16 %v1157, %v1156
      %v1166 = vunpack.c.l.b16 %v1138
      %v1167 = vunpack.c.l.b16 %v1139
      %v1168 = vunpack.c.l.b16 %v1140
      %v1169 = vunpack.c.l.b16 %v1141
      %v1170 = vpack.c.b16 %v1167, %v1166
      %v1171 = vpack.c.b16 %v1169, %v1168
      %v1175 = vsel %vm617, %v1158, 0
      %v1178 = vsel %vm617, %v1159, 0
      %v1181 = vsel %vm617, %v1160, 0
      %v1184 = vsel %vm617, %v1161, 0
      %1186 = vmatpush.bf16.msra.mxu0 0
      %1187 = vmatpush.bf16.msra.mxu0 0
      %1188 = vmatpush.bf16.msra.mxu0 0
      %1189 = vmatpush.bf16.msra.mxu0 0
      %1190 = vmatpush.bf16.msra.mxu0 0
      %1191 = vmatpush.bf16.msra.mxu0 0
      %1192 = vmatpush.bf16.msra.mxu0 %v1171
      %1193 = vmatpush.bf16.msra.mxu0 %v1170
      %1194 = vmatmul.bf16.gmra.mxu0 %v1175
      %v1195 = vpop.f32.mrf.mxu0
      %v1196 = vadd.f32 0.0, %v1195
      %v1197 = vpop.f32.mrf.mxu0
      %v1198 = vadd.f32 0.0, %v1197
      %1199 = vmatmul.bf16.gmra.mxu0 %v1178
      %v1200 = vpop.f32.mrf.mxu0
      %v1201 = vadd.f32 0.0, %v1200
      %v1202 = vpop.f32.mrf.mxu0
      %v1203 = vadd.f32 0.0, %v1202
      %1204 = vmatmul.bf16.gmra.mxu0 %v1181
      %v1205 = vpop.f32.mrf.mxu0
      %v1206 = vadd.f32 0.0, %v1205
      %v1207 = vpop.f32.mrf.mxu0
      %v1208 = vadd.f32 0.0, %v1207
      %1209 = vmatmul.bf16.gmra.mxu0 %v1184
      %v1210 = vpop.f32.mrf.mxu0
      %v1211 = vadd.f32 0.0, %v1210
      %v1212 = vpop.f32.mrf.mxu0
      %v1213 = vadd.f32 0.0, %v1212
      %1214 = vdwg.mxu0
      %v1215 = vadd.f32 %v1129, %v1196
      %v1216 = vadd.f32 %v1130, %v1198
      %v1217 = vadd.f32 %v1131, %v1201
      %v1218 = vadd.f32 %v1132, %v1203
      %v1219 = vadd.f32 %v1133, %v1206
      %v1220 = vadd.f32 %v1134, %v1208
      %v1221 = vadd.f32 %v1135, %v1211
      %v1222 = vadd.f32 %v1136, %v1213
      %1223 = vst.msk [vmem:[#allocation3] sm:$0xff] %vm617, %v1215
      %1224 = vst.msk [vmem:[#allocation3 + $0x8] sm:$0xff] %vm617, %v1216
      %1225 = vst.msk [vmem:[#allocation3 + $0x10] sm:$0xff] %vm617, %v1217
      %1226 = vst.msk [vmem:[#allocation3 + $0x18] sm:$0xff] %vm617, %v1218
      %1227 = vst.msk [vmem:[#allocation3 + $0x20] sm:$0xff] %vm617, %v1219
      %1228 = vst.msk [vmem:[#allocation3 + $0x28] sm:$0xff] %vm617, %v1220
      %1229 = vst.msk [vmem:[#allocation3 + $0x30] sm:$0xff] %vm617, %v1221
      %1230 = vst.msk [vmem:[#allocation3 + $0x38] sm:$0xff] %vm617, %v1222
      %v1231 = vld [vmem:[%s558] sm:$0xf]
      %v1232 = vld [vmem:[%s558 + $0x4] sm:$0x1]
      %v1233 = vld [vmem:[%s558 + $0x8] sm:$0xf]
      %v1234 = vld [vmem:[%s558 + $0xc] sm:$0x1]
      %v1235 = vld [vmem:[%s558 + $0x10] sm:$0xf]
      %v1236 = vld [vmem:[%s558 + $0x14] sm:$0x1]
      %v1237 = vld [vmem:[%s558 + $0x18] sm:$0xf]
      %v1238 = vld [vmem:[%s558 + $0x1c] sm:$0x1]
      %v1239 = vld [vmem:[%s558 + $0x20] sm:$0xf]
      %v1240 = vld [vmem:[%s558 + $0x24] sm:$0x1]
      %v1241 = vld [vmem:[%s558 + $0x28] sm:$0xf]
      %v1242 = vld [vmem:[%s558 + $0x2c] sm:$0x1]
      %v1243 = vld [vmem:[%s558 + $0x30] sm:$0xf]
      %v1244 = vld [vmem:[%s558 + $0x34] sm:$0x1]
      %v1245 = vld [vmem:[%s558 + $0x38] sm:$0xf]
      %v1246 = vld [vmem:[%s558 + $0x3c] sm:$0x1]
      %v1247 = vld [vmem:[#allocation3] sm:$0xff]
      %v1248 = vld [vmem:[#allocation3 + $0x8] sm:$0xff]
      %v1249 = vld [vmem:[#allocation3 + $0x10] sm:$0xff]
      %v1250 = vld [vmem:[#allocation3 + $0x18] sm:$0xff]
      %v1251 = vld [vmem:[#allocation3 + $0x20] sm:$0xff]
      %v1252 = vld [vmem:[#allocation3 + $0x28] sm:$0xff]
      %v1253 = vld [vmem:[#allocation3 + $0x30] sm:$0xff]
      %v1254 = vld [vmem:[#allocation3 + $0x38] sm:$0xff]
      %v1256 = vshrl.u32 %v1231, 16
      %v1258 = vrot.slane %v1256, 4
      %v1259 = vshll.u32 %v1231, 16
      %v1261 = vrot.slane %v1259, 5
      %v1262 = vor.u32 %v1258, %v1261
      %v1263 = vrot.slane %v1262, 4
      %v1265 = vshll.u32 %v1232, 16
      %v1267 = vrot.slane %v1265, 5
      %v1268 = vsel %vm761, %v1263, %v1267
      %v1270 = vshrl.u32 %v1233, 16
      %v1272 = vrot.slane %v1270, 4
      %v1273 = vshll.u32 %v1233, 16
      %v1275 = vrot.slane %v1273, 5
      %v1276 = vor.u32 %v1272, %v1275
      %v1277 = vrot.slane %v1276, 4
      %v1279 = vshll.u32 %v1234, 16
      %v1281 = vrot.slane %v1279, 5
      %v1282 = vsel %vm761, %v1277, %v1281
      %v1284 = vshrl.u32 %v1235, 16
      %v1286 = vrot.slane %v1284, 4
      %v1287 = vshll.u32 %v1235, 16
      %v1289 = vrot.slane %v1287, 5
      %v1290 = vor.u32 %v1286, %v1289
      %v1291 = vrot.slane %v1290, 4
      %v1293 = vshll.u32 %v1236, 16
      %v1295 = vrot.slane %v1293, 5
      %v1296 = vsel %vm761, %v1291, %v1295
      %v1298 = vshrl.u32 %v1237, 16
      %v1300 = vrot.slane %v1298, 4
      %v1301 = vshll.u32 %v1237, 16
      %v1303 = vrot.slane %v1301, 5
      %v1304 = vor.u32 %v1300, %v1303
      %v1305 = vrot.slane %v1304, 4
      %v1307 = vshll.u32 %v1238, 16
      %v1309 = vrot.slane %v1307, 5
      %v1310 = vsel %vm761, %v1305, %v1309
      %v1312 = vshrl.u32 %v1239, 16
      %v1314 = vrot.slane %v1312, 4
      %v1315 = vshll.u32 %v1239, 16
      %v1317 = vrot.slane %v1315, 5
      %v1318 = vor.u32 %v1314, %v1317
      %v1319 = vrot.slane %v1318, 4
      %v1321 = vshll.u32 %v1240, 16
      %v1323 = vrot.slane %v1321, 5
      %v1324 = vsel %vm761, %v1319, %v1323
      %v1326 = vshrl.u32 %v1241, 16
      %v1328 = vrot.slane %v1326, 4
      %v1329 = vshll.u32 %v1241, 16
      %v1331 = vrot.slane %v1329, 5
      %v1332 = vor.u32 %v1328, %v1331
      %v1333 = vrot.slane %v1332, 4
      %v1335 = vshll.u32 %v1242, 16
      %v1337 = vrot.slane %v1335, 5
      %v1338 = vsel %vm761, %v1333, %v1337
      %v1340 = vshrl.u32 %v1243, 16
      %v1342 = vrot.slane %v1340, 4
      %v1343 = vshll.u32 %v1243, 16
      %v1345 = vrot.slane %v1343, 5
      %v1346 = vor.u32 %v1342, %v1345
      %v1347 = vrot.slane %v1346, 4
      %v1349 = vshll.u32 %v1244, 16
      %v1351 = vrot.slane %v1349, 5
      %v1352 = vsel %vm761, %v1347, %v1351
      %v1354 = vshrl.u32 %v1245, 16
      %v1356 = vrot.slane %v1354, 4
      %v1357 = vshll.u32 %v1245, 16
      %v1359 = vrot.slane %v1357, 5
      %v1360 = vor.u32 %v1356, %v1359
      %v1361 = vrot.slane %v1360, 4
      %v1363 = vshll.u32 %v1246, 16
      %v1365 = vrot.slane %v1363, 5
      %v1366 = vsel %vm761, %v1361, %v1365
      %s1367 = scalar_lea.vmem %s3, 64
      %v1368 = vld [vmem:[%s1367] sm:$0xf]
      %v1369 = vld [vmem:[%s1367 + $0x4] sm:$0xf]
      %v1370 = vld [vmem:[%s1367 + $0x8] sm:$0xf]
      %v1371 = vld [vmem:[%s1367 + $0xc] sm:$0xf]
      %v1372 = vunpack.c.l.b16 %v1268
      %v1373 = vunpack.c.l.b16 %v1282
      %v1374 = vunpack.c.l.b16 %v1296
      %v1375 = vunpack.c.l.b16 %v1310
      %v1376 = vunpack.c.l.b16 %v1324
      %v1377 = vunpack.c.l.b16 %v1338
      %v1378 = vunpack.c.l.b16 %v1352
      %v1379 = vunpack.c.l.b16 %v1366
      %v1380 = vpack.c.b16 %v1373, %v1372
      %v1381 = vpack.c.b16 %v1375, %v1374
      %v1382 = vpack.c.b16 %v1377, %v1376
      %v1383 = vpack.c.b16 %v1379, %v1378
      %v1388 = vunpack.c.l.b16 %v1368
      %v1389 = vunpack.c.l.b16 %v1369
      %v1390 = vunpack.c.l.b16 %v1370
      %v1391 = vunpack.c.l.b16 %v1371
      %v1392 = vpack.c.b16 %v1389, %v1388
      %v1393 = vpack.c.b16 %v1391, %v1390
      %v1397 = vsel %vm617, %v1380, 0
      %v1400 = vsel %vm617, %v1381, 0
      %v1403 = vsel %vm617, %v1382, 0
      %v1406 = vsel %vm617, %v1383, 0
      %1408 = vmatpush.bf16.msra.mxu0 0
      %1409 = vmatpush.bf16.msra.mxu0 0
      %1410 = vmatpush.bf16.msra.mxu0 0
      %1411 = vmatpush.bf16.msra.mxu0 0
      %1412 = vmatpush.bf16.msra.mxu0 0
      %1413 = vmatpush.bf16.msra.mxu0 0
      %1414 = vmatpush.bf16.msra.mxu0 %v1393
      %1415 = vmatpush.bf16.msra.mxu0 %v1392
      %1416 = vmatmul.bf16.gmra.mxu0 %v1397
      %v1417 = vpop.f32.mrf.mxu0
      %v1418 = vadd.f32 0.0, %v1417
      %v1419 = vpop.f32.mrf.mxu0
      %v1420 = vadd.f32 0.0, %v1419
      %1421 = vmatmul.bf16.gmra.mxu0 %v1400
      %v1422 = vpop.f32.mrf.mxu0
      %v1423 = vadd.f32 0.0, %v1422
      %v1424 = vpop.f32.mrf.mxu0
      %v1425 = vadd.f32 0.0, %v1424
      %1426 = vmatmul.bf16.gmra.mxu0 %v1403
      %v1427 = vpop.f32.mrf.mxu0
      %v1428 = vadd.f32 0.0, %v1427
      %v1429 = vpop.f32.mrf.mxu0
      %v1430 = vadd.f32 0.0, %v1429
      %1431 = vmatmul.bf16.gmra.mxu0 %v1406
      %v1432 = vpop.f32.mrf.mxu0
      %v1433 = vadd.f32 0.0, %v1432
      %v1434 = vpop.f32.mrf.mxu0
      %v1435 = vadd.f32 0.0, %v1434
      %1436 = vdwg.mxu0
      %v1437 = vadd.f32 %v1247, %v1418
      %v1438 = vadd.f32 %v1248, %v1420
      %v1439 = vadd.f32 %v1249, %v1423
      %v1440 = vadd.f32 %v1250, %v1425
      %v1441 = vadd.f32 %v1251, %v1428
      %v1442 = vadd.f32 %v1252, %v1430
      %v1443 = vadd.f32 %v1253, %v1433
      %v1444 = vadd.f32 %v1254, %v1435
      %1445 = vst.msk [vmem:[#allocation3] sm:$0xff] %vm617, %v1437
      %1446 = vst.msk [vmem:[#allocation3 + $0x8] sm:$0xff] %vm617, %v1438
      %1447 = vst.msk [vmem:[#allocation3 + $0x10] sm:$0xff] %vm617, %v1439
      %1448 = vst.msk [vmem:[#allocation3 + $0x18] sm:$0xff] %vm617, %v1440
      %1449 = vst.msk [vmem:[#allocation3 + $0x20] sm:$0xff] %vm617, %v1441
      %1450 = vst.msk [vmem:[#allocation3 + $0x28] sm:$0xff] %vm617, %v1442
      %1451 = vst.msk [vmem:[#allocation3 + $0x30] sm:$0xff] %vm617, %v1443
      %1452 = vst.msk [vmem:[#allocation3 + $0x38] sm:$0xff] %vm617, %v1444
      %v1453 = vld [vmem:[%s558] sm:$0xe]
      %v1454 = vld [vmem:[%s558 + $0x4] sm:$0x1]
      %v1455 = vld [vmem:[%s558 + $0x8] sm:$0xe]
      %v1456 = vld [vmem:[%s558 + $0xc] sm:$0x1]
      %v1457 = vld [vmem:[%s558 + $0x10] sm:$0xe]
      %v1458 = vld [vmem:[%s558 + $0x14] sm:$0x1]
      %v1459 = vld [vmem:[%s558 + $0x18] sm:$0xe]
      %v1460 = vld [vmem:[%s558 + $0x1c] sm:$0x1]
      %v1461 = vld [vmem:[%s558 + $0x20] sm:$0xe]
      %v1462 = vld [vmem:[%s558 + $0x24] sm:$0x1]
      %v1463 = vld [vmem:[%s558 + $0x28] sm:$0xe]
      %v1464 = vld [vmem:[%s558 + $0x2c] sm:$0x1]
      %v1465 = vld [vmem:[%s558 + $0x30] sm:$0xe]
      %v1466 = vld [vmem:[%s558 + $0x34] sm:$0x1]
      %v1467 = vld [vmem:[%s558 + $0x38] sm:$0xe]
      %v1468 = vld [vmem:[%s558 + $0x3c] sm:$0x1]
      %v1469 = vld [vmem:[#allocation3] sm:$0xff]
      %v1470 = vld [vmem:[#allocation3 + $0x8] sm:$0xff]
      %v1471 = vld [vmem:[#allocation3 + $0x10] sm:$0xff]
      %v1472 = vld [vmem:[#allocation3 + $0x18] sm:$0xff]
      %v1473 = vld [vmem:[#allocation3 + $0x20] sm:$0xff]
      %v1474 = vld [vmem:[#allocation3 + $0x28] sm:$0xff]
      %v1475 = vld [vmem:[#allocation3 + $0x30] sm:$0xff]
      %v1476 = vld [vmem:[#allocation3 + $0x38] sm:$0xff]
      %v1493 = vrot.slane %v1453, 5
      %v1494 = vrot.slane %v1493, 4
      %v1495 = vrot.slane %v1454, 5
      %v1496 = vsel %vm1002, %v1494, %v1495
      %v1497 = vrot.slane %v1455, 5
      %v1498 = vrot.slane %v1497, 4
      %v1499 = vrot.slane %v1456, 5
      %v1500 = vsel %vm1002, %v1498, %v1499
      %v1501 = vrot.slane %v1457, 5
      %v1502 = vrot.slane %v1501, 4
      %v1503 = vrot.slane %v1458, 5
      %v1504 = vsel %vm1002, %v1502, %v1503
      %v1505 = vrot.slane %v1459, 5
      %v1506 = vrot.slane %v1505, 4
      %v1507 = vrot.slane %v1460, 5
      %v1508 = vsel %vm1002, %v1506, %v1507
      %v1509 = vrot.slane %v1461, 5
      %v1510 = vrot.slane %v1509, 4
      %v1511 = vrot.slane %v1462, 5
      %v1512 = vsel %vm1002, %v1510, %v1511
      %v1513 = vrot.slane %v1463, 5
      %v1514 = vrot.slane %v1513, 4
      %v1515 = vrot.slane %v1464, 5
      %v1516 = vsel %vm1002, %v1514, %v1515
      %v1517 = vrot.slane %v1465, 5
      %v1518 = vrot.slane %v1517, 4
      %v1519 = vrot.slane %v1466, 5
      %v1520 = vsel %vm1002, %v1518, %v1519
      %v1521 = vrot.slane %v1467, 5
      %v1522 = vrot.slane %v1521, 4
      %v1523 = vrot.slane %v1468, 5
      %v1524 = vsel %vm1002, %v1522, %v1523
      %s1525 = scalar_lea.vmem %s3, 80
      %v1526 = vld [vmem:[%s1525] sm:$0xf]
      %v1527 = vld [vmem:[%s1525 + $0x4] sm:$0xf]
      %v1528 = vld [vmem:[%s1525 + $0x8] sm:$0xf]
      %v1529 = vld [vmem:[%s1525 + $0xc] sm:$0xf]
      %v1530 = vunpack.c.l.b16 %v1496
      %v1531 = vunpack.c.l.b16 %v1500
      %v1532 = vunpack.c.l.b16 %v1504
      %v1533 = vunpack.c.l.b16 %v1508
      %v1534 = vunpack.c.l.b16 %v1512
      %v1535 = vunpack.c.l.b16 %v1516
      %v1536 = vunpack.c.l.b16 %v1520
      %v1537 = vunpack.c.l.b16 %v1524
      %v1538 = vpack.c.b16 %v1531, %v1530
      %v1539 = vpack.c.b16 %v1533, %v1532
      %v1540 = vpack.c.b16 %v1535, %v1534
      %v1541 = vpack.c.b16 %v1537, %v1536
      %v1546 = vunpack.c.l.b16 %v1526
      %v1547 = vunpack.c.l.b16 %v1527
      %v1548 = vunpack.c.l.b16 %v1528
      %v1549 = vunpack.c.l.b16 %v1529
      %v1550 = vpack.c.b16 %v1547, %v1546
      %v1551 = vpack.c.b16 %v1549, %v1548
      %v1555 = vsel %vm617, %v1538, 0
      %v1558 = vsel %vm617, %v1539, 0
      %v1561 = vsel %vm617, %v1540, 0
      %v1564 = vsel %vm617, %v1541, 0
      %1566 = vmatpush.bf16.msra.mxu0 0
      %1567 = vmatpush.bf16.msra.mxu0 0
      %1568 = vmatpush.bf16.msra.mxu0 0
      %1569 = vmatpush.bf16.msra.mxu0 0
      %1570 = vmatpush.bf16.msra.mxu0 0
      %1571 = vmatpush.bf16.msra.mxu0 0
      %1572 = vmatpush.bf16.msra.mxu0 %v1551
      %1573 = vmatpush.bf16.msra.mxu0 %v1550
      %1574 = vmatmul.bf16.gmra.mxu0 %v1555
      %v1575 = vpop.f32.mrf.mxu0
      %v1576 = vadd.f32 0.0, %v1575
      %v1577 = vpop.f32.mrf.mxu0
      %v1578 = vadd.f32 0.0, %v1577
      %1579 = vmatmul.bf16.gmra.mxu0 %v1558
      %v1580 = vpop.f32.mrf.mxu0
      %v1581 = vadd.f32 0.0, %v1580
      %v1582 = vpop.f32.mrf.mxu0
      %v1583 = vadd.f32 0.0, %v1582
      %1584 = vmatmul.bf16.gmra.mxu0 %v1561
      %v1585 = vpop.f32.mrf.mxu0
      %v1586 = vadd.f32 0.0, %v1585
      %v1587 = vpop.f32.mrf.mxu0
      %v1588 = vadd.f32 0.0, %v1587
      %1589 = vmatmul.bf16.gmra.mxu0 %v1564
      %v1590 = vpop.f32.mrf.mxu0
      %v1591 = vadd.f32 0.0, %v1590
      %v1592 = vpop.f32.mrf.mxu0
      %v1593 = vadd.f32 0.0, %v1592
      %1594 = vdwg.mxu0
      %v1595 = vadd.f32 %v1469, %v1576
      %v1596 = vadd.f32 %v1470, %v1578
      %v1597 = vadd.f32 %v1471, %v1581
      %v1598 = vadd.f32 %v1472, %v1583
      %v1599 = vadd.f32 %v1473, %v1586
      %v1600 = vadd.f32 %v1474, %v1588
      %v1601 = vadd.f32 %v1475, %v1591
      %v1602 = vadd.f32 %v1476, %v1593
      %1603 = vst.msk [vmem:[#allocation3] sm:$0xff] %vm617, %v1595
      %1604 = vst.msk [vmem:[#allocation3 + $0x8] sm:$0xff] %vm617, %v1596
      %1605 = vst.msk [vmem:[#allocation3 + $0x10] sm:$0xff] %vm617, %v1597
      %1606 = vst.msk [vmem:[#allocation3 + $0x18] sm:$0xff] %vm617, %v1598
      %1607 = vst.msk [vmem:[#allocation3 + $0x20] sm:$0xff] %vm617, %v1599
      %1608 = vst.msk [vmem:[#allocation3 + $0x28] sm:$0xff] %vm617, %v1600
      %1609 = vst.msk [vmem:[#allocation3 + $0x30] sm:$0xff] %vm617, %v1601
      %1610 = vst.msk [vmem:[#allocation3 + $0x38] sm:$0xff] %vm617, %v1602
      %s1611 = scalar_lea.vmem [#allocation2], 16
      %v1612 = vld [vmem:[%s1611] sm:$0xf]
      %v1613 = vld [vmem:[%s1611 + $0x8] sm:$0xf]
      %v1614 = vld [vmem:[%s1611 + $0x10] sm:$0xf]
      %v1615 = vld [vmem:[%s1611 + $0x18] sm:$0xf]
      %v1616 = vld [vmem:[%s1611 + $0x20] sm:$0xf]
      %v1617 = vld [vmem:[%s1611 + $0x28] sm:$0xf]
      %v1618 = vld [vmem:[%s1611 + $0x30] sm:$0xf]
      %v1619 = vld [vmem:[%s1611 + $0x38] sm:$0xf]
      %v1620 = vld [vmem:[#allocation3] sm:$0xff]
      %v1621 = vld [vmem:[#allocation3 + $0x8] sm:$0xff]
      %v1622 = vld [vmem:[#allocation3 + $0x10] sm:$0xff]
      %v1623 = vld [vmem:[#allocation3 + $0x18] sm:$0xff]
      %v1624 = vld [vmem:[#allocation3 + $0x20] sm:$0xff]
      %v1625 = vld [vmem:[#allocation3 + $0x28] sm:$0xff]
      %v1626 = vld [vmem:[#allocation3 + $0x30] sm:$0xff]
      %v1627 = vld [vmem:[#allocation3 + $0x38] sm:$0xff]
      %s1628 = scalar_lea.vmem %s3, 96
      %v1629 = vld [vmem:[%s1628] sm:$0xf]
      %v1630 = vld [vmem:[%s1628 + $0x4] sm:$0xf]
      %v1631 = vld [vmem:[%s1628 + $0x8] sm:$0xf]
      %v1632 = vld [vmem:[%s1628 + $0xc] sm:$0xf]
      %v1641 = vunpack.c.l.b16 %v1612
      %v1642 = vunpack.c.l.b16 %v1613
      %v1643 = vunpack.c.l.b16 %v1614
      %v1644 = vunpack.c.l.b16 %v1615
      %v1645 = vunpack.c.l.b16 %v1616
      %v1646 = vunpack.c.l.b16 %v1617
      %v1647 = vunpack.c.l.b16 %v1618
      %v1648 = vunpack.c.l.b16 %v1619
      %v1649 = vpack.c.b16 %v1642, %v1641
      %v1650 = vpack.c.b16 %v1644, %v1643
      %v1651 = vpack.c.b16 %v1646, %v1645
      %v1652 = vpack.c.b16 %v1648, %v1647
      %v1657 = vunpack.c.l.b16 %v1629
      %v1658 = vunpack.c.l.b16 %v1630
      %v1659 = vunpack.c.l.b16 %v1631
      %v1660 = vunpack.c.l.b16 %v1632
      %v1661 = vpack.c.b16 %v1658, %v1657
      %v1662 = vpack.c.b16 %v1660, %v1659
      %v1666 = vsel %vm617, %v1649, 0
      %v1669 = vsel %vm617, %v1650, 0
      %v1672 = vsel %vm617, %v1651, 0
      %v1675 = vsel %vm617, %v1652, 0
      %1677 = vmatpush.bf16.msra.mxu0 0
      %1678 = vmatpush.bf16.msra.mxu0 0
      %1679 = vmatpush.bf16.msra.mxu0 0
      %1680 = vmatpush.bf16.msra.mxu0 0
      %1681 = vmatpush.bf16.msra.mxu0 0
      %1682 = vmatpush.bf16.msra.mxu0 0
      %1683 = vmatpush.bf16.msra.mxu0 %v1662
      %1684 = vmatpush.bf16.msra.mxu0 %v1661
      %1685 = vmatmul.bf16.gmra.mxu0 %v1666
      %v1686 = vpop.f32.mrf.mxu0
      %v1687 = vadd.f32 0.0, %v1686
      %v1688 = vpop.f32.mrf.mxu0
      %v1689 = vadd.f32 0.0, %v1688
      %1690 = vmatmul.bf16.gmra.mxu0 %v1669
      %v1691 = vpop.f32.mrf.mxu0
      %v1692 = vadd.f32 0.0, %v1691
      %v1693 = vpop.f32.mrf.mxu0
      %v1694 = vadd.f32 0.0, %v1693
      %1695 = vmatmul.bf16.gmra.mxu0 %v1672
      %v1696 = vpop.f32.mrf.mxu0
      %v1697 = vadd.f32 0.0, %v1696
      %v1698 = vpop.f32.mrf.mxu0
      %v1699 = vadd.f32 0.0, %v1698
      %1700 = vmatmul.bf16.gmra.mxu0 %v1675
      %v1701 = vpop.f32.mrf.mxu0
      %v1702 = vadd.f32 0.0, %v1701
      %v1703 = vpop.f32.mrf.mxu0
      %v1704 = vadd.f32 0.0, %v1703
      %1705 = vdwg.mxu0
      %v1706 = vadd.f32 %v1620, %v1687
      %v1707 = vadd.f32 %v1621, %v1689
      %v1708 = vadd.f32 %v1622, %v1692
      %v1709 = vadd.f32 %v1623, %v1694
      %v1710 = vadd.f32 %v1624, %v1697
      %v1711 = vadd.f32 %v1625, %v1699
      %v1712 = vadd.f32 %v1626, %v1702
      %v1713 = vadd.f32 %v1627, %v1704
      %1714 = vst.msk [vmem:[#allocation3] sm:$0xff] %vm617, %v1706
      %1715 = vst.msk [vmem:[#allocation3 + $0x8] sm:$0xff] %vm617, %v1707
      %1716 = vst.msk [vmem:[#allocation3 + $0x10] sm:$0xff] %vm617, %v1708
      %1717 = vst.msk [vmem:[#allocation3 + $0x18] sm:$0xff] %vm617, %v1709
      %1718 = vst.msk [vmem:[#allocation3 + $0x20] sm:$0xff] %vm617, %v1710
      %1719 = vst.msk [vmem:[#allocation3 + $0x28] sm:$0xff] %vm617, %v1711
      %1720 = vst.msk [vmem:[#allocation3 + $0x30] sm:$0xff] %vm617, %v1712
      %1721 = vst.msk [vmem:[#allocation3 + $0x38] sm:$0xff] %vm617, %v1713
      %v1722 = vld [vmem:[%s1611] sm:$0xf]
      %v1723 = vld [vmem:[%s1611 + $0x4] sm:$0x1]
      %v1724 = vld [vmem:[%s1611 + $0x8] sm:$0xf]
      %v1725 = vld [vmem:[%s1611 + $0xc] sm:$0x1]
      %v1726 = vld [vmem:[%s1611 + $0x10] sm:$0xf]
      %v1727 = vld [vmem:[%s1611 + $0x14] sm:$0x1]
      %v1728 = vld [vmem:[%s1611 + $0x18] sm:$0xf]
      %v1729 = vld [vmem:[%s1611 + $0x1c] sm:$0x1]
      %v1730 = vld [vmem:[%s1611 + $0x20] sm:$0xf]
      %v1731 = vld [vmem:[%s1611 + $0x24] sm:$0x1]
      %v1732 = vld [vmem:[%s1611 + $0x28] sm:$0xf]
      %v1733 = vld [vmem:[%s1611 + $0x2c] sm:$0x1]
      %v1734 = vld [vmem:[%s1611 + $0x30] sm:$0xf]
      %v1735 = vld [vmem:[%s1611 + $0x34] sm:$0x1]
      %v1736 = vld [vmem:[%s1611 + $0x38] sm:$0xf]
      %v1737 = vld [vmem:[%s1611 + $0x3c] sm:$0x1]
      %v1738 = vld [vmem:[#allocation3] sm:$0xff]
      %v1739 = vld [vmem:[#allocation3 + $0x8] sm:$0xff]
      %v1740 = vld [vmem:[#allocation3 + $0x10] sm:$0xff]
      %v1741 = vld [vmem:[#allocation3 + $0x18] sm:$0xff]
      %v1742 = vld [vmem:[#allocation3 + $0x20] sm:$0xff]
      %v1743 = vld [vmem:[#allocation3 + $0x28] sm:$0xff]
      %v1744 = vld [vmem:[#allocation3 + $0x30] sm:$0xff]
      %v1745 = vld [vmem:[#allocation3 + $0x38] sm:$0xff]
      %v1747 = vshrl.u32 %v1722, 16
      %v1749 = vrot.slane %v1747, 4
      %v1750 = vshll.u32 %v1722, 16
      %v1752 = vrot.slane %v1750, 5
      %v1753 = vor.u32 %v1749, %v1752
      %v1754 = vrot.slane %v1753, 4
      %v1756 = vshll.u32 %v1723, 16
      %v1758 = vrot.slane %v1756, 5
      %v1759 = vsel %vm761, %v1754, %v1758
      %v1761 = vshrl.u32 %v1724, 16
      %v1763 = vrot.slane %v1761, 4
      %v1764 = vshll.u32 %v1724, 16
      %v1766 = vrot.slane %v1764, 5
      %v1767 = vor.u32 %v1763, %v1766
      %v1768 = vrot.slane %v1767, 4
      %v1770 = vshll.u32 %v1725, 16
      %v1772 = vrot.slane %v1770, 5
      %v1773 = vsel %vm761, %v1768, %v1772
      %v1775 = vshrl.u32 %v1726, 16
      %v1777 = vrot.slane %v1775, 4
      %v1778 = vshll.u32 %v1726, 16
      %v1780 = vrot.slane %v1778, 5
      %v1781 = vor.u32 %v1777, %v1780
      %v1782 = vrot.slane %v1781, 4
      %v1784 = vshll.u32 %v1727, 16
      %v1786 = vrot.slane %v1784, 5
      %v1787 = vsel %vm761, %v1782, %v1786
      %v1789 = vshrl.u32 %v1728, 16
      %v1791 = vrot.slane %v1789, 4
      %v1792 = vshll.u32 %v1728, 16
      %v1794 = vrot.slane %v1792, 5
      %v1795 = vor.u32 %v1791, %v1794
      %v1796 = vrot.slane %v1795, 4
      %v1798 = vshll.u32 %v1729, 16
      %v1800 = vrot.slane %v1798, 5
      %v1801 = vsel %vm761, %v1796, %v1800
      %v1803 = vshrl.u32 %v1730, 16
      %v1805 = vrot.slane %v1803, 4
      %v1806 = vshll.u32 %v1730, 16
      %v1808 = vrot.slane %v1806, 5
      %v1809 = vor.u32 %v1805, %v1808
      %v1810 = vrot.slane %v1809, 4
      %v1812 = vshll.u32 %v1731, 16
      %v1814 = vrot.slane %v1812, 5
      %v1815 = vsel %vm761, %v1810, %v1814
      %v1817 = vshrl.u32 %v1732, 16
      %v1819 = vrot.slane %v1817, 4
      %v1820 = vshll.u32 %v1732, 16
      %v1822 = vrot.slane %v1820, 5
      %v1823 = vor.u32 %v1819, %v1822
      %v1824 = vrot.slane %v1823, 4
      %v1826 = vshll.u32 %v1733, 16
      %v1828 = vrot.slane %v1826, 5
      %v1829 = vsel %vm761, %v1824, %v1828
      %v1831 = vshrl.u32 %v1734, 16
      %v1833 = vrot.slane %v1831, 4
      %v1834 = vshll.u32 %v1734, 16
      %v1836 = vrot.slane %v1834, 5
      %v1837 = vor.u32 %v1833, %v1836
      %v1838 = vrot.slane %v1837, 4
      %v1840 = vshll.u32 %v1735, 16
      %v1842 = vrot.slane %v1840, 5
      %v1843 = vsel %vm761, %v1838, %v1842
      %v1845 = vshrl.u32 %v1736, 16
      %v1847 = vrot.slane %v1845, 4
      %v1848 = vshll.u32 %v1736, 16
      %v1850 = vrot.slane %v1848, 5
      %v1851 = vor.u32 %v1847, %v1850
      %v1852 = vrot.slane %v1851, 4
      %v1854 = vshll.u32 %v1737, 16
      %v1856 = vrot.slane %v1854, 5
      %v1857 = vsel %vm761, %v1852, %v1856
      %s1858 = scalar_lea.vmem %s3, 112
      %v1859 = vld [vmem:[%s1858] sm:$0xf]
      %v1860 = vld [vmem:[%s1858 + $0x4] sm:$0xf]
      %v1861 = vld [vmem:[%s1858 + $0x8] sm:$0xf]
      %v1862 = vld [vmem:[%s1858 + $0xc] sm:$0xf]
      %v1863 = vunpack.c.l.b16 %v1759
      %v1864 = vunpack.c.l.b16 %v1773
      %v1865 = vunpack.c.l.b16 %v1787
      %v1866 = vunpack.c.l.b16 %v1801
      %v1867 = vunpack.c.l.b16 %v1815
      %v1868 = vunpack.c.l.b16 %v1829
      %v1869 = vunpack.c.l.b16 %v1843
      %v1870 = vunpack.c.l.b16 %v1857
      %v1871 = vpack.c.b16 %v1864, %v1863
      %v1872 = vpack.c.b16 %v1866, %v1865
      %v1873 = vpack.c.b16 %v1868, %v1867
      %v1874 = vpack.c.b16 %v1870, %v1869
      %v1879 = vunpack.c.l.b16 %v1859
      %v1880 = vunpack.c.l.b16 %v1860
      %v1881 = vunpack.c.l.b16 %v1861
      %v1882 = vunpack.c.l.b16 %v1862
      %v1883 = vpack.c.b16 %v1880, %v1879
      %v1884 = vpack.c.b16 %v1882, %v1881
      %v1888 = vsel %vm617, %v1871, 0
      %v1891 = vsel %vm617, %v1872, 0
      %v1894 = vsel %vm617, %v1873, 0
      %v1897 = vsel %vm617, %v1874, 0
      %1899 = vmatpush.bf16.msra.mxu0 0
      %1900 = vmatpush.bf16.msra.mxu0 0
      %1901 = vmatpush.bf16.msra.mxu0 0
      %1902 = vmatpush.bf16.msra.mxu0 0
      %1903 = vmatpush.bf16.msra.mxu0 0
      %1904 = vmatpush.bf16.msra.mxu0 0
      %1905 = vmatpush.bf16.msra.mxu0 %v1884
      %1906 = vmatpush.bf16.msra.mxu0 %v1883
      %1907 = vmatmul.bf16.gmra.mxu0 %v1888
      %v1908 = vpop.f32.mrf.mxu0
      %v1909 = vadd.f32 0.0, %v1908
      %v1910 = vpop.f32.mrf.mxu0
      %v1911 = vadd.f32 0.0, %v1910
      %1912 = vmatmul.bf16.gmra.mxu0 %v1891
      %v1913 = vpop.f32.mrf.mxu0
      %v1914 = vadd.f32 0.0, %v1913
      %v1915 = vpop.f32.mrf.mxu0
      %v1916 = vadd.f32 0.0, %v1915
      %1917 = vmatmul.bf16.gmra.mxu0 %v1894
      %v1918 = vpop.f32.mrf.mxu0
      %v1919 = vadd.f32 0.0, %v1918
      %v1920 = vpop.f32.mrf.mxu0
      %v1921 = vadd.f32 0.0, %v1920
      %1922 = vmatmul.bf16.gmra.mxu0 %v1897
      %v1923 = vpop.f32.mrf.mxu0
      %v1924 = vadd.f32 0.0, %v1923
      %v1925 = vpop.f32.mrf.mxu0
      %v1926 = vadd.f32 0.0, %v1925
      %1927 = vdwg.mxu0
      %v1928 = vadd.f32 %v1738, %v1909
      %v1929 = vadd.f32 %v1739, %v1911
      %v1930 = vadd.f32 %v1740, %v1914
      %v1931 = vadd.f32 %v1741, %v1916
      %v1932 = vadd.f32 %v1742, %v1919
      %v1933 = vadd.f32 %v1743, %v1921
      %v1934 = vadd.f32 %v1744, %v1924
      %v1935 = vadd.f32 %v1745, %v1926
      %1936 = vst.msk [vmem:[#allocation3] sm:$0xff] %vm617, %v1928
      %1937 = vst.msk [vmem:[#allocation3 + $0x8] sm:$0xff] %vm617, %v1929
      %1938 = vst.msk [vmem:[#allocation3 + $0x10] sm:$0xff] %vm617, %v1930
      %1939 = vst.msk [vmem:[#allocation3 + $0x18] sm:$0xff] %vm617, %v1931
      %1940 = vst.msk [vmem:[#allocation3 + $0x20] sm:$0xff] %vm617, %v1932
      %1941 = vst.msk [vmem:[#allocation3 + $0x28] sm:$0xff] %vm617, %v1933
      %1942 = vst.msk [vmem:[#allocation3 + $0x30] sm:$0xff] %vm617, %v1934
      %1943 = vst.msk [vmem:[#allocation3 + $0x38] sm:$0xff] %vm617, %v1935
      %v1944 = vld [vmem:[%s1611] sm:$0xe]
      %v1945 = vld [vmem:[%s1611 + $0x4] sm:$0x1]
      %v1946 = vld [vmem:[%s1611 + $0x8] sm:$0xe]
      %v1947 = vld [vmem:[%s1611 + $0xc] sm:$0x1]
      %v1948 = vld [vmem:[%s1611 + $0x10] sm:$0xe]
      %v1949 = vld [vmem:[%s1611 + $0x14] sm:$0x1]
      %v1950 = vld [vmem:[%s1611 + $0x18] sm:$0xe]
      %v1951 = vld [vmem:[%s1611 + $0x1c] sm:$0x1]
      %v1952 = vld [vmem:[%s1611 + $0x20] sm:$0xe]
      %v1953 = vld [vmem:[%s1611 + $0x24] sm:$0x1]
      %v1954 = vld [vmem:[%s1611 + $0x28] sm:$0xe]
      %v1955 = vld [vmem:[%s1611 + $0x2c] sm:$0x1]
      %v1956 = vld [vmem:[%s1611 + $0x30] sm:$0xe]
      %v1957 = vld [vmem:[%s1611 + $0x34] sm:$0x1]
      %v1958 = vld [vmem:[%s1611 + $0x38] sm:$0xe]
      %v1959 = vld [vmem:[%s1611 + $0x3c] sm:$0x1]
      %v1960 = vld [vmem:[#allocation3] sm:$0xff]
      %v1961 = vld [vmem:[#allocation3 + $0x8] sm:$0xff]
      %v1962 = vld [vmem:[#allocation3 + $0x10] sm:$0xff]
      %v1963 = vld [vmem:[#allocation3 + $0x18] sm:$0xff]
      %v1964 = vld [vmem:[#allocation3 + $0x20] sm:$0xff]
      %v1965 = vld [vmem:[#allocation3 + $0x28] sm:$0xff]
      %v1966 = vld [vmem:[#allocation3 + $0x30] sm:$0xff]
      %v1967 = vld [vmem:[#allocation3 + $0x38] sm:$0xff]
      %v1984 = vrot.slane %v1944, 5
      %v1985 = vrot.slane %v1984, 4
      %v1986 = vrot.slane %v1945, 5
      %v1987 = vsel %vm1002, %v1985, %v1986
      %v1988 = vrot.slane %v1946, 5
      %v1989 = vrot.slane %v1988, 4
      %v1990 = vrot.slane %v1947, 5
      %v1991 = vsel %vm1002, %v1989, %v1990
      %v1992 = vrot.slane %v1948, 5
      %v1993 = vrot.slane %v1992, 4
      %v1994 = vrot.slane %v1949, 5
      %v1995 = vsel %vm1002, %v1993, %v1994
      %v1996 = vrot.slane %v1950, 5
      %v1997 = vrot.slane %v1996, 4
      %v1998 = vrot.slane %v1951, 5
      %v1999 = vsel %vm1002, %v1997, %v1998
      %v2000 = vrot.slane %v1952, 5
      %v2001 = vrot.slane %v2000, 4
      %v2002 = vrot.slane %v1953, 5
      %v2003 = vsel %vm1002, %v2001, %v2002
      %v2004 = vrot.slane %v1954, 5
      %v2005 = vrot.slane %v2004, 4
      %v2006 = vrot.slane %v1955, 5
      %v2007 = vsel %vm1002, %v2005, %v2006
      %v2008 = vrot.slane %v1956, 5
      %v2009 = vrot.slane %v2008, 4
      %v2010 = vrot.slane %v1957, 5
      %v2011 = vsel %vm1002, %v2009, %v2010
      %v2012 = vrot.slane %v1958, 5
      %v2013 = vrot.slane %v2012, 4
      %v2014 = vrot.slane %v1959, 5
      %v2015 = vsel %vm1002, %v2013, %v2014
      %s2016 = scalar_lea.vmem %s3, 128
      %v2017 = vld [vmem:[%s2016] sm:$0xf]
      %v2018 = vld [vmem:[%s2016 + $0x4] sm:$0xf]
      %v2019 = vld [vmem:[%s2016 + $0x8] sm:$0xf]
      %v2020 = vld [vmem:[%s2016 + $0xc] sm:$0xf]
      %v2021 = vunpack.c.l.b16 %v1987
      %v2022 = vunpack.c.l.b16 %v1991
      %v2023 = vunpack.c.l.b16 %v1995
      %v2024 = vunpack.c.l.b16 %v1999
      %v2025 = vunpack.c.l.b16 %v2003
      %v2026 = vunpack.c.l.b16 %v2007
      %v2027 = vunpack.c.l.b16 %v2011
      %v2028 = vunpack.c.l.b16 %v2015
      %v2029 = vpack.c.b16 %v2022, %v2021
      %v2030 = vpack.c.b16 %v2024, %v2023
      %v2031 = vpack.c.b16 %v2026, %v2025
      %v2032 = vpack.c.b16 %v2028, %v2027
      %v2037 = vunpack.c.l.b16 %v2017
      %v2038 = vunpack.c.l.b16 %v2018
      %v2039 = vunpack.c.l.b16 %v2019
      %v2040 = vunpack.c.l.b16 %v2020
      %v2041 = vpack.c.b16 %v2038, %v2037
      %v2042 = vpack.c.b16 %v2040, %v2039
      %v2046 = vsel %vm617, %v2029, 0
      %v2049 = vsel %vm617, %v2030, 0
      %v2052 = vsel %vm617, %v2031, 0
      %v2055 = vsel %vm617, %v2032, 0
      %2057 = vmatpush.bf16.msra.mxu0 0
      %2058 = vmatpush.bf16.msra.mxu0 0
      %2059 = vmatpush.bf16.msra.mxu0 0
      %2060 = vmatpush.bf16.msra.mxu0 0
      %2061 = vmatpush.bf16.msra.mxu0 0
      %2062 = vmatpush.bf16.msra.mxu0 0
      %2063 = vmatpush.bf16.msra.mxu0 %v2042
      %2064 = vmatpush.bf16.msra.mxu0 %v2041
      %2065 = vmatmul.bf16.gmra.mxu0 %v2046
      %v2066 = vpop.f32.mrf.mxu0
      %v2067 = vadd.f32 0.0, %v2066
      %v2068 = vpop.f32.mrf.mxu0
      %v2069 = vadd.f32 0.0, %v2068
      %2070 = vmatmul.bf16.gmra.mxu0 %v2049
      %v2071 = vpop.f32.mrf.mxu0
      %v2072 = vadd.f32 0.0, %v2071
      %v2073 = vpop.f32.mrf.mxu0
      %v2074 = vadd.f32 0.0, %v2073
      %2075 = vmatmul.bf16.gmra.mxu0 %v2052
      %v2076 = vpop.f32.mrf.mxu0
      %v2077 = vadd.f32 0.0, %v2076
      %v2078 = vpop.f32.mrf.mxu0
      %v2079 = vadd.f32 0.0, %v2078
      %2080 = vmatmul.bf16.gmra.mxu0 %v2055
      %v2081 = vpop.f32.mrf.mxu0
      %v2082 = vadd.f32 0.0, %v2081
      %v2083 = vpop.f32.mrf.mxu0
      %v2084 = vadd.f32 0.0, %v2083
      %2085 = vdwg.mxu0
      %v2086 = vadd.f32 %v1960, %v2067
      %v2087 = vadd.f32 %v1961, %v2069
      %v2088 = vadd.f32 %v1962, %v2072
      %v2089 = vadd.f32 %v1963, %v2074
      %v2090 = vadd.f32 %v1964, %v2077
      %v2091 = vadd.f32 %v1965, %v2079
      %v2092 = vadd.f32 %v1966, %v2082
      %v2093 = vadd.f32 %v1967, %v2084
      %2094 = vst.msk [vmem:[#allocation3] sm:$0xff] %vm617, %v2086
      %2095 = vst.msk [vmem:[#allocation3 + $0x8] sm:$0xff] %vm617, %v2087
      %2096 = vst.msk [vmem:[#allocation3 + $0x10] sm:$0xff] %vm617, %v2088
      %2097 = vst.msk [vmem:[#allocation3 + $0x18] sm:$0xff] %vm617, %v2089
      %2098 = vst.msk [vmem:[#allocation3 + $0x20] sm:$0xff] %vm617, %v2090
      %2099 = vst.msk [vmem:[#allocation3 + $0x28] sm:$0xff] %vm617, %v2091
      %2100 = vst.msk [vmem:[#allocation3 + $0x30] sm:$0xff] %vm617, %v2092
      %2101 = vst.msk [vmem:[#allocation3 + $0x38] sm:$0xff] %vm617, %v2093
      %v2102 = vld [vmem:[#allocation3] sm:$0xff]
      %v2103 = vld [vmem:[#allocation3 + $0x8] sm:$0xff]
      %v2104 = vld [vmem:[#allocation3 + $0x10] sm:$0xff]
      %v2105 = vld [vmem:[#allocation3 + $0x18] sm:$0xff]
      %v2106 = vld [vmem:[#allocation3 + $0x20] sm:$0xff]
      %v2107 = vld [vmem:[#allocation3 + $0x28] sm:$0xff]
      %v2108 = vld [vmem:[#allocation3 + $0x30] sm:$0xff]
      %v2109 = vld [vmem:[#allocation3 + $0x38] sm:$0xff]
      %v2110 = vmax.f32 %v2102, 0.0
      %v2111 = vmax.f32 %v2103, 0.0
      %v2112 = vmax.f32 %v2104, 0.0
      %v2113 = vmax.f32 %v2105, 0.0
      %v2114 = vmax.f32 %v2106, 0.0
      %v2115 = vmax.f32 %v2107, 0.0
      %v2116 = vmax.f32 %v2108, 0.0
      %v2117 = vmax.f32 %v2109, 0.0
      %v2118 = vpack.c.bf16 %v2111, %v2110
      %v2119 = vpack.c.bf16 %v2113, %v2112
      %v2120 = vpack.c.bf16 %v2115, %v2114
      %v2121 = vpack.c.bf16 %v2117, %v2116
      %v2122 = vld [vmem:[%s5] sm:$0xf]
      %v2123 = vld [vmem:[%s5 + $0x4] sm:$0xf]
      %v2124 = vld [vmem:[%s5 + $0x8] sm:$0xf]
      %v2125 = vld [vmem:[%s5 + $0xc] sm:$0xf]
      %v2126 = vld [vmem:[%s6] sm:$0x1]
      %v2128 = vperm.slane %v2126, 0
      %v2134 = vunpack.c.l.b16 %v2122
      %v2135 = vunpack.c.l.b16 %v2123
      %v2136 = vunpack.c.l.b16 %v2124
      %v2137 = vunpack.c.l.b16 %v2125
      %v2138 = vpack.c.b16 %v2135, %v2134
      %v2139 = vpack.c.b16 %v2137, %v2136
      %v2143 = vsel %vm617, %v2118, 0
      %v2146 = vsel %vm617, %v2119, 0
      %v2149 = vsel %vm617, %v2120, 0
      %v2152 = vsel %vm617, %v2121, 0
      %2154 = vmatpush.bf16.msra.mxu0 0
      %2155 = vmatpush.bf16.msra.mxu0 0
      %2156 = vmatpush.bf16.msra.mxu0 0
      %2157 = vmatpush.bf16.msra.mxu0 0
      %2158 = vmatpush.bf16.msra.mxu0 0
      %2159 = vmatpush.bf16.msra.mxu0 0
      %2160 = vmatpush.bf16.msra.mxu0 %v2139
      %2161 = vmatpush.bf16.msra.mxu0 %v2138
      %2162 = vmatmul.bf16.gmra.mxu0 %v2143
      %v2163 = vpop.f32.mrf.mxu0
      %v2164 = vadd.f32 %v2128, %v2163
      %v2165 = vpop.f32.mrf.mxu0
      %v2166 = vadd.f32 %v2128, %v2165
      %2167 = vmatmul.bf16.gmra.mxu0 %v2146
      %v2168 = vpop.f32.mrf.mxu0
      %v2169 = vadd.f32 %v2128, %v2168
      %v2170 = vpop.f32.mrf.mxu0
      %v2171 = vadd.f32 %v2128, %v2170
      %2172 = vmatmul.bf16.gmra.mxu0 %v2149
      %v2173 = vpop.f32.mrf.mxu0
      %v2174 = vadd.f32 %v2128, %v2173
      %v2175 = vpop.f32.mrf.mxu0
      %v2176 = vadd.f32 %v2128, %v2175
      %2177 = vmatmul.bf16.gmra.mxu0 %v2152
      %v2178 = vpop.f32.mrf.mxu0
      %v2179 = vadd.f32 %v2128, %v2178
      %v2180 = vpop.f32.mrf.mxu0
      %v2181 = vadd.f32 %v2128, %v2180
      %2182 = vdwg.mxu0
      %v2183 = vld [vmem:[%s327] sm:$0xf]
      %v2184 = vld [vmem:[%s327 + $0x4] sm:$0xf]
      %v2185 = vld [vmem:[%s327 + $0x8] sm:$0xf]
      %v2186 = vld [vmem:[%s327 + $0xc] sm:$0xf]
      %v2187 = vld [vmem:[%s327 + $0x10] sm:$0xf]
      %v2188 = vld [vmem:[%s327 + $0x14] sm:$0xf]
      %v2189 = vld [vmem:[%s327 + $0x18] sm:$0xf]
      %v2190 = vld [vmem:[%s327 + $0x1c] sm:$0xf]
      %v2191 = vld [vmem:[%s7] sm:$0xf]
      %v2192 = vld [vmem:[%s7 + $0x4] sm:$0xf]
      %v2193 = vld [vmem:[%s7 + $0x8] sm:$0xf]
      %v2194 = vld [vmem:[%s7 + $0xc] sm:$0xf]
      %v2195 = vld [vmem:[%s7 + $0x10] sm:$0xf]
      %v2196 = vld [vmem:[%s7 + $0x14] sm:$0xf]
      %v2197 = vld [vmem:[%s7 + $0x18] sm:$0xf]
      %v2198 = vld [vmem:[%s7 + $0x1c] sm:$0xf]
      %v2199 = vld [vmem:[%s8] sm:$0x1]
      %v2201 = vperm.slane %v2199, 0
      %v2211 = vunpack.c.l.b16 %v2183
      %v2212 = vunpack.c.l.b16 %v2184
      %v2213 = vunpack.c.l.b16 %v2185
      %v2214 = vunpack.c.l.b16 %v2186
      %v2215 = vunpack.c.l.b16 %v2187
      %v2216 = vunpack.c.l.b16 %v2188
      %v2217 = vunpack.c.l.b16 %v2189
      %v2218 = vunpack.c.l.b16 %v2190
      %v2219 = vpack.c.b16 %v2212, %v2211
      %v2220 = vpack.c.b16 %v2214, %v2213
      %v2221 = vpack.c.b16 %v2216, %v2215
      %v2222 = vpack.c.b16 %v2218, %v2217
      %v2231 = vunpack.c.l.b16 %v2191
      %v2232 = vunpack.c.l.b16 %v2192
      %v2233 = vunpack.c.l.b16 %v2193
      %v2234 = vunpack.c.l.b16 %v2194
      %v2235 = vunpack.c.l.b16 %v2195
      %v2236 = vunpack.c.l.b16 %v2196
      %v2237 = vunpack.c.l.b16 %v2197
      %v2238 = vunpack.c.l.b16 %v2198
      %v2239 = vpack.c.b16 %v2232, %v2231
      %v2240 = vpack.c.b16 %v2234, %v2233
      %v2241 = vpack.c.b16 %v2236, %v2235
      %v2242 = vpack.c.b16 %v2238, %v2237
      %v2248 = vsel %vm398, %v2219, 0
      %v2251 = vsel %vm398, %v2220, 0
      %v2254 = vsel %vm398, %v2221, 0
      %v2257 = vsel %vm398, %v2222, 0
      %2259 = vmatpush.bf16.msra.mxu0 0
      %2260 = vmatpush.bf16.msra.mxu0 0
      %2261 = vmatpush.bf16.msra.mxu0 0
      %2262 = vmatpush.bf16.msra.mxu0 0
      %2263 = vmatpush.bf16.msra.mxu0 %v2242
      %2264 = vmatpush.bf16.msra.mxu0 %v2241
      %2265 = vmatpush.bf16.msra.mxu0 %v2240
      %2266 = vmatpush.bf16.msra.mxu0 %v2239
      %2267 = vmatmul.bf16.gmra.mxu0 %v2248
      %v2268 = vpop.f32.mrf.mxu0
      %v2269 = vadd.f32 %v2201, %v2268
      %v2270 = vpop.f32.mrf.mxu0
      %v2271 = vadd.f32 %v2201, %v2270
      %2272 = vmatmul.bf16.gmra.mxu0 %v2251
      %v2273 = vpop.f32.mrf.mxu0
      %v2274 = vadd.f32 %v2201, %v2273
      %v2275 = vpop.f32.mrf.mxu0
      %v2276 = vadd.f32 %v2201, %v2275
      %2277 = vmatmul.bf16.gmra.mxu0 %v2254
      %v2278 = vpop.f32.mrf.mxu0
      %v2279 = vadd.f32 %v2201, %v2278
      %v2280 = vpop.f32.mrf.mxu0
      %v2281 = vadd.f32 %v2201, %v2280
      %2282 = vmatmul.bf16.gmra.mxu0 %v2257
      %v2283 = vpop.f32.mrf.mxu0
      %v2284 = vadd.f32 %v2201, %v2283
      %v2285 = vpop.f32.mrf.mxu0
      %v2286 = vadd.f32 %v2201, %v2285
      %2287 = vdwg.mxu0
      %v2288 = vadd.f32 %v2164, %v2269
      %v2289 = vadd.f32 %v2166, %v2271
      %v2290 = vadd.f32 %v2169, %v2274
      %v2291 = vadd.f32 %v2171, %v2276
      %v2292 = vadd.f32 %v2174, %v2279
      %v2293 = vadd.f32 %v2176, %v2281
      %v2294 = vadd.f32 %v2179, %v2284
      %v2295 = vadd.f32 %v2181, %v2286
      %v2296 = vmax.f32 %v2288, 0.0
      %v2297 = vmax.f32 %v2289, 0.0
      %v2298 = vmax.f32 %v2290, 0.0
      %v2299 = vmax.f32 %v2291, 0.0
      %v2300 = vmax.f32 %v2292, 0.0
      %v2301 = vmax.f32 %v2293, 0.0
      %v2302 = vmax.f32 %v2294, 0.0
      %v2303 = vmax.f32 %v2295, 0.0
      %v2304 = vpack.c.bf16 %v2296, %v2296
      %v2305 = vpack.c.bf16 %v2297, %v2297
      %v2306 = vpack.c.bf16 %v2298, %v2298
      %v2307 = vpack.c.bf16 %v2299, %v2299
      %v2308 = vpack.c.bf16 %v2300, %v2300
      %v2309 = vpack.c.bf16 %v2301, %v2301
      %v2310 = vpack.c.bf16 %v2302, %v2302
      %v2311 = vpack.c.bf16 %v2303, %v2303
      %2312 = vst [vmem:[%s332] sm:$0xf] %v2304
      %2313 = vst [vmem:[%s332 + $0x4] sm:$0xf] %v2305
      %2314 = vst [vmem:[%s332 + $0x8] sm:$0xf] %v2306
      %2315 = vst [vmem:[%s332 + $0xc] sm:$0xf] %v2307
      %2316 = vst [vmem:[%s332 + $0x10] sm:$0xf] %v2308
      %2317 = vst [vmem:[%s332 + $0x14] sm:$0xf] %v2309
      %2318 = vst [vmem:[%s332 + $0x18] sm:$0xf] %v2310
      %2319 = vst [vmem:[%s332 + $0x1c] sm:$0xf] %v2311
      %p2320 = scmp.lt.s32.totalorder %s20, 1
      %s2321 = scalar_select %p2320, %s20, 1
      %s2322 = smul.addr %s2321, 8
      %s2323 = smul.addr %s2322, 4
      %s2324 = scalar_lea.vmem %s9, %s2323
      // Predicated region
      $region57: #{forward.2} parent=55 // pred_check
        %p2325 = pneg %p232
      $region58: #{forward.2} parent=55 // pred_check_branch
        %2327 = sbr.rel (%p2325) target = $region60
      $region59: #{forward.2} parent=55 // pred_region
        _
      $region60: #{forward.2} parent=55 // pred_fallthru
        _
    $region56: #{forward.2} parent=5 // pred_fallthru
      _
    %p2328 = scmp.le.s32.totalorder 2, %s15
    // Predicated region
    $region61: #{forward.2} parent=5 // pred_check
      %p2329 = pneg %p2328
    $region62: #{forward.2} parent=5 // pred_check_branch
      %2331 = sbr.rel (%p2329) target = $region64
    $region63: #{forward.2} parent=5 // pred_region
      %s2332 = ssub.s32 %s15, 2
      // Predicated region
      $region65: #{forward.2} parent=63 // pred_check
        %p2333 = pneg %p238
      $region66: #{forward.2} parent=63 // pred_check_branch
        %2335 = sbr.rel (%p2333) target = $region68
      $region67: #{forward.2} parent=63 // pred_region
        %p2336 = scmp.lt.s32.totalorder %s21, 1
        %s2337 = scalar_select %p2336, %s21, 1
        %s2338 = smul.addr %s2337, 8
        %s2339 = smul.addr %s2338, 4
        %s2340 = scalar_lea.vmem %s9, %s2339
      $region68: #{forward.2} parent=63 // pred_fallthru
        _
    $region64: #{forward.2} parent=5 // pred_fallthru
      _
  $region6: #{forward.2} parent=0 // loop_footer
    %s19 = sadd.s32 1, %s15
  $region7: #{forward.2} parent=0 // loop_footer_branch
    %14 = sbr.rel target = $region3
  $region8: #{forward.2} parent=0 // loop_exit
    _

</llo_original>
